<compile_context>
chip_gen: v7x
topology: tpu7x:2x2x1
jax: 0.10.0
libtpu: 0.0.40
codegen_flags: <defaults>
</compile_context>

<pallas_src>
import functools

import jax
import jax.numpy as jnp
from jax import lax
from jax.experimental import pallas as pl
from jax.experimental.pallas import tpu as pltpu

EPS = 1e-5


def _round_up(x, m):
    return (x + m - 1) // m * m


def _padded_vmem_bytes(shape, dtype):
    """VMEM footprint of one block, honoring (sublane, lane) tile padding."""
    itemsize = jnp.dtype(dtype).itemsize
    if len(shape) < 2:
        n = shape[0] if shape else 1
        return _round_up(max(n, 1) * itemsize, 4096)
    sub_mult = 8 * max(1, 4 // itemsize)          # 8 (f32), 16 (bf16)
    lead = 1
    for d in shape[:-2]:
        lead *= d
    return lead * _round_up(shape[-2], sub_mult) * _round_up(shape[-1], 128) * itemsize


def _tpu_vmem_caps():
    """Returns (default rows-per-tile target, vmem_limit cap) for this TPU gen."""
    try:
        info = pltpu.get_tpu_info()
        vmem = int(getattr(info, "vmem_capacity_bytes", 64 << 20))
    except Exception:  # pragma: no cover - conservative fallback off-TPU
        vmem = 64 << 20
    if vmem >= (100 << 20):          # v5e / v6e: 128 MiB per core
        return 2048, 100 << 20
    return 512, 48 << 20             # v7x: 64 MiB per TensorCore


# ---------------------------------------------------------------------------
# Shared tap accumulation: direct "same" conv for `sb` output rows, all ks*ks
# taps accumulated into a vreg-resident (sb*W, Cout_p) f32 accumulator.
# ---------------------------------------------------------------------------
def _accum_conv_taps(x_ref, w_ref, row0, *, ks, sb, w_out, cin_p, cout_p):
    msz = sb * w_out
    acc = jnp.zeros((msz, cout_p), jnp.float32)
    for kh in range(ks):
        rows = x_ref[0, pl.ds(row0 + kh, sb), :, :]            # (sb, Wp, Cin_p) bf16
        for kw in range(ks):
            slab = rows[:, kw:kw + w_out, :].reshape(msz, cin_p)
            # TODO(synk): fold taps into a K=ks*ks*Cin_p im2col contraction once a
            # lane-dense (W*Cin)-packed input layout lands; with Cin_p<=8 and an
            # HBM-bound roofline the 9 small matmuls are hidden today.
            acc = acc + jnp.dot(slab, w_ref[kh * ks + kw],
                                preferred_element_type=jnp.float32)
    return acc


# ---------------------------------------------------------------------------
# Pass 1: per-(sample, H-tile) channel statistics only (no conv output stored).
# Writes an (8, Cout_p) slab per tile: row 0 = sum, row 1 = centered M2.
# ---------------------------------------------------------------------------
def _conv_stats_kernel(x_ref, w_ref, stat_ref, *, ks, th, w_out, sb):
    ht = pl.program_id(1)
    cin_p = x_ref.shape[-1]
    cout_p = w_ref.shape[-1]
    msz = sb * w_out
    n_sb = th // sb

    mus, m2s = [], []
    for sbi in range(n_sb):
        row0 = pl.multiple_of(ht * th + sbi * sb, sb)
        acc = _accum_conv_taps(x_ref, w_ref, row0, ks=ks, sb=sb,
                               w_out=w_out, cin_p=cin_p, cout_p=cout_p)
        mu = jnp.sum(acc, axis=0, keepdims=True) * (1.0 / msz)   # (1, Cout_p)
        d = acc - mu
        mus.append(mu)
        m2s.append(jnp.sum(d * d, axis=0, keepdims=True))

    tile_mean = sum(mus) * (1.0 / n_sb)
    tile_m2 = sum(m2s)
    for mu in mus:                         # parallel-variance (Chan) combine
        d = mu - tile_mean
        tile_m2 = tile_m2 + msz * (d * d)
    tile_sum = tile_mean * float(n_sb * msz)

    pad = jnp.zeros((6, cout_p), jnp.float32)
    stat_ref[...] = jnp.concatenate([tile_sum, tile_m2, pad],
                                    axis=0).reshape(1, 8, cout_p)


# ---------------------------------------------------------------------------
# Pass 2: recompute the conv, apply folded BN/conditional affine + leaky ReLU,
# transpose each sub-block in-register and store straight into NCHW-flat layout.
# ---------------------------------------------------------------------------
def _conv_apply_kernel(x_ref, w_ref, scale_ref, bias_ref, o_ref, *,
                       ks, th, w_out, sb, leak):
    ht = pl.program_id(1)
    cin_p = x_ref.shape[-1]
    cout_p = w_ref.shape[-1]
    msz = sb * w_out
    n_sb = th // sb

    scale = scale_ref[0]                    # (1, Cout_p) f32
    bias = bias_ref[0]

    for sbi in range(n_sb):
        row0 = pl.multiple_of(ht * th + sbi * sb, sb)
        acc = _accum_conv_taps(x_ref, w_ref, row0, ks=ks, sb=sb,
                               w_out=w_out, cin_p=cin_p, cout_p=cout_p)
        y = acc * scale + bias              # folded (y - mean)/std * gamma + beta
        y = jnp.where(y > 0, y, y * leak)
        # One XLU transpose per sub-block -> output is emitted directly in
        # channels-major (NCHW) orientation, lane-dense along H*W.
        o_ref[0, :, sbi * msz:(sbi + 1) * msz] = jnp.transpose(y)


def conv2d_cond_bn_relu(x, z, params, *, ks, leak=0.0, block_rows=None):
    """x: (N, Cin, H, W) f32; z: (N, cond_ch) f32. Returns (N, Cout, H, W) f32."""
    w_oihw = params["conv_w"]                       # (Cout, Cin, ks, ks)
    mw_w, mw_b = params["mw_w"], params["mw_b"]     # (Cout, cond_ch), (Cout,)
    mb_w, mb_b = params["mb_w"], params["mb_b"]

    n, cin, h, w = x.shape
    cout = w_oihw.shape[0]
    p = ks // 2
    assert w % 8 == 0, "kernel requires W to be a multiple of 8 (sublane tile)"
    # TODO(synk): ragged W support (mask padded output columns out of the BN stats).

    cin_p = _round_up(cin, 8)      # lane-padded to 128 inside VMEM; accounted below.
    cout_p = _round_up(cout, 128)  # lane-dense MXU / store tiles.

    auto_rows, vmem_cap = _tpu_vmem_caps()
    if block_rows is None:
        block_rows = auto_rows

    # Sub-block rows: ~128 output positions per matmul M-block, held in vregs.
    sb = max(1, 128 // w) if w < 128 else 1
    while h % sb:
        sb -= 1
    # Tile rows: multiple of sb, divides H, ~block_rows output positions per tile.
    th = sb
    for cand in range(sb, h + 1, sb):
        if h % cand == 0 and cand * w <= max(block_rows, sb * w):
            th = cand
    n_ht = h // th
    if n_ht > 1 and (th * w) % 128 != 0:   # keep output lane blocks 128-aligned
        th, n_ht = h, 1
    grid = (n, n_ht)

    # --- layout plumbing: NCHW -> padded NHWC (bf16 MXU feed) ---------------
    x_nhwc = jnp.transpose(x, (0, 2, 3, 1))
    x_pad = jnp.pad(x_nhwc, ((0, 0), (p, p), (p, p), (0, cin_p - cin)))
    x_pad = x_pad.astype(jnp.bfloat16)
    hp, wp = h + 2 * p, w + 2 * p

    # (Cout, Cin, kh, kw) -> (kh*ks+kw, Cin_p, Cout_p), bf16.
    w_taps = jnp.transpose(w_oihw, (2, 3, 1, 0)).reshape(ks * ks, cin, cout)
    w_taps = jnp.pad(w_taps, ((0, 0), (0, cin_p - cin), (0, cout_p - cout)))
    w_taps = w_taps.astype(jnp.bfloat16)

    # --- honest VMEM accounting (cin_p minor dim lane-padded to 128) --------
    xb = _padded_vmem_bytes((1, hp, wp, cin_p), jnp.bfloat16)
    wb = _padded_vmem_bytes((ks * ks, cin_p, cout_p), jnp.bfloat16)
    sbytes = _padded_vmem_bytes((1, 8, cout_p), jnp.float32)
    ob = _padded_vmem_bytes((1, cout_p, th * w), jnp.float32)
    margin = 4 << 20
    vmem1 = int(min(max(2 * (xb + wb + sbytes) + margin, 32 << 20), vmem_cap))
    vmem2 = int(min(max(2 * (xb + wb + ob + 2 * sbytes) + margin, 32 << 20), vmem_cap))
    # TODO(synk): if 2*xb alone exceeds vmem_cap (large images / Cin on v7x),
    # switch the input spec to halo-tiled (th+2p)-row blocks instead of keeping
    # the whole padded image resident per sample.

    x_spec = pl.BlockSpec((1, hp, wp, cin_p), lambda i, j: (i, 0, 0, 0))
    w_spec = pl.BlockSpec((ks * ks, cin_p, cout_p), lambda i, j: (0, 0, 0))

    # --- pass 1: per-tile channel statistics only ----------------------------
    stats = pl.pallas_call(
        functools.partial(_conv_stats_kernel, ks=ks, th=th, w_out=w, sb=sb),
        out_shape=jax.ShapeDtypeStruct((n, n_ht * 8, cout_p), jnp.float32),
        grid_spec=pltpu.PrefetchScalarGridSpec(
            num_scalar_prefetch=0,
            grid=grid,
            in_specs=[x_spec, w_spec],
            out_specs=pl.BlockSpec((1, 8, cout_p), lambda i, j: (i, j, 0)),
        ),
        compiler_params=pltpu.CompilerParams(
            dimension_semantics=("parallel", "parallel"),
            vmem_limit_bytes=vmem1,
        ),
    )(x_pad, w_taps)

    # --- tiny wrapper-side math: combine tile stats + conditional affine -----
    stats = stats.reshape(n * n_ht, 8, cout_p)
    tile_sum = stats[:, 0, :]                                  # (T, Cout_p)
    tile_m2 = stats[:, 1, :]
    c = jnp.float32(th * w)
    total = jnp.float32(n * h * w)
    mean = jnp.sum(tile_sum, axis=0) / total                   # (Cout_p,)
    tile_means = tile_sum / c
    m2_total = jnp.sum(tile_m2, axis=0) + c * jnp.sum((tile_means - mean) ** 2, axis=0)
    var = jnp.maximum(m2_total / total, 0.0)                   # biased (BN training)
    inv_std = lax.rsqrt(var + EPS)

    zf = z.astype(jnp.float32)
    gamma = 1.0 + zf @ mw_w.T.astype(jnp.float32) + mw_b.astype(jnp.float32)
    beta = zf @ mb_w.T.astype(jnp.float32) + mb_b.astype(jnp.float32)
    # Pad AFTER the "1 +": padded channels get gamma=0 -> scale=bias=0.
    gamma = jnp.pad(gamma, ((0, 0), (0, cout_p - cout)))       # (N, Cout_p)
    beta = jnp.pad(beta, ((0, 0), (0, cout_p - cout)))
    g_is = gamma * inv_std
    scale = g_is.reshape(n, 1, cout_p).astype(jnp.float32)
    bias = (beta - g_is * mean).reshape(n, 1, cout_p).astype(jnp.float32)

    # --- pass 2: conv recompute + fused affine/leaky-ReLU, NCHW-direct store --
    out_flat = pl.pallas_call(
        functools.partial(_conv_apply_kernel, ks=ks, th=th, w_out=w, sb=sb,
                          leak=float(leak)),
        out_shape=jax.ShapeDtypeStruct((n, cout_p, h * w), jnp.float32),
        grid_spec=pltpu.PrefetchScalarGridSpec(
            num_scalar_prefetch=0,
            grid=grid,
            in_specs=[
                x_spec,
                w_spec,
                pl.BlockSpec((1, 1, cout_p), lambda i, j: (i, 0, 0)),
                pl.BlockSpec((1, 1, cout_p), lambda i, j: (i, 0, 0)),
            ],
            out_specs=pl.BlockSpec((1, cout_p, th * w), lambda i, j: (i, 0, j)),
        ),
        compiler_params=pltpu.CompilerParams(
            dimension_semantics=("parallel", "parallel"),
            vmem_limit_bytes=vmem2,
        ),
    )(x_pad, w_taps, scale, bias)

    # Output is already channels-major; only strip channel padding (no-op copy
    # when Cout % 128 == 0) and view as (N, Cout, H, W).
    return out_flat.reshape(n, cout_p, h, w)[:, :cout]


# ---------------------------------------------------------------------------
# Pure-JAX reference mirroring the PyTorch forward.
# ---------------------------------------------------------------------------
def _reference(x, z, params, *, ks, leak=0.0, match_bf16=False):
    p = ks // 2
    xw, cw = x, params["conv_w"]
    if match_bf16:  # round conv operands the way the kernel's MXU feed does
        xw = xw.astype(jnp.bfloat16).astype(jnp.float32)
        cw = cw.astype(jnp.bfloat16).astype(jnp.float32)
    y = lax.conv_general_dilated(
        xw, cw, window_strides=(1, 1), padding=[(p, p), (p, p)],
        dimension_numbers=("NCHW", "OIHW", "NCHW"))
    mean = y.mean(axis=(0, 2, 3), keepdims=True)
    var = ((y - mean) ** 2).mean(axis=(0, 2, 3), keepdims=True)
    yn = (y - mean) / jnp.sqrt(var + EPS)
    gamma = 1.0 + z @ params["mw_w"].T + params["mw_b"]
    beta = z @ params["mb_w"].T + params["mb_b"]
    out = yn * gamma[:, :, None, None] + beta[:, :, None, None]
    return jnp.where(out > 0, out, leak * out)


def init_params(key, in_ch, out_ch, cond_ch, ks, leak=0.0):
    k1, k2, k3, k4, k5 = jax.random.split(key, 5)
    fan_in = in_ch * ks * ks
    std = (2.0 / ((1.0 + leak ** 2) * fan_in)) ** 0.5       # kaiming_normal(a=leak)
    conv_w = std * jax.random.normal(k1, (out_ch, in_ch, ks, ks), jnp.float32)
    lim = 1.0 / (cond_ch ** 0.5)
    mw_w = jax.random.uniform(k2, (out_ch, cond_ch), jnp.float32, -lim, lim)
    mw_b = jax.random.uniform(k3, (out_ch,), jnp.float32, -lim, lim)
    mb_w = jax.random.uniform(k4, (out_ch, cond_ch), jnp.float32, -lim, lim)
    mb_b = jax.random.uniform(k5, (out_ch,), jnp.float32, -lim, lim)
    return dict(conv_w=conv_w, mw_w=mw_w, mw_b=mw_b, mb_w=mb_w, mb_b=mb_b)


if __name__ == "__main__":
    # TODO(synk): BatchNorm running-mean/var buffer updates (stateful, not part
    # of the returned tensor) are not replicated here.
    N, IN_CH, OUT_CH, COND_CH, H, W, KS, LEAK = 2, 4, 8, 8, 16, 16, 3, 0.1

    key = jax.random.PRNGKey(0)
    kx, kz, kp = jax.random.split(key, 3)
    x = jax.random.normal(kx, (N, IN_CH, H, W), jnp.float32)
    z = jax.random.normal(kz, (N, COND_CH), jnp.float32)
    params = init_params(kp, IN_CH, OUT_CH, COND_CH, KS, LEAK)

    # Small block_rows so the demo exercises a multi-tile grid (th=8 -> 2 H-tiles).
    fwd = jax.jit(functools.partial(conv2d_cond_bn_relu, ks=KS, leak=LEAK,
                                    block_rows=128))
    out = jax.block_until_ready(fwd(x, z, params))
    assert out.shape == (N, OUT_CH, H, W)

    # Tight check vs. a reference whose conv operands are rounded to bf16 exactly
    # like the kernel's MXU feed (validates kernel logic).
    ref_m = _reference(x, z, params, ks=KS, leak=LEAK, match_bf16=True)
    err_m = jnp.max(jnp.abs(out - ref_m))
    assert jnp.allclose(out, ref_m, atol=5e-3, rtol=5e-3), \
        f"max abs err vs bf16-matched reference: {err_m}"

    # Loose check vs. the full-f32 PyTorch-equivalent reference.
    ref_f = _reference(x, z, params, ks=KS, leak=LEAK, match_bf16=False)
    err_f = jnp.max(jnp.abs(out - ref_f))
    assert jnp.allclose(out, ref_f, atol=5e-2, rtol=5e-2), \
        f"max abs err vs f32 reference: {err_f}"

    print("KERNEL_OK")
</pallas_src>

<mosaic_0001>
module attributes {stable_mosaic.version = 11 : i64} {
  func.func @_conv_stats_kernel(%arg0: i32, %arg1: i32, %arg2: memref<1x18x18x8xbf16, #tpu.memory_space<vmem>>, %arg3: memref<9x8x128xbf16, #tpu.memory_space<vmem>>, %arg4: memref<1x8x128xf32, #tpu.memory_space<vmem>>) attributes {dimension_semantics = [#tpu.dimension_semantics<parallel>, #tpu.dimension_semantics<parallel>], iteration_bounds = array<i64: 2, 2>, scalar_prefetch = 0 : i64, scratch_operands = 0 : i64, tpu.core_type = #tpu.core_type<tc>, window_params = [{transform_indices = @transform_0, window_bounds = array<i64: 1, 18, 18, 8>}, {pipeline_mode = #tpu.pipeline_mode<synchronous>, transform_indices = @transform_1, window_bounds = array<i64: 9, 8, 128>}, {transform_indices = @transform_2, window_bounds = array<i64: 1, 8, 128>}]} {
    %c8_i32 = arith.constant 8 : i32
    %0 = arith.muli %arg1, %c8_i32 : i32
    %c0_i32 = arith.constant 0 : i32
    %1 = arith.addi %0, %c0_i32 : i32
    %2 = tpu.assume_multiple %1, 8 : i32
    %cst = arith.constant 0.000000e+00 : f32
    %3 = vector.broadcast %cst : f32 to vector<128x128xf32>
    %c0_i32_0 = arith.constant 0 : i32
    %4 = arith.addi %2, %c0_i32_0 : i32
    %c0 = arith.constant 0 : index
    %5 = arith.index_cast %4 : i32 to index
    %c0_1 = arith.constant 0 : index
    %c0_2 = arith.constant 0 : index
    %6 = vector.load %arg2[%c0, %5, %c0_1, %c0_2] : memref<1x18x18x8xbf16, #tpu.memory_space<vmem>>, vector<1x8x18x8xbf16>
    %7 = vector.shape_cast %6 : vector<1x8x18x8xbf16> to vector<8x18x8xbf16>
    %8 = vector.extract_strided_slice %7 {offsets = [0, 0, 0], sizes = [8, 16, 8], strides = [1, 1, 1]} : vector<8x18x8xbf16> to vector<8x16x8xbf16>
    %9 = vector.shape_cast %8 : vector<8x16x8xbf16> to vector<128x8xbf16>
    %c0_3 = arith.constant 0 : index
    %c0_4 = arith.constant 0 : index
    %c0_5 = arith.constant 0 : index
    %10 = vector.load %arg3[%c0_3, %c0_4, %c0_5] : memref<9x8x128xbf16, #tpu.memory_space<vmem>>, vector<1x8x128xbf16>
    %11 = vector.shape_cast %10 : vector<1x8x128xbf16> to vector<8x128xbf16>
    %cst_6 = arith.constant dense<0.000000e+00> : vector<128x128xf32>
    %12 = tpu.matmul %9, %11, %cst_6 {dimension_numbers = #tpu.dot_dimension_numbers<[1], [0], [0], [1], [0, 0, 1, 1], [], []>} : vector<128x8xbf16>, vector<8x128xbf16>, vector<128x128xf32> -> vector<128x128xf32>
    %13 = arith.addf %3, %12 : vector<128x128xf32>
    %14 = vector.extract_strided_slice %7 {offsets = [0, 1, 0], sizes = [8, 16, 8], strides = [1, 1, 1]} : vector<8x18x8xbf16> to vector<8x16x8xbf16>
    %15 = vector.shape_cast %14 : vector<8x16x8xbf16> to vector<128x8xbf16>
    %c1 = arith.constant 1 : index
    %c0_7 = arith.constant 0 : index
    %c0_8 = arith.constant 0 : index
    %16 = vector.load %arg3[%c1, %c0_7, %c0_8] : memref<9x8x128xbf16, #tpu.memory_space<vmem>>, vector<1x8x128xbf16>
    %17 = vector.shape_cast %16 : vector<1x8x128xbf16> to vector<8x128xbf16>
    %cst_9 = arith.constant dense<0.000000e+00> : vector<128x128xf32>
    %18 = tpu.matmul %15, %17, %cst_9 {dimension_numbers = #tpu.dot_dimension_numbers<[1], [0], [0], [1], [0, 0, 1, 1], [], []>} : vector<128x8xbf16>, vector<8x128xbf16>, vector<128x128xf32> -> vector<128x128xf32>
    %19 = arith.addf %13, %18 : vector<128x128xf32>
    %20 = vector.extract_strided_slice %7 {offsets = [0, 2, 0], sizes = [8, 16, 8], strides = [1, 1, 1]} : vector<8x18x8xbf16> to vector<8x16x8xbf16>
    %21 = vector.shape_cast %20 : vector<8x16x8xbf16> to vector<128x8xbf16>
    %c2 = arith.constant 2 : index
    %c0_10 = arith.constant 0 : index
    %c0_11 = arith.constant 0 : index
    %22 = vector.load %arg3[%c2, %c0_10, %c0_11] : memref<9x8x128xbf16, #tpu.memory_space<vmem>>, vector<1x8x128xbf16>
    %23 = vector.shape_cast %22 : vector<1x8x128xbf16> to vector<8x128xbf16>
    %cst_12 = arith.constant dense<0.000000e+00> : vector<128x128xf32>
    %24 = tpu.matmul %21, %23, %cst_12 {dimension_numbers = #tpu.dot_dimension_numbers<[1], [0], [0], [1], [0, 0, 1, 1], [], []>} : vector<128x8xbf16>, vector<8x128xbf16>, vector<128x128xf32> -> vector<128x128xf32>
    %25 = arith.addf %19, %24 : vector<128x128xf32>
    %c1_i32 = arith.constant 1 : i32
    %26 = arith.addi %2, %c1_i32 : i32
    %c0_13 = arith.constant 0 : index
    %27 = arith.index_cast %26 : i32 to index
    %c0_14 = arith.constant 0 : index
    %c0_15 = arith.constant 0 : index
    %28 = vector.load %arg2[%c0_13, %27, %c0_14, %c0_15] : memref<1x18x18x8xbf16, #tpu.memory_space<vmem>>, vector<1x8x18x8xbf16>
    %29 = vector.shape_cast %28 : vector<1x8x18x8xbf16> to vector<8x18x8xbf16>
    %30 = vector.extract_strided_slice %29 {offsets = [0, 0, 0], sizes = [8, 16, 8], strides = [1, 1, 1]} : vector<8x18x8xbf16> to vector<8x16x8xbf16>
    %31 = vector.shape_cast %30 : vector<8x16x8xbf16> to vector<128x8xbf16>
    %c3 = arith.constant 3 : index
    %c0_16 = arith.constant 0 : index
    %c0_17 = arith.constant 0 : index
    %32 = vector.load %arg3[%c3, %c0_16, %c0_17] : memref<9x8x128xbf16, #tpu.memory_space<vmem>>, vector<1x8x128xbf16>
    %33 = vector.shape_cast %32 : vector<1x8x128xbf16> to vector<8x128xbf16>
    %cst_18 = arith.constant dense<0.000000e+00> : vector<128x128xf32>
    %34 = tpu.matmul %31, %33, %cst_18 {dimension_numbers = #tpu.dot_dimension_numbers<[1], [0], [0], [1], [0, 0, 1, 1], [], []>} : vector<128x8xbf16>, vector<8x128xbf16>, vector<128x128xf32> -> vector<128x128xf32>
    %35 = arith.addf %25, %34 : vector<128x128xf32>
    %36 = vector.extract_strided_slice %29 {offsets = [0, 1, 0], sizes = [8, 16, 8], strides = [1, 1, 1]} : vector<8x18x8xbf16> to vector<8x16x8xbf16>
    %37 = vector.shape_cast %36 : vector<8x16x8xbf16> to vector<128x8xbf16>
    %c4 = arith.constant 4 : index
    %c0_19 = arith.constant 0 : index
    %c0_20 = arith.constant 0 : index
    %38 = vector.load %arg3[%c4, %c0_19, %c0_20] : memref<9x8x128xbf16, #tpu.memory_space<vmem>>, vector<1x8x128xbf16>
    %39 = vector.shape_cast %38 : vector<1x8x128xbf16> to vector<8x128xbf16>
    %cst_21 = arith.constant dense<0.000000e+00> : vector<128x128xf32>
    %40 = tpu.matmul %37, %39, %cst_21 {dimension_numbers = #tpu.dot_dimension_numbers<[1], [0], [0], [1], [0, 0, 1, 1], [], []>} : vector<128x8xbf16>, vector<8x128xbf16>, vector<128x128xf32> -> vector<128x128xf32>
    %41 = arith.addf %35, %40 : vector<128x128xf32>
    %42 = vector.extract_strided_slice %29 {offsets = [0, 2, 0], sizes = [8, 16, 8], strides = [1, 1, 1]} : vector<8x18x8xbf16> to vector<8x16x8xbf16>
    %43 = vector.shape_cast %42 : vector<8x16x8xbf16> to vector<128x8xbf16>
    %c5 = arith.constant 5 : index
    %c0_22 = arith.constant 0 : index
    %c0_23 = arith.constant 0 : index
    %44 = vector.load %arg3[%c5, %c0_22, %c0_23] : memref<9x8x128xbf16, #tpu.memory_space<vmem>>, vector<1x8x128xbf16>
    %45 = vector.shape_cast %44 : vector<1x8x128xbf16> to vector<8x128xbf16>
    %cst_24 = arith.constant dense<0.000000e+00> : vector<128x128xf32>
    %46 = tpu.matmul %43, %45, %cst_24 {dimension_numbers = #tpu.dot_dimension_numbers<[1], [0], [0], [1], [0, 0, 1, 1], [], []>} : vector<128x8xbf16>, vector<8x128xbf16>, vector<128x128xf32> -> vector<128x128xf32>
    %47 = arith.addf %41, %46 : vector<128x128xf32>
    %c2_i32 = arith.constant 2 : i32
    %48 = arith.addi %2, %c2_i32 : i32
    %c0_25 = arith.constant 0 : index
    %49 = arith.index_cast %48 : i32 to index
    %c0_26 = arith.constant 0 : index
    %c0_27 = arith.constant 0 : index
    %50 = vector.load %arg2[%c0_25, %49, %c0_26, %c0_27] : memref<1x18x18x8xbf16, #tpu.memory_space<vmem>>, vector<1x8x18x8xbf16>
    %51 = vector.shape_cast %50 : vector<1x8x18x8xbf16> to vector<8x18x8xbf16>
    %52 = vector.extract_strided_slice %51 {offsets = [0, 0, 0], sizes = [8, 16, 8], strides = [1, 1, 1]} : vector<8x18x8xbf16> to vector<8x16x8xbf16>
    %53 = vector.shape_cast %52 : vector<8x16x8xbf16> to vector<128x8xbf16>
    %c6 = arith.constant 6 : index
    %c0_28 = arith.constant 0 : index
    %c0_29 = arith.constant 0 : index
    %54 = vector.load %arg3[%c6, %c0_28, %c0_29] : memref<9x8x128xbf16, #tpu.memory_space<vmem>>, vector<1x8x128xbf16>
    %55 = vector.shape_cast %54 : vector<1x8x128xbf16> to vector<8x128xbf16>
    %cst_30 = arith.constant dense<0.000000e+00> : vector<128x128xf32>
    %56 = tpu.matmul %53, %55, %cst_30 {dimension_numbers = #tpu.dot_dimension_numbers<[1], [0], [0], [1], [0, 0, 1, 1], [], []>} : vector<128x8xbf16>, vector<8x128xbf16>, vector<128x128xf32> -> vector<128x128xf32>
    %57 = arith.addf %47, %56 : vector<128x128xf32>
    %58 = vector.extract_strided_slice %51 {offsets = [0, 1, 0], sizes = [8, 16, 8], strides = [1, 1, 1]} : vector<8x18x8xbf16> to vector<8x16x8xbf16>
    %59 = vector.shape_cast %58 : vector<8x16x8xbf16> to vector<128x8xbf16>
    %c7 = arith.constant 7 : index
    %c0_31 = arith.constant 0 : index
    %c0_32 = arith.constant 0 : index
    %60 = vector.load %arg3[%c7, %c0_31, %c0_32] : memref<9x8x128xbf16, #tpu.memory_space<vmem>>, vector<1x8x128xbf16>
    %61 = vector.shape_cast %60 : vector<1x8x128xbf16> to vector<8x128xbf16>
    %cst_33 = arith.constant dense<0.000000e+00> : vector<128x128xf32>
    %62 = tpu.matmul %59, %61, %cst_33 {dimension_numbers = #tpu.dot_dimension_numbers<[1], [0], [0], [1], [0, 0, 1, 1], [], []>} : vector<128x8xbf16>, vector<8x128xbf16>, vector<128x128xf32> -> vector<128x128xf32>
    %63 = arith.addf %57, %62 : vector<128x128xf32>
    %64 = vector.extract_strided_slice %51 {offsets = [0, 2, 0], sizes = [8, 16, 8], strides = [1, 1, 1]} : vector<8x18x8xbf16> to vector<8x16x8xbf16>
    %65 = vector.shape_cast %64 : vector<8x16x8xbf16> to vector<128x8xbf16>
    %c8 = arith.constant 8 : index
    %c0_34 = arith.constant 0 : index
    %c0_35 = arith.constant 0 : index
    %66 = vector.load %arg3[%c8, %c0_34, %c0_35] : memref<9x8x128xbf16, #tpu.memory_space<vmem>>, vector<1x8x128xbf16>
    %67 = vector.shape_cast %66 : vector<1x8x128xbf16> to vector<8x128xbf16>
    %cst_36 = arith.constant dense<0.000000e+00> : vector<128x128xf32>
    %68 = tpu.matmul %65, %67, %cst_36 {dimension_numbers = #tpu.dot_dimension_numbers<[1], [0], [0], [1], [0, 0, 1, 1], [], []>} : vector<128x8xbf16>, vector<8x128xbf16>, vector<128x128xf32> -> vector<128x128xf32>
    %69 = arith.addf %63, %68 : vector<128x128xf32>
    %cst_37 = arith.constant dense<0.000000e+00> : vector<128xf32>
    %70 = vector.multi_reduction <add>, %69, %cst_37 [0] : vector<128x128xf32> to vector<128xf32>
    %71 = vector.shape_cast %70 : vector<128xf32> to vector<1x128xf32>
    %cst_38 = arith.constant 7.812500e-03 : f32
    %72 = vector.broadcast %cst_38 : f32 to vector<1x128xf32>
    %73 = arith.mulf %71, %72 : vector<1x128xf32>
    %74 = vector.broadcast %73 : vector<1x128xf32> to vector<128x128xf32>
    %75 = arith.subf %69, %74 : vector<128x128xf32>
    %76 = arith.mulf %75, %75 : vector<128x128xf32>
    %cst_39 = arith.constant dense<0.000000e+00> : vector<128xf32>
    %77 = vector.multi_reduction <add>, %76, %cst_39 [0] : vector<128x128xf32> to vector<128xf32>
    %78 = vector.shape_cast %77 : vector<128xf32> to vector<1x128xf32>
    %cst_40 = arith.constant 0.000000e+00 : f32
    %79 = vector.broadcast %cst_40 : f32 to vector<1x128xf32>
    %80 = arith.addf %79, %73 : vector<1x128xf32>
    %cst_41 = arith.constant 1.000000e+00 : f32
    %81 = vector.broadcast %cst_41 : f32 to vector<1x128xf32>
    %82 = arith.mulf %80, %81 : vector<1x128xf32>
    %cst_42 = arith.constant 0.000000e+00 : f32
    %83 = vector.broadcast %cst_42 : f32 to vector<1x128xf32>
    %84 = arith.addf %83, %78 : vector<1x128xf32>
    %85 = arith.subf %73, %82 : vector<1x128xf32>
    %86 = arith.mulf %85, %85 : vector<1x128xf32>
    %cst_43 = arith.constant 1.280000e+02 : f32
    %87 = vector.broadcast %cst_43 : f32 to vector<1x128xf32>
    %88 = arith.mulf %87, %86 : vector<1x128xf32>
    %89 = arith.addf %84, %88 : vector<1x128xf32>
    %cst_44 = arith.constant 1.280000e+02 : f32
    %90 = vector.broadcast %cst_44 : f32 to vector<1x128xf32>
    %91 = arith.mulf %82, %90 : vector<1x128xf32>
    %cst_45 = arith.constant 0.000000e+00 : f32
    %92 = vector.broadcast %cst_45 : f32 to vector<6x128xf32>
    %93 = tpu.concatenate %91, %89, %92 in 0 : vector<1x128xf32>, vector<1x128xf32>, vector<6x128xf32> -> vector<8x128xf32>
    %94 = vector.shape_cast %93 : vector<8x128xf32> to vector<1x8x128xf32>
    %c0_46 = arith.constant 0 : index
    %c0_47 = arith.constant 0 : index
    %c0_48 = arith.constant 0 : index
    %95 = vector.load %arg4[%c0_46, %c0_47, %c0_48] : memref<1x8x128xf32, #tpu.memory_space<vmem>>, vector<1x8x128xf32>
    tpu.vector_store %arg4[%c0_46, %c0_47, %c0_48], %94 {strides = array<i32>} : memref<1x8x128xf32, #tpu.memory_space<vmem>>, vector<1x8x128xf32>,
    return
  }
  func.func @transform_0(%arg0: i32, %arg1: i32) -> (i32, i32, i32, i32) {
    %c0_i32 = arith.constant 0 : i32
    %c0_i32_0 = arith.constant 0 : i32
    %c0_i32_1 = arith.constant 0 : i32
    %c0_i32_2 = arith.constant 0 : i32
    return %arg0, %c0_i32, %c0_i32_0, %c0_i32_1 : i32, i32, i32, i32
  }
  func.func @transform_1(%arg0: i32, %arg1: i32) -> (i32, i32, i32) {
    %c0_i32 = arith.constant 0 : i32
    %c0_i32_0 = arith.constant 0 : i32
    %c0_i32_1 = arith.constant 0 : i32
    %c0_i32_2 = arith.constant 0 : i32
    return %c0_i32, %c0_i32_0, %c0_i32_1 : i32, i32, i32
  }
  func.func @transform_2(%arg0: i32, %arg1: i32) -> (i32, i32, i32) {
    %c0_i32 = arith.constant 0 : i32
    %c0_i32_0 = arith.constant 0 : i32
    return %arg0, %arg1, %c0_i32 : i32, i32, i32
  }
}

module attributes {stable_mosaic.version = 11 : i64} {
  func.func @_conv_apply_kernel(%arg0: i32, %arg1: i32, %arg2: memref<1x18x18x8xbf16, #tpu.memory_space<vmem>>, %arg3: memref<9x8x128xbf16, #tpu.memory_space<vmem>>, %arg4: memref<1x1x128xf32, #tpu.memory_space<vmem>>, %arg5: memref<1x1x128xf32, #tpu.memory_space<vmem>>, %arg6: memref<1x128x128xf32, #tpu.memory_space<vmem>>) attributes {dimension_semantics = [#tpu.dimension_semantics<parallel>, #tpu.dimension_semantics<parallel>], iteration_bounds = array<i64: 2, 2>, scalar_prefetch = 0 : i64, scratch_operands = 0 : i64, tpu.core_type = #tpu.core_type<tc>, window_params = [{transform_indices = @transform_0, window_bounds = array<i64: 1, 18, 18, 8>}, {pipeline_mode = #tpu.pipeline_mode<synchronous>, transform_indices = @transform_1, window_bounds = array<i64: 9, 8, 128>}, {transform_indices = @transform_2, window_bounds = array<i64: 1, 1, 128>}, {transform_indices = @transform_3, window_bounds = array<i64: 1, 1, 128>}, {transform_indices = @transform_4, window_bounds = array<i64: 1, 128, 128>}]} {
    %c0 = arith.constant 0 : index
    %c0_0 = arith.constant 0 : index
    %c0_1 = arith.constant 0 : index
    %0 = vector.load %arg4[%c0, %c0_0, %c0_1] : memref<1x1x128xf32, #tpu.memory_space<vmem>>, vector<1x1x128xf32>
    %1 = vector.shape_cast %0 : vector<1x1x128xf32> to vector<1x128xf32>
    %c0_2 = arith.constant 0 : index
    %c0_3 = arith.constant 0 : index
    %c0_4 = arith.constant 0 : index
    %2 = vector.load %arg5[%c0_2, %c0_3, %c0_4] : memref<1x1x128xf32, #tpu.memory_space<vmem>>, vector<1x1x128xf32>
    %3 = vector.shape_cast %2 : vector<1x1x128xf32> to vector<1x128xf32>
    %c8_i32 = arith.constant 8 : i32
    %4 = arith.muli %arg1, %c8_i32 : i32
    %c0_i32 = arith.constant 0 : i32
    %5 = arith.addi %4, %c0_i32 : i32
    %6 = tpu.assume_multiple %5, 8 : i32
    %cst = arith.constant 0.000000e+00 : f32
    %7 = vector.broadcast %cst : f32 to vector<128x128xf32>
    %c0_i32_5 = arith.constant 0 : i32
    %8 = arith.addi %6, %c0_i32_5 : i32
    %c0_6 = arith.constant 0 : index
    %9 = arith.index_cast %8 : i32 to index
    %c0_7 = arith.constant 0 : index
    %c0_8 = arith.constant 0 : index
    %10 = vector.load %arg2[%c0_6, %9, %c0_7, %c0_8] : memref<1x18x18x8xbf16, #tpu.memory_space<vmem>>, vector<1x8x18x8xbf16>
    %11 = vector.shape_cast %10 : vector<1x8x18x8xbf16> to vector<8x18x8xbf16>
    %12 = vector.extract_strided_slice %11 {offsets = [0, 0, 0], sizes = [8, 16, 8], strides = [1, 1, 1]} : vector<8x18x8xbf16> to vector<8x16x8xbf16>
    %13 = vector.shape_cast %12 : vector<8x16x8xbf16> to vector<128x8xbf16>
    %c0_9 = arith.constant 0 : index
    %c0_10 = arith.constant 0 : index
    %c0_11 = arith.constant 0 : index
    %14 = vector.load %arg3[%c0_9, %c0_10, %c0_11] : memref<9x8x128xbf16, #tpu.memory_space<vmem>>, vector<1x8x128xbf16>
    %15 = vector.shape_cast %14 : vector<1x8x128xbf16> to vector<8x128xbf16>
    %cst_12 = arith.constant dense<0.000000e+00> : vector<128x128xf32>
    %16 = tpu.matmul %13, %15, %cst_12 {dimension_numbers = #tpu.dot_dimension_numbers<[1], [0], [0], [1], [0, 0, 1, 1], [], []>} : vector<128x8xbf16>, vector<8x128xbf16>, vector<128x128xf32> -> vector<128x128xf32>
    %17 = arith.addf %7, %16 : vector<128x128xf32>
    %18 = vector.extract_strided_slice %11 {offsets = [0, 1, 0], sizes = [8, 16, 8], strides = [1, 1, 1]} : vector<8x18x8xbf16> to vector<8x16x8xbf16>
    %19 = vector.shape_cast %18 : vector<8x16x8xbf16> to vector<128x8xbf16>
    %c1 = arith.constant 1 : index
    %c0_13 = arith.constant 0 : index
    %c0_14 = arith.constant 0 : index
    %20 = vector.load %arg3[%c1, %c0_13, %c0_14] : memref<9x8x128xbf16, #tpu.memory_space<vmem>>, vector<1x8x128xbf16>
    %21 = vector.shape_cast %20 : vector<1x8x128xbf16> to vector<8x128xbf16>
    %cst_15 = arith.constant dense<0.000000e+00> : vector<128x128xf32>
    %22 = tpu.matmul %19, %21, %cst_15 {dimension_numbers = #tpu.dot_dimension_numbers<[1], [0], [0], [1], [0, 0, 1, 1], [], []>} : vector<128x8xbf16>, vector<8x128xbf16>, vector<128x128xf32> -> vector<128x128xf32>
    %23 = arith.addf %17, %22 : vector<128x128xf32>
    %24 = vector.extract_strided_slice %11 {offsets = [0, 2, 0], sizes = [8, 16, 8], strides = [1, 1, 1]} : vector<8x18x8xbf16> to vector<8x16x8xbf16>
    %25 = vector.shape_cast %24 : vector<8x16x8xbf16> to vector<128x8xbf16>
    %c2 = arith.constant 2 : index
    %c0_16 = arith.constant 0 : index
    %c0_17 = arith.constant 0 : index
    %26 = vector.load %arg3[%c2, %c0_16, %c0_17] : memref<9x8x128xbf16, #tpu.memory_space<vmem>>, vector<1x8x128xbf16>
    %27 = vector.shape_cast %26 : vector<1x8x128xbf16> to vector<8x128xbf16>
    %cst_18 = arith.constant dense<0.000000e+00> : vector<128x128xf32>
    %28 = tpu.matmul %25, %27, %cst_18 {dimension_numbers = #tpu.dot_dimension_numbers<[1], [0], [0], [1], [0, 0, 1, 1], [], []>} : vector<128x8xbf16>, vector<8x128xbf16>, vector<128x128xf32> -> vector<128x128xf32>
    %29 = arith.addf %23, %28 : vector<128x128xf32>
    %c1_i32 = arith.constant 1 : i32
    %30 = arith.addi %6, %c1_i32 : i32
    %c0_19 = arith.constant 0 : index
    %31 = arith.index_cast %30 : i32 to index
    %c0_20 = arith.constant 0 : index
    %c0_21 = arith.constant 0 : index
    %32 = vector.load %arg2[%c0_19, %31, %c0_20, %c0_21] : memref<1x18x18x8xbf16, #tpu.memory_space<vmem>>, vector<1x8x18x8xbf16>
    %33 = vector.shape_cast %32 : vector<1x8x18x8xbf16> to vector<8x18x8xbf16>
    %34 = vector.extract_strided_slice %33 {offsets = [0, 0, 0], sizes = [8, 16, 8], strides = [1, 1, 1]} : vector<8x18x8xbf16> to vector<8x16x8xbf16>
    %35 = vector.shape_cast %34 : vector<8x16x8xbf16> to vector<128x8xbf16>
    %c3 = arith.constant 3 : index
    %c0_22 = arith.constant 0 : index
    %c0_23 = arith.constant 0 : index
    %36 = vector.load %arg3[%c3, %c0_22, %c0_23] : memref<9x8x128xbf16, #tpu.memory_space<vmem>>, vector<1x8x128xbf16>
    %37 = vector.shape_cast %36 : vector<1x8x128xbf16> to vector<8x128xbf16>
    %cst_24 = arith.constant dense<0.000000e+00> : vector<128x128xf32>
    %38 = tpu.matmul %35, %37, %cst_24 {dimension_numbers = #tpu.dot_dimension_numbers<[1], [0], [0], [1], [0, 0, 1, 1], [], []>} : vector<128x8xbf16>, vector<8x128xbf16>, vector<128x128xf32> -> vector<128x128xf32>
    %39 = arith.addf %29, %38 : vector<128x128xf32>
    %40 = vector.extract_strided_slice %33 {offsets = [0, 1, 0], sizes = [8, 16, 8], strides = [1, 1, 1]} : vector<8x18x8xbf16> to vector<8x16x8xbf16>
    %41 = vector.shape_cast %40 : vector<8x16x8xbf16> to vector<128x8xbf16>
    %c4 = arith.constant 4 : index
    %c0_25 = arith.constant 0 : index
    %c0_26 = arith.constant 0 : index
    %42 = vector.load %arg3[%c4, %c0_25, %c0_26] : memref<9x8x128xbf16, #tpu.memory_space<vmem>>, vector<1x8x128xbf16>
    %43 = vector.shape_cast %42 : vector<1x8x128xbf16> to vector<8x128xbf16>
    %cst_27 = arith.constant dense<0.000000e+00> : vector<128x128xf32>
    %44 = tpu.matmul %41, %43, %cst_27 {dimension_numbers = #tpu.dot_dimension_numbers<[1], [0], [0], [1], [0, 0, 1, 1], [], []>} : vector<128x8xbf16>, vector<8x128xbf16>, vector<128x128xf32> -> vector<128x128xf32>
    %45 = arith.addf %39, %44 : vector<128x128xf32>
    %46 = vector.extract_strided_slice %33 {offsets = [0, 2, 0], sizes = [8, 16, 8], strides = [1, 1, 1]} : vector<8x18x8xbf16> to vector<8x16x8xbf16>
    %47 = vector.shape_cast %46 : vector<8x16x8xbf16> to vector<128x8xbf16>
    %c5 = arith.constant 5 : index
    %c0_28 = arith.constant 0 : index
    %c0_29 = arith.constant 0 : index
    %48 = vector.load %arg3[%c5, %c0_28, %c0_29] : memref<9x8x128xbf16, #tpu.memory_space<vmem>>, vector<1x8x128xbf16>
    %49 = vector.shape_cast %48 : vector<1x8x128xbf16> to vector<8x128xbf16>
    %cst_30 = arith.constant dense<0.000000e+00> : vector<128x128xf32>
    %50 = tpu.matmul %47, %49, %cst_30 {dimension_numbers = #tpu.dot_dimension_numbers<[1], [0], [0], [1], [0, 0, 1, 1], [], []>} : vector<128x8xbf16>, vector<8x128xbf16>, vector<128x128xf32> -> vector<128x128xf32>
    %51 = arith.addf %45, %50 : vector<128x128xf32>
    %c2_i32 = arith.constant 2 : i32
    %52 = arith.addi %6, %c2_i32 : i32
    %c0_31 = arith.constant 0 : index
    %53 = arith.index_cast %52 : i32 to index
    %c0_32 = arith.constant 0 : index
    %c0_33 = arith.constant 0 : index
    %54 = vector.load %arg2[%c0_31, %53, %c0_32, %c0_33] : memref<1x18x18x8xbf16, #tpu.memory_space<vmem>>, vector<1x8x18x8xbf16>
    %55 = vector.shape_cast %54 : vector<1x8x18x8xbf16> to vector<8x18x8xbf16>
    %56 = vector.extract_strided_slice %55 {offsets = [0, 0, 0], sizes = [8, 16, 8], strides = [1, 1, 1]} : vector<8x18x8xbf16> to vector<8x16x8xbf16>
    %57 = vector.shape_cast %56 : vector<8x16x8xbf16> to vector<128x8xbf16>
    %c6 = arith.constant 6 : index
    %c0_34 = arith.constant 0 : index
    %c0_35 = arith.constant 0 : index
    %58 = vector.load %arg3[%c6, %c0_34, %c0_35] : memref<9x8x128xbf16, #tpu.memory_space<vmem>>, vector<1x8x128xbf16>
    %59 = vector.shape_cast %58 : vector<1x8x128xbf16> to vector<8x128xbf16>
    %cst_36 = arith.constant dense<0.000000e+00> : vector<128x128xf32>
    %60 = tpu.matmul %57, %59, %cst_36 {dimension_numbers = #tpu.dot_dimension_numbers<[1], [0], [0], [1], [0, 0, 1, 1], [], []>} : vector<128x8xbf16>, vector<8x128xbf16>, vector<128x128xf32> -> vector<128x128xf32>
    %61 = arith.addf %51, %60 : vector<128x128xf32>
    %62 = vector.extract_strided_slice %55 {offsets = [0, 1, 0], sizes = [8, 16, 8], strides = [1, 1, 1]} : vector<8x18x8xbf16> to vector<8x16x8xbf16>
    %63 = vector.shape_cast %62 : vector<8x16x8xbf16> to vector<128x8xbf16>
    %c7 = arith.constant 7 : index
    %c0_37 = arith.constant 0 : index
    %c0_38 = arith.constant 0 : index
    %64 = vector.load %arg3[%c7, %c0_37, %c0_38] : memref<9x8x128xbf16, #tpu.memory_space<vmem>>, vector<1x8x128xbf16>
    %65 = vector.shape_cast %64 : vector<1x8x128xbf16> to vector<8x128xbf16>
    %cst_39 = arith.constant dense<0.000000e+00> : vector<128x128xf32>
    %66 = tpu.matmul %63, %65, %cst_39 {dimension_numbers = #tpu.dot_dimension_numbers<[1], [0], [0], [1], [0, 0, 1, 1], [], []>} : vector<128x8xbf16>, vector<8x128xbf16>, vector<128x128xf32> -> vector<128x128xf32>
    %67 = arith.addf %61, %66 : vector<128x128xf32>
    %68 = vector.extract_strided_slice %55 {offsets = [0, 2, 0], sizes = [8, 16, 8], strides = [1, 1, 1]} : vector<8x18x8xbf16> to vector<8x16x8xbf16>
    %69 = vector.shape_cast %68 : vector<8x16x8xbf16> to vector<128x8xbf16>
    %c8 = arith.constant 8 : index
    %c0_40 = arith.constant 0 : index
    %c0_41 = arith.constant 0 : index
    %70 = vector.load %arg3[%c8, %c0_40, %c0_41] : memref<9x8x128xbf16, #tpu.memory_space<vmem>>, vector<1x8x128xbf16>
    %71 = vector.shape_cast %70 : vector<1x8x128xbf16> to vector<8x128xbf16>
    %cst_42 = arith.constant dense<0.000000e+00> : vector<128x128xf32>
    %72 = tpu.matmul %69, %71, %cst_42 {dimension_numbers = #tpu.dot_dimension_numbers<[1], [0], [0], [1], [0, 0, 1, 1], [], []>} : vector<128x8xbf16>, vector<8x128xbf16>, vector<128x128xf32> -> vector<128x128xf32>
    %73 = arith.addf %67, %72 : vector<128x128xf32>
    %74 = vector.broadcast %1 : vector<1x128xf32> to vector<128x128xf32>
    %75 = arith.mulf %73, %74 : vector<128x128xf32>
    %76 = vector.broadcast %3 : vector<1x128xf32> to vector<128x128xf32>
    %77 = arith.addf %75, %76 : vector<128x128xf32>
    %cst_43 = arith.constant 0.000000e+00 : f32
    %78 = vector.broadcast %cst_43 : f32 to vector<128x128xf32>
    %79 = arith.cmpf ogt, %77, %78 : vector<128x128xf32>
    %cst_44 = arith.constant 1.000000e-01 : f32
    %80 = vector.broadcast %cst_44 : f32 to vector<128x128xf32>
    %81 = arith.mulf %77, %80 : vector<128x128xf32>
    %82 = arith.select %79, %77, %81 : vector<128x128xi1>, vector<128x128xf32>
    %83 = tpu.transpose %82, [1, 0] : vector<128x128xf32> -> vector<128x128xf32>
    %c0_45 = arith.constant 0 : index
    %c0_46 = arith.constant 0 : index
    %c0_47 = arith.constant 0 : index
    %84 = vector.load %arg6[%c0_45, %c0_46, %c0_47] : memref<1x128x128xf32, #tpu.memory_space<vmem>>, vector<1x128x128xf32>
    %85 = vector.shape_cast %84 : vector<1x128x128xf32> to vector<128x128xf32>
    %86 = vector.shape_cast %83 : vector<128x128xf32> to vector<1x128x128xf32>
    tpu.vector_store %arg6[%c0_45, %c0_46, %c0_47], %86 {strides = array<i32>} : memref<1x128x128xf32, #tpu.memory_space<vmem>>, vector<1x128x128xf32>,
    return
  }
  func.func @transform_0(%arg0: i32, %arg1: i32) -> (i32, i32, i32, i32) {
    %c0_i32 = arith.constant 0 : i32
    %c0_i32_0 = arith.constant 0 : i32
    %c0_i32_1 = arith.constant 0 : i32
    %c0_i32_2 = arith.constant 0 : i32
    return %arg0, %c0_i32, %c0_i32_0, %c0_i32_1 : i32, i32, i32, i32
  }
  func.func @transform_1(%arg0: i32, %arg1: i32) -> (i32, i32, i32) {
    %c0_i32 = arith.constant 0 : i32
    %c0_i32_0 = arith.constant 0 : i32
    %c0_i32_1 = arith.constant 0 : i32
    %c0_i32_2 = arith.constant 0 : i32
    return %c0_i32, %c0_i32_0, %c0_i32_1 : i32, i32, i32
  }
  func.func @transform_2(%arg0: i32, %arg1: i32) -> (i32, i32, i32) {
    %c0_i32 = arith.constant 0 : i32
    %c0_i32_0 = arith.constant 0 : i32
    %c0_i32_1 = arith.constant 0 : i32
    return %arg0, %c0_i32, %c0_i32_0 : i32, i32, i32
  }
  func.func @transform_3(%arg0: i32, %arg1: i32) -> (i32, i32, i32) {
    %c0_i32 = arith.constant 0 : i32
    %c0_i32_0 = arith.constant 0 : i32
    %c0_i32_1 = arith.constant 0 : i32
    return %arg0, %c0_i32, %c0_i32_0 : i32, i32, i32
  }
  func.func @transform_4(%arg0: i32, %arg1: i32) -> (i32, i32, i32) {
    %c0_i32 = arith.constant 0 : i32
    %c0_i32_0 = arith.constant 0 : i32
    return %arg0, %c0_i32, %arg1 : i32, i32, i32
  }
}

</mosaic_0001>

<llo_original>
// kernel: conv2d_cond_bn_relu.2
$region0: #{conv2d_cond_bn_relu.2}
  #allocation0 [shape = 'u32[]', space=smem, size = 0x4, offset = 0x4, fixed_abs, tag = 'smem constant byte address 0x4 - core index']
  #allocation1 [shape = 'u32[144,128]{1,0:T(1,128)}', space=vmem, size = 0x12000, scoped, tag = 'internal scratch']
  %s0 = inlined_call_operand.vmem [shape: bf16[2,18,18,8], index: 0, kind: input, shape index: {}]
  %s1 = inlined_call_operand.vmem [shape: bf16[9,8,128], index: 1, kind: input, shape index: {}]
  %s2 = inlined_call_operand.vmem [shape: f32[2,16,128], index: 2, kind: output, shape index: {}]
  %s3 = sld [smem:[#allocation0]]
  $region41: #{conv2d_cond_bn_relu.2} parent=0
    _
  %s5 = ssub.s32 1, %s3
  %s6 = scalar_select 0, %s5, %s3
  loop: start=0, step=1, limit=6
  $region2: #{conv2d_cond_bn_relu.2} parent=0 // loop_pre_header
    _
  $region3: #{conv2d_cond_bn_relu.2} parent=0 // loop_header
    %s8 = sphi 0, %s12
    %p9 = scmp.ge.s32.totalorder %s8, 6
    %s15 = sphi 0, %s27
    %s16 = sphi 0, %s23
    %s17 = sphi 0, %s15
    %s18 = sphi 0, %s16
    %s19 = sphi 0, %s17
    %s20 = sphi 0, %s18
    %s30 = sphi 0, %s32
    %s33 = sphi 0, %s30
    %s34 = sphi 0, %s33
    %s50 = sphi 0, %s34
    %s54 = sphi 0, %s54
    %s56 = sphi 0, %s54
    %s57 = sphi 0, %s56
    %s71 = sphi 0, %s57
    %s79 = sphi 0, %s81
    %s82 = sphi 0, %s79
    %s83 = sphi 0, %s82
    %s99 = sphi 0, %s83
  $region4: #{conv2d_cond_bn_relu.2} parent=0 // loop_header_branch
    %11 = sbr.rel (%p9) target = $region8
  $region5: #{conv2d_cond_bn_relu.2} parent=0 // loop_body
    %s13 = ssub.s32 %s8, 1
    %s14 = ssub.s32 %s8, 2
    %s21 = sadd.s32 1, %s16
    %p22 = scmp.ge.s32.totalorder %s21, 2
    %s23 = scalar_select %p22, 0, %s21
    %s24 = sadd.s32 1, %s15
    %s25 = scalar_select %p22, %s24, %s15
    %p26 = scmp.ge.s32.totalorder %s25, 2
    %s27 = scalar_select %p26, 0, %s25
    %s28 = ssub.s32 %s15, %s27
    %p29 = scmp.eq.s32.totalorder %s28, 0
    %s31 = sadd.s32 %s30, 1
    %s32 = scalar_select %p29, %s30, %s31
    %p35 = pneg %p29
    %p36 = scmp.eq.s32.totalorder %s8, 3
    %p37 = por %p35, %p36
    %p38 = scmp.ne.s32.totalorder %s30, %s33
    %p39 = scmp.eq.s32.totalorder %s8, 0
    %p40 = por %p38, %p39
    %p41 = scmp.ne.s32.totalorder %s30, %s33
    %p42 = scmp.eq.s32.totalorder %s13, 3
    %p43 = por %p41, %p42
    %p44 = scmp.ne.s32.totalorder %s33, %s34
    %p45 = scmp.eq.s32.totalorder %s13, 0
    %p46 = por %p44, %p45
    %p47 = scmp.ne.s32.totalorder %s33, %s34
    %p48 = scmp.eq.s32.totalorder %s14, 3
    %p49 = por %p47, %p48
    %p51 = scmp.ne.s32.totalorder %s34, %s50
    %p52 = scmp.eq.s32.totalorder %s14, 0
    %p53 = por %p51, %p52
    %s55 = sadd.s32 %s54, 1
    %p58 = scmp.eq.s32.totalorder %s8, 3
    %p59 = scmp.ne.s32.totalorder %s54, %s56
    %p60 = scmp.eq.s32.totalorder %s8, 0
    %p61 = por %p59, %p60
    %p62 = scmp.ne.s32.totalorder %s54, %s56
    %p63 = scmp.eq.s32.totalorder %s13, 3
    %p64 = por %p62, %p63
    %p65 = scmp.ne.s32.totalorder %s56, %s57
    %p66 = scmp.eq.s32.totalorder %s13, 0
    %p67 = por %p65, %p66
    %p68 = scmp.ne.s32.totalorder %s56, %s57
    %p69 = scmp.eq.s32.totalorder %s14, 3
    %p70 = por %p68, %p69
    %p72 = scmp.ne.s32.totalorder %s57, %s71
    %p73 = scmp.eq.s32.totalorder %s14, 0
    %p74 = por %p72, %p73
    %s75 = ssub.s32 %s15, %s27
    %s76 = ssub.s32 %s16, %s23
    %s77 = sor.u32 %s75, %s76
    %p78 = scmp.eq.s32.totalorder %s77, 0
    %s80 = sadd.s32 %s79, 1
    %s81 = scalar_select %p78, %s79, %s80
    %p84 = pneg %p78
    %p85 = scmp.eq.s32.totalorder %s8, 3
    %p86 = por %p84, %p85
    %p87 = scmp.ne.s32.totalorder %s79, %s82
    %p88 = scmp.eq.s32.totalorder %s8, 0
    %p89 = por %p87, %p88
    %p90 = scmp.ne.s32.totalorder %s79, %s82
    %p91 = scmp.eq.s32.totalorder %s13, 3
    %p92 = por %p90, %p91
    %p93 = scmp.ne.s32.totalorder %s82, %s83
    %p94 = scmp.eq.s32.totalorder %s13, 0
    %p95 = por %p93, %p94
    %p96 = scmp.ne.s32.totalorder %s82, %s83
    %p97 = scmp.eq.s32.totalorder %s14, 3
    %p98 = por %p96, %p97
    %p100 = scmp.ne.s32.totalorder %s83, %s99
    %p101 = scmp.eq.s32.totalorder %s14, 0
    %p102 = por %p100, %p101
    %p103 = scmp.le.s32.totalorder 1, %s8
    %p104 = scmp.lt.s32.totalorder %s8, 5
    %p105 = pnand %p103, %p104
    %p106 = pneg %p105
    // Predicated region
    $region9: #{conv2d_cond_bn_relu.2} parent=5 // pred_check
      _
    $region10: #{conv2d_cond_bn_relu.2} parent=5 // pred_check_branch
      %108 = sbr.rel (%p105) target = $region12
    $region11: #{conv2d_cond_bn_relu.2} parent=5 // pred_region
      %s109 = ssub.s32 %s8, 1
      // Predicated region
      $region13: #{conv2d_cond_bn_relu.2} parent=11 // pred_check
        %p110 = pneg %p67
      $region14: #{conv2d_cond_bn_relu.2} parent=11 // pred_check_branch
        %112 = sbr.rel (%p110) target = $region16
      $region15: #{conv2d_cond_bn_relu.2} parent=11 // pred_region
        _
      $region16: #{conv2d_cond_bn_relu.2} parent=11 // pred_fallthru
        _
    $region12: #{conv2d_cond_bn_relu.2} parent=5 // pred_fallthru
      _
    %p113 = scmp.lt.s32.totalorder %s8, 4
    // Predicated region
    $region17: #{conv2d_cond_bn_relu.2} parent=5 // pred_check
      %p114 = pneg %p113
    $region18: #{conv2d_cond_bn_relu.2} parent=5 // pred_check_branch
      %116 = sbr.rel (%p114) target = $region20
    $region19: #{conv2d_cond_bn_relu.2} parent=5 // pred_region
      // Predicated region
      $region21: #{conv2d_cond_bn_relu.2} parent=19 // pred_check
        %p117 = pneg %p40
      $region22: #{conv2d_cond_bn_relu.2} parent=19 // pred_check_branch
        %119 = sbr.rel (%p117) target = $region24
      $region23: #{conv2d_cond_bn_relu.2} parent=19 // pred_region
        %p120 = scmp.lt.s32.totalorder %s15, 1
        %s121 = scalar_select %p120, %s15, 1
        %s122 = smul.addr %s121, 54
        %s123 = smul.addr %s122, 4
        %s124 = scalar_lea.vmem %s0, %s123
      $region24: #{conv2d_cond_bn_relu.2} parent=19 // pred_fallthru
        _
    $region20: #{conv2d_cond_bn_relu.2} parent=5 // pred_fallthru
      _
    %p125 = scmp.le.s32.totalorder 1, %s8
    %p126 = scmp.lt.s32.totalorder %s8, 5
    %p127 = pnand %p125, %p126
    %p128 = pneg %p127
    // Predicated region
    $region25: #{conv2d_cond_bn_relu.2} parent=5 // pred_check
      _
    $region26: #{conv2d_cond_bn_relu.2} parent=5 // pred_check_branch
      %130 = sbr.rel (%p127) target = $region28
    $region27: #{conv2d_cond_bn_relu.2} parent=5 // pred_region
      %s131 = ssub.s32 %s8, 1
      %p132 = scmp.lt.s32.totalorder %s17, 1
      %s133 = scalar_select %p132, %s17, 1
      %s134 = smul.addr %s133, 54
      %s135 = smul.addr %s134, 4
      %s136 = scalar_lea.vmem %s0, %s135
      %p137 = pneg %p46
      %p138 = pneg %p43
      %p139 = pneg %p67
      %p140 = pneg %p64
      %p141 = pneg %p95
      %p142 = pneg %p92
      %p143 = scmp.lt.s32.totalorder %s17, 1
      %s144 = scalar_select %p143, %s17, 1
      %p145 = scmp.lt.s32.totalorder %s18, 1
      %s146 = scalar_select %p145, %s18, 1
      %s147 = smul.addr %s144, 2
      %s148 = sadd.s32 %s146, %s147
      %s149 = smul.addr %s148, 8
      %s150 = scalar_lea.vmem %s2, %s149
      %p151 = scmp.lt.s32.totalorder %s17, 1
      %s152 = scalar_select %p151, %s17, 1
      %s153 = smul.addr %s152, 54
      %s154 = smul.addr %s153, 4
      %s155 = scalar_lea.vmem %s0, %s154
      %p156 = scmp.lt.s32.totalorder %s17, 1
      %s157 = scalar_select %p156, %s17, 1
      %p158 = scmp.lt.s32.totalorder %s18, 1
      %s159 = scalar_select %p158, %s18, 1
      %s160 = smul.addr %s157, 2
      %s161 = sadd.s32 %s159, %s160
      %s162 = smul.addr %s161, 8
      %s163 = scalar_lea.vmem %s2, %s162
      %s165 = smul.u32 %s18, 8
      %s166 = smul.u32 %s165, 3
      %s167 = smul.addr %s166, 4
      %s168 = scalar_lea.vmem %s155, %s167
      %v169 = vld [vmem:[%s168] sm:$0xf]
      %v170 = vld [vmem:[%s168 + $0x4] sm:$0xf]
      %v171 = vld [vmem:[%s168 + $0x8] sm:$0x1]
      %v172 = vld [vmem:[%s168 + $0xc] sm:$0xf]
      %v173 = vld [vmem:[%s168 + $0x10] sm:$0xf]
      %v174 = vld [vmem:[%s168 + $0x14] sm:$0x1]
      %v175 = vld [vmem:[%s168 + $0x18] sm:$0xf]
      %v176 = vld [vmem:[%s168 + $0x1c] sm:$0xf]
      %v177 = vld [vmem:[%s168 + $0x20] sm:$0x1]
      %v178 = vld [vmem:[%s168 + $0x24] sm:$0xf]
      %v179 = vld [vmem:[%s168 + $0x28] sm:$0xf]
      %v180 = vld [vmem:[%s168 + $0x2c] sm:$0x1]
      %v181 = vld [vmem:[%s168 + $0x30] sm:$0xf]
      %v182 = vld [vmem:[%s168 + $0x34] sm:$0xf]
      %v183 = vld [vmem:[%s168 + $0x38] sm:$0x1]
      %v184 = vld [vmem:[%s168 + $0x3c] sm:$0xf]
      %v185 = vld [vmem:[%s168 + $0x40] sm:$0xf]
      %v186 = vld [vmem:[%s168 + $0x44] sm:$0x1]
      %v187 = vld [vmem:[%s168 + $0x48] sm:$0xf]
      %v188 = vld [vmem:[%s168 + $0x4c] sm:$0xf]
      %v189 = vld [vmem:[%s168 + $0x50] sm:$0x1]
      %v190 = vld [vmem:[%s168 + $0x54] sm:$0xf]
      %v191 = vld [vmem:[%s168 + $0x58] sm:$0xf]
      %v192 = vld [vmem:[%s168 + $0x5c] sm:$0x1]
      %v193 = vld [vmem:[%s1] sm:$0xf]
      %vm194 = vsmask.f32 3328
      %vm195 = vsmask.f32 7440
      %vm196 = vmor %vm194, %vm195
      %v198 = vshrl.u32 %v169, 16
      %v200 = vrot.slane %v198, 4
      %v201 = vshll.u32 %v169, 16
      %v203 = vrot.slane %v201, 5
      %v204 = vor.u32 %v200, %v203
      %v205 = vrot.slane %v204, 4
      %v207 = vshll.u32 %v170, 16
      %v209 = vrot.slane %v207, 5
      %v210 = vsel %vm196, %v205, %v209
      %v211 = vshrl.u32 %v170, 16
      %v213 = vrot.slane %v211, 4
      %v214 = vor.u32 %v213, %v209
      %v215 = vrot.slane %v214, 4
      %v217 = vshll.u32 %v171, 16
      %v219 = vrot.slane %v217, 5
      %v220 = vsel %vm196, %v215, %v219
      %v222 = vshrl.u32 %v172, 16
      %v224 = vrot.slane %v222, 4
      %v225 = vshll.u32 %v172, 16
      %v227 = vrot.slane %v225, 5
      %v228 = vor.u32 %v224, %v227
      %v229 = vrot.slane %v228, 4
      %v231 = vshll.u32 %v173, 16
      %v233 = vrot.slane %v231, 5
      %v234 = vsel %vm196, %v229, %v233
      %v235 = vshrl.u32 %v173, 16
      %v237 = vrot.slane %v235, 4
      %v238 = vor.u32 %v237, %v233
      %v239 = vrot.slane %v238, 4
      %v241 = vshll.u32 %v174, 16
      %v243 = vrot.slane %v241, 5
      %v244 = vsel %vm196, %v239, %v243
      %v246 = vshrl.u32 %v175, 16
      %v248 = vrot.slane %v246, 4
      %v249 = vshll.u32 %v175, 16
      %v251 = vrot.slane %v249, 5
      %v252 = vor.u32 %v248, %v251
      %v253 = vrot.slane %v252, 4
      %v255 = vshll.u32 %v176, 16
      %v257 = vrot.slane %v255, 5
      %v258 = vsel %vm196, %v253, %v257
      %v259 = vshrl.u32 %v176, 16
      %v261 = vrot.slane %v259, 4
      %v262 = vor.u32 %v261, %v257
      %v263 = vrot.slane %v262, 4
      %v265 = vshll.u32 %v177, 16
      %v267 = vrot.slane %v265, 5
      %v268 = vsel %vm196, %v263, %v267
      %v270 = vshrl.u32 %v178, 16
      %v272 = vrot.slane %v270, 4
      %v273 = vshll.u32 %v178, 16
      %v275 = vrot.slane %v273, 5
      %v276 = vor.u32 %v272, %v275
      %v277 = vrot.slane %v276, 4
      %v279 = vshll.u32 %v179, 16
      %v281 = vrot.slane %v279, 5
      %v282 = vsel %vm196, %v277, %v281
      %v283 = vshrl.u32 %v179, 16
      %v285 = vrot.slane %v283, 4
      %v286 = vor.u32 %v285, %v281
      %v287 = vrot.slane %v286, 4
      %v289 = vshll.u32 %v180, 16
      %v291 = vrot.slane %v289, 5
      %v292 = vsel %vm196, %v287, %v291
      %v294 = vshrl.u32 %v181, 16
      %v296 = vrot.slane %v294, 4
      %v297 = vshll.u32 %v181, 16
      %v299 = vrot.slane %v297, 5
      %v300 = vor.u32 %v296, %v299
      %v301 = vrot.slane %v300, 4
      %v303 = vshll.u32 %v182, 16
      %v305 = vrot.slane %v303, 5
      %v306 = vsel %vm196, %v301, %v305
      %v307 = vshrl.u32 %v182, 16
      %v309 = vrot.slane %v307, 4
      %v310 = vor.u32 %v309, %v305
      %v311 = vrot.slane %v310, 4
      %v313 = vshll.u32 %v183, 16
      %v315 = vrot.slane %v313, 5
      %v316 = vsel %vm196, %v311, %v315
      %v318 = vshrl.u32 %v184, 16
      %v320 = vrot.slane %v318, 4
      %v321 = vshll.u32 %v184, 16
      %v323 = vrot.slane %v321, 5
      %v324 = vor.u32 %v320, %v323
      %v325 = vrot.slane %v324, 4
      %v327 = vshll.u32 %v185, 16
      %v329 = vrot.slane %v327, 5
      %v330 = vsel %vm196, %v325, %v329
      %v331 = vshrl.u32 %v185, 16
      %v333 = vrot.slane %v331, 4
      %v334 = vor.u32 %v333, %v329
      %v335 = vrot.slane %v334, 4
      %v337 = vshll.u32 %v186, 16
      %v339 = vrot.slane %v337, 5
      %v340 = vsel %vm196, %v335, %v339
      %v342 = vshrl.u32 %v187, 16
      %v344 = vrot.slane %v342, 4
      %v345 = vshll.u32 %v187, 16
      %v347 = vrot.slane %v345, 5
      %v348 = vor.u32 %v344, %v347
      %v349 = vrot.slane %v348, 4
      %v351 = vshll.u32 %v188, 16
      %v353 = vrot.slane %v351, 5
      %v354 = vsel %vm196, %v349, %v353
      %v355 = vshrl.u32 %v188, 16
      %v357 = vrot.slane %v355, 4
      %v358 = vor.u32 %v357, %v353
      %v359 = vrot.slane %v358, 4
      %v361 = vshll.u32 %v189, 16
      %v363 = vrot.slane %v361, 5
      %v364 = vsel %vm196, %v359, %v363
      %v366 = vshrl.u32 %v190, 16
      %v368 = vrot.slane %v366, 4
      %v369 = vshll.u32 %v190, 16
      %v371 = vrot.slane %v369, 5
      %v372 = vor.u32 %v368, %v371
      %v373 = vrot.slane %v372, 4
      %v375 = vshll.u32 %v191, 16
      %v377 = vrot.slane %v375, 5
      %v378 = vsel %vm196, %v373, %v377
      %v379 = vshrl.u32 %v191, 16
      %v381 = vrot.slane %v379, 4
      %v382 = vor.u32 %v381, %v377
      %v383 = vrot.slane %v382, 4
      %v385 = vshll.u32 %v192, 16
      %v387 = vrot.slane %v385, 5
      %v388 = vsel %vm196, %v383, %v387
      %s389 = scalar_lea.vmem %s1, 4
      %v390 = vld [vmem:[%s389] sm:$0xf]
      %v391 = vunpack.c.l.b16 %v210
      %v392 = vunpack.c.l.b16 %v220
      %v393 = vunpack.c.l.b16 %v234
      %v394 = vunpack.c.l.b16 %v244
      %v395 = vunpack.c.l.b16 %v258
      %v396 = vunpack.c.l.b16 %v268
      %v397 = vunpack.c.l.b16 %v282
      %v398 = vunpack.c.l.b16 %v292
      %v399 = vunpack.c.l.b16 %v306
      %v400 = vunpack.c.l.b16 %v316
      %v401 = vunpack.c.l.b16 %v330
      %v402 = vunpack.c.l.b16 %v340
      %v403 = vunpack.c.l.b16 %v354
      %v404 = vunpack.c.l.b16 %v364
      %v405 = vunpack.c.l.b16 %v378
      %v406 = vunpack.c.l.b16 %v388
      %v407 = vpack.c.b16 %v392, %v391
      %v408 = vpack.c.b16 %v394, %v393
      %v409 = vpack.c.b16 %v396, %v395
      %v410 = vpack.c.b16 %v398, %v397
      %v411 = vpack.c.b16 %v400, %v399
      %v412 = vpack.c.b16 %v402, %v401
      %v413 = vpack.c.b16 %v404, %v403
      %v414 = vpack.c.b16 %v406, %v405
      %vm415 = vcmask 64512
      %v417 = vsel %vm415, %v407, 0
      %v420 = vsel %vm415, %v408, 0
      %v423 = vsel %vm415, %v409, 0
      %v426 = vsel %vm415, %v410, 0
      %v429 = vsel %vm415, %v411, 0
      %v432 = vsel %vm415, %v412, 0
      %v435 = vsel %vm415, %v413, 0
      %v438 = vsel %vm415, %v414, 0
      %vm440 = vcmask 1043456
      %v442 = vsel %vm440, %v390, 0
      %444 = vmatprep.subr.bf16.mxu0 0
      %445 = vmatpush1.bf16.msra.mxu0 %v442
      %446 = vmatprep.subr.bf16.mxu0 0
      %447 = vmatpush1.bf16.msra.mxu0 0
      %448 = vmatprep.subr.bf16.mxu0 0
      %449 = vmatpush1.bf16.msra.mxu0 0
      %450 = vmatprep.subr.bf16.mxu0 0
      %451 = vmatpush1.bf16.msra.mxu0 0
      %452 = vmatprep.subr.bf16.mxu0 0
      %453 = vmatpush1.bf16.msra.mxu0 0
      %454 = vmatprep.subr.bf16.mxu0 0
      %455 = vmatpush1.bf16.msra.mxu0 0
      %456 = vmatprep.subr.bf16.mxu0 0
      %457 = vmatpush1.bf16.msra.mxu0 0
      %458 = vmatprep.subr.bf16.mxu0 0
      %459 = vmatpush1.bf16.msra.mxu0 0
      %460 = vmatprep.subr.bf16.mxu0 0
      %461 = vmatpush1.bf16.msra.mxu0 0
      %462 = vmatprep.subr.bf16.mxu0 0
      %463 = vmatpush1.bf16.msra.mxu0 0
      %464 = vmatprep.subr.bf16.mxu0 0
      %465 = vmatpush1.bf16.msra.mxu0 0
      %466 = vmatprep.subr.bf16.mxu0 0
      %467 = vmatpush1.bf16.msra.mxu0 0
      %468 = vmatprep.subr.bf16.mxu0 0
      %469 = vmatpush1.bf16.msra.mxu0 0
      %470 = vmatprep.subr.bf16.mxu0 0
      %471 = vmatpush1.bf16.msra.mxu0 0
      %472 = vmatprep.subr.bf16.mxu0 0
      %473 = vmatpush1.bf16.msra.mxu0 0
      %474 = vmatprep.subr.bf16.mxu0 0
      %475 = vmatpush1.bf16.msra.mxu0 0
      %476 = vmatprep.mubr.bf16.mxu0 0
      %477 = vmatmul.mubr.bf16.gmra.mrb[0].mxu0 %v417
      %v478 = vpop.f32.mrb[0].mxu0
      %v479 = vadd.f32 0.0, %v478
      %v480 = vpop.f32.mrb[0].mxu0
      %v481 = vpop.f32.mrb[0].mxu0
      %v482 = vadd.f32 0.0, %v481
      %v483 = vpop.f32.mrb[0].mxu0
      %484 = vmatprep.mubr.bf16.mxu0 0
      %485 = vmatmul.mubr.bf16.gmra.mrb[0].mxu0 %v420
      %v486 = vpop.f32.mrb[0].mxu0
      %v487 = vadd.f32 0.0, %v486
      %v488 = vpop.f32.mrb[0].mxu0
      %v489 = vpop.f32.mrb[0].mxu0
      %v490 = vadd.f32 0.0, %v489
      %v491 = vpop.f32.mrb[0].mxu0
      %492 = vmatprep.mubr.bf16.mxu0 0
      %493 = vmatmul.mubr.bf16.gmra.mrb[0].mxu0 %v423
      %v494 = vpop.f32.mrb[0].mxu0
      %v495 = vadd.f32 0.0, %v494
      %v496 = vpop.f32.mrb[0].mxu0
      %v497 = vpop.f32.mrb[0].mxu0
      %v498 = vadd.f32 0.0, %v497
      %v499 = vpop.f32.mrb[0].mxu0
      %500 = vmatprep.mubr.bf16.mxu0 0
      %501 = vmatmul.mubr.bf16.gmra.mrb[0].mxu0 %v426
      %v502 = vpop.f32.mrb[0].mxu0
      %v503 = vadd.f32 0.0, %v502
      %v504 = vpop.f32.mrb[0].mxu0
      %v505 = vpop.f32.mrb[0].mxu0
      %v506 = vadd.f32 0.0, %v505
      %v507 = vpop.f32.mrb[0].mxu0
      %508 = vmatprep.mubr.bf16.mxu0 0
      %509 = vmatmul.mubr.bf16.gmra.mrb[0].mxu0 %v429
      %v510 = vpop.f32.mrb[0].mxu0
      %v511 = vadd.f32 0.0, %v510
      %v512 = vpop.f32.mrb[0].mxu0
      %v513 = vpop.f32.mrb[0].mxu0
      %v514 = vadd.f32 0.0, %v513
      %v515 = vpop.f32.mrb[0].mxu0
      %516 = vmatprep.mubr.bf16.mxu0 0
      %517 = vmatmul.mubr.bf16.gmra.mrb[0].mxu0 %v432
      %v518 = vpop.f32.mrb[0].mxu0
      %v519 = vadd.f32 0.0, %v518
      %v520 = vpop.f32.mrb[0].mxu0
      %v521 = vpop.f32.mrb[0].mxu0
      %v522 = vadd.f32 0.0, %v521
      %v523 = vpop.f32.mrb[0].mxu0
      %524 = vmatprep.mubr.bf16.mxu0 0
      %525 = vmatmul.mubr.bf16.gmra.mrb[0].mxu0 %v435
      %v526 = vpop.f32.mrb[0].mxu0
      %v527 = vadd.f32 0.0, %v526
      %v528 = vpop.f32.mrb[0].mxu0
      %v529 = vpop.f32.mrb[0].mxu0
      %v530 = vadd.f32 0.0, %v529
      %v531 = vpop.f32.mrb[0].mxu0
      %532 = vmatprep.mubr.bf16.mxu0 0
      %533 = vmatmul.mubr.bf16.gmra.mrb[0].mxu0 %v438
      %v534 = vpop.f32.mrb[0].mxu0
      %v535 = vadd.f32 0.0, %v534
      %v536 = vpop.f32.mrb[0].mxu0
      %v537 = vpop.f32.mrb[0].mxu0
      %v538 = vadd.f32 0.0, %v537
      %v539 = vpop.f32.mrb[0].mxu0
      %540 = vdwg.mxu0
      %v557 = vunpack.c.l.b16 %v169
      %v558 = vunpack.c.l.b16 %v170
      %v559 = vunpack.c.l.b16 %v172
      %v560 = vunpack.c.l.b16 %v173
      %v561 = vunpack.c.l.b16 %v175
      %v562 = vunpack.c.l.b16 %v176
      %v563 = vunpack.c.l.b16 %v178
      %v564 = vunpack.c.l.b16 %v179
      %v565 = vunpack.c.l.b16 %v181
      %v566 = vunpack.c.l.b16 %v182
      %v567 = vunpack.c.l.b16 %v184
      %v568 = vunpack.c.l.b16 %v185
      %v569 = vunpack.c.l.b16 %v187
      %v570 = vunpack.c.l.b16 %v188
      %v571 = vunpack.c.l.b16 %v190
      %v572 = vunpack.c.l.b16 %v191
      %v573 = vpack.c.b16 %v558, %v557
      %v574 = vpack.c.b16 %v560, %v559
      %v575 = vpack.c.b16 %v562, %v561
      %v576 = vpack.c.b16 %v564, %v563
      %v577 = vpack.c.b16 %v566, %v565
      %v578 = vpack.c.b16 %v568, %v567
      %v579 = vpack.c.b16 %v570, %v569
      %v580 = vpack.c.b16 %v572, %v571
      %v582 = vsel %vm415, %v573, 0
      %v585 = vsel %vm415, %v574, 0
      %v588 = vsel %vm415, %v575, 0
      %v591 = vsel %vm415, %v576, 0
      %v594 = vsel %vm415, %v577, 0
      %v597 = vsel %vm415, %v578, 0
      %v600 = vsel %vm415, %v579, 0
      %v603 = vsel %vm415, %v580, 0
      %v606 = vsel %vm440, %v193, 0
      %608 = vmatprep.subr.bf16.mxu0 0
      %609 = vmatpush1.bf16.msra.mxu0 %v606
      %610 = vmatprep.subr.bf16.mxu0 0
      %611 = vmatpush1.bf16.msra.mxu0 0
      %612 = vmatprep.subr.bf16.mxu0 0
      %613 = vmatpush1.bf16.msra.mxu0 0
      %614 = vmatprep.subr.bf16.mxu0 0
      %615 = vmatpush1.bf16.msra.mxu0 0
      %616 = vmatprep.subr.bf16.mxu0 0
      %617 = vmatpush1.bf16.msra.mxu0 0
      %618 = vmatprep.subr.bf16.mxu0 0
      %619 = vmatpush1.bf16.msra.mxu0 0
      %620 = vmatprep.subr.bf16.mxu0 0
      %621 = vmatpush1.bf16.msra.mxu0 0
      %622 = vmatprep.subr.bf16.mxu0 0
      %623 = vmatpush1.bf16.msra.mxu0 0
      %624 = vmatprep.subr.bf16.mxu0 0
      %625 = vmatpush1.bf16.msra.mxu0 0
      %626 = vmatprep.subr.bf16.mxu0 0
      %627 = vmatpush1.bf16.msra.mxu0 0
      %628 = vmatprep.subr.bf16.mxu0 0
      %629 = vmatpush1.bf16.msra.mxu0 0
      %630 = vmatprep.subr.bf16.mxu0 0
      %631 = vmatpush1.bf16.msra.mxu0 0
      %632 = vmatprep.subr.bf16.mxu0 0
      %633 = vmatpush1.bf16.msra.mxu0 0
      %634 = vmatprep.subr.bf16.mxu0 0
      %635 = vmatpush1.bf16.msra.mxu0 0
      %636 = vmatprep.subr.bf16.mxu0 0
      %637 = vmatpush1.bf16.msra.mxu0 0
      %638 = vmatprep.subr.bf16.mxu0 0
      %639 = vmatpush1.bf16.msra.mxu0 0
      %640 = vmatprep.mubr.bf16.mxu0 0
      %641 = vmatmul.mubr.bf16.gmra.mrb[0].mxu0 %v582
      %v642 = vpop.f32.mrb[0].mxu0
      %v643 = vadd.f32 %v479, %v642
      %v644 = vpop.f32.mrb[0].mxu0
      %v645 = vpop.f32.mrb[0].mxu0
      %v646 = vadd.f32 %v482, %v645
      %v647 = vpop.f32.mrb[0].mxu0
      %648 = vmatprep.mubr.bf16.mxu0 0
      %649 = vmatmul.mubr.bf16.gmra.mrb[0].mxu0 %v585
      %v650 = vpop.f32.mrb[0].mxu0
      %v651 = vadd.f32 %v487, %v650
      %v652 = vpop.f32.mrb[0].mxu0
      %v653 = vpop.f32.mrb[0].mxu0
      %v654 = vadd.f32 %v490, %v653
      %v655 = vpop.f32.mrb[0].mxu0
      %656 = vmatprep.mubr.bf16.mxu0 0
      %657 = vmatmul.mubr.bf16.gmra.mrb[0].mxu0 %v588
      %v658 = vpop.f32.mrb[0].mxu0
      %v659 = vadd.f32 %v495, %v658
      %v660 = vpop.f32.mrb[0].mxu0
      %v661 = vpop.f32.mrb[0].mxu0
      %v662 = vadd.f32 %v498, %v661
      %v663 = vpop.f32.mrb[0].mxu0
      %664 = vmatprep.mubr.bf16.mxu0 0
      %665 = vmatmul.mubr.bf16.gmra.mrb[0].mxu0 %v591
      %v666 = vpop.f32.mrb[0].mxu0
      %v667 = vadd.f32 %v503, %v666
      %v668 = vpop.f32.mrb[0].mxu0
      %v669 = vpop.f32.mrb[0].mxu0
      %v670 = vadd.f32 %v506, %v669
      %v671 = vpop.f32.mrb[0].mxu0
      %672 = vmatprep.mubr.bf16.mxu0 0
      %673 = vmatmul.mubr.bf16.gmra.mrb[0].mxu0 %v594
      %v674 = vpop.f32.mrb[0].mxu0
      %v675 = vadd.f32 %v511, %v674
      %v676 = vpop.f32.mrb[0].mxu0
      %v677 = vpop.f32.mrb[0].mxu0
      %v678 = vadd.f32 %v514, %v677
      %v679 = vpop.f32.mrb[0].mxu0
      %680 = vmatprep.mubr.bf16.mxu0 0
      %681 = vmatmul.mubr.bf16.gmra.mrb[0].mxu0 %v597
      %v682 = vpop.f32.mrb[0].mxu0
      %v683 = vadd.f32 %v519, %v682
      %v684 = vpop.f32.mrb[0].mxu0
      %v685 = vpop.f32.mrb[0].mxu0
      %v686 = vadd.f32 %v522, %v685
      %v687 = vpop.f32.mrb[0].mxu0
      %688 = vmatprep.mubr.bf16.mxu0 0
      %689 = vmatmul.mubr.bf16.gmra.mrb[0].mxu0 %v600
      %v690 = vpop.f32.mrb[0].mxu0
      %v691 = vadd.f32 %v527, %v690
      %v692 = vpop.f32.mrb[0].mxu0
      %v693 = vpop.f32.mrb[0].mxu0
      %v694 = vadd.f32 %v530, %v693
      %v695 = vpop.f32.mrb[0].mxu0
      %696 = vmatprep.mubr.bf16.mxu0 0
      %697 = vmatmul.mubr.bf16.gmra.mrb[0].mxu0 %v603
      %v698 = vpop.f32.mrb[0].mxu0
      %v699 = vadd.f32 %v535, %v698
      %v700 = vpop.f32.mrb[0].mxu0
      %v701 = vpop.f32.mrb[0].mxu0
      %v702 = vadd.f32 %v538, %v701
      %v703 = vpop.f32.mrb[0].mxu0
      %704 = vdwg.mxu0
      %vm713 = vcmask 1042432
      %vm714 = vcmask 1046532
      %vm715 = vmor %vm713, %vm714
      %v716 = vrot.slane %v169, 5
      %v717 = vrot.slane %v716, 4
      %v718 = vrot.slane %v170, 5
      %v719 = vsel %vm715, %v717, %v718
      %v720 = vrot.slane %v718, 4
      %v721 = vrot.slane %v171, 5
      %v722 = vsel %vm715, %v720, %v721
      %v723 = vrot.slane %v172, 5
      %v724 = vrot.slane %v723, 4
      %v725 = vrot.slane %v173, 5
      %v726 = vsel %vm715, %v724, %v725
      %v727 = vrot.slane %v725, 4
      %v728 = vrot.slane %v174, 5
      %v729 = vsel %vm715, %v727, %v728
      %v730 = vrot.slane %v175, 5
      %v731 = vrot.slane %v730, 4
      %v732 = vrot.slane %v176, 5
      %v733 = vsel %vm715, %v731, %v732
      %v734 = vrot.slane %v732, 4
      %v735 = vrot.slane %v177, 5
      %v736 = vsel %vm715, %v734, %v735
      %v737 = vrot.slane %v178, 5
      %v738 = vrot.slane %v737, 4
      %v739 = vrot.slane %v179, 5
      %v740 = vsel %vm715, %v738, %v739
      %v741 = vrot.slane %v739, 4
      %v742 = vrot.slane %v180, 5
      %v743 = vsel %vm715, %v741, %v742
      %v744 = vrot.slane %v181, 5
      %v745 = vrot.slane %v744, 4
      %v746 = vrot.slane %v182, 5
      %v747 = vsel %vm715, %v745, %v746
      %v748 = vrot.slane %v746, 4
      %v749 = vrot.slane %v183, 5
      %v750 = vsel %vm715, %v748, %v749
      %v751 = vrot.slane %v184, 5
      %v752 = vrot.slane %v751, 4
      %v753 = vrot.slane %v185, 5
      %v754 = vsel %vm715, %v752, %v753
      %v755 = vrot.slane %v753, 4
      %v756 = vrot.slane %v186, 5
      %v757 = vsel %vm715, %v755, %v756
      %v758 = vrot.slane %v187, 5
      %v759 = vrot.slane %v758, 4
      %v760 = vrot.slane %v188, 5
      %v761 = vsel %vm715, %v759, %v760
      %v762 = vrot.slane %v760, 4
      %v763 = vrot.slane %v189, 5
      %v764 = vsel %vm715, %v762, %v763
      %v765 = vrot.slane %v190, 5
      %v766 = vrot.slane %v765, 4
      %v767 = vrot.slane %v191, 5
      %v768 = vsel %vm715, %v766, %v767
      %v769 = vrot.slane %v767, 4
      %v770 = vrot.slane %v192, 5
      %v771 = vsel %vm715, %v769, %v770
      %s772 = scalar_lea.vmem %s1, 8
      %v773 = vld [vmem:[%s772] sm:$0xf]
      %v774 = vunpack.c.l.b16 %v719
      %v775 = vunpack.c.l.b16 %v722
      %v776 = vunpack.c.l.b16 %v726
      %v777 = vunpack.c.l.b16 %v729
      %v778 = vunpack.c.l.b16 %v733
      %v779 = vunpack.c.l.b16 %v736
      %v780 = vunpack.c.l.b16 %v740
      %v781 = vunpack.c.l.b16 %v743
      %v782 = vunpack.c.l.b16 %v747
      %v783 = vunpack.c.l.b16 %v750
      %v784 = vunpack.c.l.b16 %v754
      %v785 = vunpack.c.l.b16 %v757
      %v786 = vunpack.c.l.b16 %v761
      %v787 = vunpack.c.l.b16 %v764
      %v788 = vunpack.c.l.b16 %v768
      %v789 = vunpack.c.l.b16 %v771
      %v790 = vpack.c.b16 %v775, %v774
      %v791 = vpack.c.b16 %v777, %v776
      %v792 = vpack.c.b16 %v779, %v778
      %v793 = vpack.c.b16 %v781, %v780
      %v794 = vpack.c.b16 %v783, %v782
      %v795 = vpack.c.b16 %v785, %v784
      %v796 = vpack.c.b16 %v787, %v786
      %v797 = vpack.c.b16 %v789, %v788
      %v799 = vsel %vm415, %v790, 0
      %v802 = vsel %vm415, %v791, 0
      %v805 = vsel %vm415, %v792, 0
      %v808 = vsel %vm415, %v793, 0
      %v811 = vsel %vm415, %v794, 0
      %v814 = vsel %vm415, %v795, 0
      %v817 = vsel %vm415, %v796, 0
      %v820 = vsel %vm415, %v797, 0
      %v823 = vsel %vm440, %v773, 0
      %825 = vmatprep.subr.bf16.mxu0 0
      %826 = vmatpush1.bf16.msra.mxu0 %v823
      %827 = vmatprep.subr.bf16.mxu0 0
      %828 = vmatpush1.bf16.msra.mxu0 0
      %829 = vmatprep.subr.bf16.mxu0 0
      %830 = vmatpush1.bf16.msra.mxu0 0
      %831 = vmatprep.subr.bf16.mxu0 0
      %832 = vmatpush1.bf16.msra.mxu0 0
      %833 = vmatprep.subr.bf16.mxu0 0
      %834 = vmatpush1.bf16.msra.mxu0 0
      %835 = vmatprep.subr.bf16.mxu0 0
      %836 = vmatpush1.bf16.msra.mxu0 0
      %837 = vmatprep.subr.bf16.mxu0 0
      %838 = vmatpush1.bf16.msra.mxu0 0
      %839 = vmatprep.subr.bf16.mxu0 0
      %840 = vmatpush1.bf16.msra.mxu0 0
      %841 = vmatprep.subr.bf16.mxu0 0
      %842 = vmatpush1.bf16.msra.mxu0 0
      %843 = vmatprep.subr.bf16.mxu0 0
      %844 = vmatpush1.bf16.msra.mxu0 0
      %845 = vmatprep.subr.bf16.mxu0 0
      %846 = vmatpush1.bf16.msra.mxu0 0
      %847 = vmatprep.subr.bf16.mxu0 0
      %848 = vmatpush1.bf16.msra.mxu0 0
      %849 = vmatprep.subr.bf16.mxu0 0
      %850 = vmatpush1.bf16.msra.mxu0 0
      %851 = vmatprep.subr.bf16.mxu0 0
      %852 = vmatpush1.bf16.msra.mxu0 0
      %853 = vmatprep.subr.bf16.mxu0 0
      %854 = vmatpush1.bf16.msra.mxu0 0
      %855 = vmatprep.subr.bf16.mxu0 0
      %856 = vmatpush1.bf16.msra.mxu0 0
      %857 = vmatprep.mubr.bf16.mxu0 0
      %858 = vmatmul.mubr.bf16.gmra.mrb[0].mxu0 %v799
      %v859 = vpop.f32.mrb[0].mxu0
      %v860 = vadd.f32 0.0, %v859
      %v861 = vpop.f32.mrb[0].mxu0
      %v862 = vpop.f32.mrb[0].mxu0
      %v863 = vadd.f32 0.0, %v862
      %v864 = vpop.f32.mrb[0].mxu0
      %865 = vmatprep.mubr.bf16.mxu0 0
      %866 = vmatmul.mubr.bf16.gmra.mrb[0].mxu0 %v802
      %v867 = vpop.f32.mrb[0].mxu0
      %v868 = vadd.f32 0.0, %v867
      %v869 = vpop.f32.mrb[0].mxu0
      %v870 = vpop.f32.mrb[0].mxu0
      %v871 = vadd.f32 0.0, %v870
      %v872 = vpop.f32.mrb[0].mxu0
      %873 = vmatprep.mubr.bf16.mxu0 0
      %874 = vmatmul.mubr.bf16.gmra.mrb[0].mxu0 %v805
      %v875 = vpop.f32.mrb[0].mxu0
      %v876 = vadd.f32 0.0, %v875
      %v877 = vpop.f32.mrb[0].mxu0
      %v878 = vpop.f32.mrb[0].mxu0
      %v879 = vadd.f32 0.0, %v878
      %v880 = vpop.f32.mrb[0].mxu0
      %881 = vmatprep.mubr.bf16.mxu0 0
      %882 = vmatmul.mubr.bf16.gmra.mrb[0].mxu0 %v808
      %v883 = vpop.f32.mrb[0].mxu0
      %v884 = vadd.f32 0.0, %v883
      %v885 = vpop.f32.mrb[0].mxu0
      %v886 = vpop.f32.mrb[0].mxu0
      %v887 = vadd.f32 0.0, %v886
      %v888 = vpop.f32.mrb[0].mxu0
      %889 = vmatprep.mubr.bf16.mxu0 0
      %890 = vmatmul.mubr.bf16.gmra.mrb[0].mxu0 %v811
      %v891 = vpop.f32.mrb[0].mxu0
      %v892 = vadd.f32 0.0, %v891
      %v893 = vpop.f32.mrb[0].mxu0
      %v894 = vpop.f32.mrb[0].mxu0
      %v895 = vadd.f32 0.0, %v894
      %v896 = vpop.f32.mrb[0].mxu0
      %897 = vmatprep.mubr.bf16.mxu0 0
      %898 = vmatmul.mubr.bf16.gmra.mrb[0].mxu0 %v814
      %v899 = vpop.f32.mrb[0].mxu0
      %v900 = vadd.f32 0.0, %v899
      %v901 = vpop.f32.mrb[0].mxu0
      %v902 = vpop.f32.mrb[0].mxu0
      %v903 = vadd.f32 0.0, %v902
      %v904 = vpop.f32.mrb[0].mxu0
      %905 = vmatprep.mubr.bf16.mxu0 0
      %906 = vmatmul.mubr.bf16.gmra.mrb[0].mxu0 %v817
      %v907 = vpop.f32.mrb[0].mxu0
      %v908 = vadd.f32 0.0, %v907
      %v909 = vpop.f32.mrb[0].mxu0
      %v910 = vpop.f32.mrb[0].mxu0
      %v911 = vadd.f32 0.0, %v910
      %v912 = vpop.f32.mrb[0].mxu0
      %913 = vmatprep.mubr.bf16.mxu0 0
      %914 = vmatmul.mubr.bf16.gmra.mrb[0].mxu0 %v820
      %v915 = vpop.f32.mrb[0].mxu0
      %v916 = vadd.f32 0.0, %v915
      %v917 = vpop.f32.mrb[0].mxu0
      %v918 = vpop.f32.mrb[0].mxu0
      %v919 = vadd.f32 0.0, %v918
      %v920 = vpop.f32.mrb[0].mxu0
      %921 = vdwg.mxu0
      %v922 = vadd.f32 %v643, %v860
      %v923 = vadd.f32 %v646, %v863
      %v924 = vadd.f32 %v651, %v868
      %v925 = vadd.f32 %v654, %v871
      %v926 = vadd.f32 %v659, %v876
      %v927 = vadd.f32 %v662, %v879
      %v928 = vadd.f32 %v667, %v884
      %v929 = vadd.f32 %v670, %v887
      %v930 = vadd.f32 %v675, %v892
      %v931 = vadd.f32 %v678, %v895
      %v932 = vadd.f32 %v683, %v900
      %v933 = vadd.f32 %v686, %v903
      %v934 = vadd.f32 %v691, %v908
      %v935 = vadd.f32 %v694, %v911
      %v936 = vadd.f32 %v699, %v916
      %v937 = vadd.f32 %v702, %v919
      %s938 = sadd.s32 %s165, 1
      %s939 = smul.u32 %s938, 3
      %s940 = smul.addr %s939, 4
      %s941 = scalar_lea.vmem %s155, %s940
      %v942 = vld [vmem:[%s941] sm:$0xf]
      %v943 = vld [vmem:[%s941 + $0x4] sm:$0xf]
      %v944 = vld [vmem:[%s941 + $0x8] sm:$0x1]
      %v945 = vld [vmem:[%s941 + $0xc] sm:$0xf]
      %v946 = vld [vmem:[%s941 + $0x10] sm:$0xf]
      %v947 = vld [vmem:[%s941 + $0x14] sm:$0x1]
      %v948 = vld [vmem:[%s941 + $0x18] sm:$0xf]
      %v949 = vld [vmem:[%s941 + $0x1c] sm:$0xf]
      %v950 = vld [vmem:[%s941 + $0x20] sm:$0x1]
      %v951 = vld [vmem:[%s941 + $0x24] sm:$0xf]
      %v952 = vld [vmem:[%s941 + $0x28] sm:$0xf]
      %v953 = vld [vmem:[%s941 + $0x2c] sm:$0x1]
      %v954 = vld [vmem:[%s941 + $0x30] sm:$0xf]
      %v955 = vld [vmem:[%s941 + $0x34] sm:$0xf]
      %v956 = vld [vmem:[%s941 + $0x38] sm:$0x1]
      %v957 = vld [vmem:[%s941 + $0x3c] sm:$0xf]
      %v958 = vld [vmem:[%s941 + $0x40] sm:$0xf]
      %v959 = vld [vmem:[%s941 + $0x44] sm:$0x1]
      %v960 = vld [vmem:[%s941 + $0x48] sm:$0xf]
      %v961 = vld [vmem:[%s941 + $0x4c] sm:$0xf]
      %v962 = vld [vmem:[%s941 + $0x50] sm:$0x1]
      %v963 = vld [vmem:[%s941 + $0x54] sm:$0xf]
      %v964 = vld [vmem:[%s941 + $0x58] sm:$0xf]
      %v965 = vld [vmem:[%s941 + $0x5c] sm:$0x1]
      %s966 = scalar_lea.vmem %s1, 12
      %v967 = vld [vmem:[%s966] sm:$0xf]
      %v984 = vunpack.c.l.b16 %v942
      %v985 = vunpack.c.l.b16 %v943
      %v986 = vunpack.c.l.b16 %v945
      %v987 = vunpack.c.l.b16 %v946
      %v988 = vunpack.c.l.b16 %v948
      %v989 = vunpack.c.l.b16 %v949
      %v990 = vunpack.c.l.b16 %v951
      %v991 = vunpack.c.l.b16 %v952
      %v992 = vunpack.c.l.b16 %v954
      %v993 = vunpack.c.l.b16 %v955
      %v994 = vunpack.c.l.b16 %v957
      %v995 = vunpack.c.l.b16 %v958
      %v996 = vunpack.c.l.b16 %v960
      %v997 = vunpack.c.l.b16 %v961
      %v998 = vunpack.c.l.b16 %v963
      %v999 = vunpack.c.l.b16 %v964
      %v1000 = vpack.c.b16 %v985, %v984
      %v1001 = vpack.c.b16 %v987, %v986
      %v1002 = vpack.c.b16 %v989, %v988
      %v1003 = vpack.c.b16 %v991, %v990
      %v1004 = vpack.c.b16 %v993, %v992
      %v1005 = vpack.c.b16 %v995, %v994
      %v1006 = vpack.c.b16 %v997, %v996
      %v1007 = vpack.c.b16 %v999, %v998
      %v1009 = vsel %vm415, %v1000, 0
      %v1012 = vsel %vm415, %v1001, 0
      %v1015 = vsel %vm415, %v1002, 0
      %v1018 = vsel %vm415, %v1003, 0
      %v1021 = vsel %vm415, %v1004, 0
      %v1024 = vsel %vm415, %v1005, 0
      %v1027 = vsel %vm415, %v1006, 0
      %v1030 = vsel %vm415, %v1007, 0
      %v1033 = vsel %vm440, %v967, 0
      %1035 = vmatprep.subr.bf16.mxu0 0
      %1036 = vmatpush1.bf16.msra.mxu0 %v1033
      %1037 = vmatprep.subr.bf16.mxu0 0
      %1038 = vmatpush1.bf16.msra.mxu0 0
      %1039 = vmatprep.subr.bf16.mxu0 0
      %1040 = vmatpush1.bf16.msra.mxu0 0
      %1041 = vmatprep.subr.bf16.mxu0 0
      %1042 = vmatpush1.bf16.msra.mxu0 0
      %1043 = vmatprep.subr.bf16.mxu0 0
      %1044 = vmatpush1.bf16.msra.mxu0 0
      %1045 = vmatprep.subr.bf16.mxu0 0
      %1046 = vmatpush1.bf16.msra.mxu0 0
      %1047 = vmatprep.subr.bf16.mxu0 0
      %1048 = vmatpush1.bf16.msra.mxu0 0
      %1049 = vmatprep.subr.bf16.mxu0 0
      %1050 = vmatpush1.bf16.msra.mxu0 0
      %1051 = vmatprep.subr.bf16.mxu0 0
      %1052 = vmatpush1.bf16.msra.mxu0 0
      %1053 = vmatprep.subr.bf16.mxu0 0
      %1054 = vmatpush1.bf16.msra.mxu0 0
      %1055 = vmatprep.subr.bf16.mxu0 0
      %1056 = vmatpush1.bf16.msra.mxu0 0
      %1057 = vmatprep.subr.bf16.mxu0 0
      %1058 = vmatpush1.bf16.msra.mxu0 0
      %1059 = vmatprep.subr.bf16.mxu0 0
      %1060 = vmatpush1.bf16.msra.mxu0 0
      %1061 = vmatprep.subr.bf16.mxu0 0
      %1062 = vmatpush1.bf16.msra.mxu0 0
      %1063 = vmatprep.subr.bf16.mxu0 0
      %1064 = vmatpush1.bf16.msra.mxu0 0
      %1065 = vmatprep.subr.bf16.mxu0 0
      %1066 = vmatpush1.bf16.msra.mxu0 0
      %1067 = vmatprep.mubr.bf16.mxu0 0
      %1068 = vmatmul.mubr.bf16.gmra.mrb[0].mxu0 %v1009
      %v1069 = vpop.f32.mrb[0].mxu0
      %v1070 = vadd.f32 0.0, %v1069
      %v1071 = vpop.f32.mrb[0].mxu0
      %v1072 = vpop.f32.mrb[0].mxu0
      %v1073 = vadd.f32 0.0, %v1072
      %v1074 = vpop.f32.mrb[0].mxu0
      %1075 = vmatprep.mubr.bf16.mxu0 0
      %1076 = vmatmul.mubr.bf16.gmra.mrb[0].mxu0 %v1012
      %v1077 = vpop.f32.mrb[0].mxu0
      %v1078 = vadd.f32 0.0, %v1077
      %v1079 = vpop.f32.mrb[0].mxu0
      %v1080 = vpop.f32.mrb[0].mxu0
      %v1081 = vadd.f32 0.0, %v1080
      %v1082 = vpop.f32.mrb[0].mxu0
      %1083 = vmatprep.mubr.bf16.mxu0 0
      %1084 = vmatmul.mubr.bf16.gmra.mrb[0].mxu0 %v1015
      %v1085 = vpop.f32.mrb[0].mxu0
      %v1086 = vadd.f32 0.0, %v1085
      %v1087 = vpop.f32.mrb[0].mxu0
      %v1088 = vpop.f32.mrb[0].mxu0
      %v1089 = vadd.f32 0.0, %v1088
      %v1090 = vpop.f32.mrb[0].mxu0
      %1091 = vmatprep.mubr.bf16.mxu0 0
      %1092 = vmatmul.mubr.bf16.gmra.mrb[0].mxu0 %v1018
      %v1093 = vpop.f32.mrb[0].mxu0
      %v1094 = vadd.f32 0.0, %v1093
      %v1095 = vpop.f32.mrb[0].mxu0
      %v1096 = vpop.f32.mrb[0].mxu0
      %v1097 = vadd.f32 0.0, %v1096
      %v1098 = vpop.f32.mrb[0].mxu0
      %1099 = vmatprep.mubr.bf16.mxu0 0
      %1100 = vmatmul.mubr.bf16.gmra.mrb[0].mxu0 %v1021
      %v1101 = vpop.f32.mrb[0].mxu0
      %v1102 = vadd.f32 0.0, %v1101
      %v1103 = vpop.f32.mrb[0].mxu0
      %v1104 = vpop.f32.mrb[0].mxu0
      %v1105 = vadd.f32 0.0, %v1104
      %v1106 = vpop.f32.mrb[0].mxu0
      %1107 = vmatprep.mubr.bf16.mxu0 0
      %1108 = vmatmul.mubr.bf16.gmra.mrb[0].mxu0 %v1024
      %v1109 = vpop.f32.mrb[0].mxu0
      %v1110 = vadd.f32 0.0, %v1109
      %v1111 = vpop.f32.mrb[0].mxu0
      %v1112 = vpop.f32.mrb[0].mxu0
      %v1113 = vadd.f32 0.0, %v1112
      %v1114 = vpop.f32.mrb[0].mxu0
      %1115 = vmatprep.mubr.bf16.mxu0 0
      %1116 = vmatmul.mubr.bf16.gmra.mrb[0].mxu0 %v1027
      %v1117 = vpop.f32.mrb[0].mxu0
      %v1118 = vadd.f32 0.0, %v1117
      %v1119 = vpop.f32.mrb[0].mxu0
      %v1120 = vpop.f32.mrb[0].mxu0
      %v1121 = vadd.f32 0.0, %v1120
      %v1122 = vpop.f32.mrb[0].mxu0
      %1123 = vmatprep.mubr.bf16.mxu0 0
      %1124 = vmatmul.mubr.bf16.gmra.mrb[0].mxu0 %v1030
      %v1125 = vpop.f32.mrb[0].mxu0
      %v1126 = vadd.f32 0.0, %v1125
      %v1127 = vpop.f32.mrb[0].mxu0
      %v1128 = vpop.f32.mrb[0].mxu0
      %v1129 = vadd.f32 0.0, %v1128
      %v1130 = vpop.f32.mrb[0].mxu0
      %1131 = vdwg.mxu0
      %v1132 = vadd.f32 %v922, %v1070
      %v1133 = vadd.f32 %v923, %v1073
      %v1134 = vadd.f32 %v924, %v1078
      %v1135 = vadd.f32 %v925, %v1081
      %v1136 = vadd.f32 %v926, %v1086
      %v1137 = vadd.f32 %v927, %v1089
      %v1138 = vadd.f32 %v928, %v1094
      %v1139 = vadd.f32 %v929, %v1097
      %v1140 = vadd.f32 %v930, %v1102
      %v1141 = vadd.f32 %v931, %v1105
      %v1142 = vadd.f32 %v932, %v1110
      %v1143 = vadd.f32 %v933, %v1113
      %v1144 = vadd.f32 %v934, %v1118
      %v1145 = vadd.f32 %v935, %v1121
      %v1146 = vadd.f32 %v936, %v1126
      %v1147 = vadd.f32 %v937, %v1129
      %v1149 = vshrl.u32 %v942, 16
      %v1151 = vrot.slane %v1149, 4
      %v1152 = vshll.u32 %v942, 16
      %v1154 = vrot.slane %v1152, 5
      %v1155 = vor.u32 %v1151, %v1154
      %v1156 = vrot.slane %v1155, 4
      %v1158 = vshll.u32 %v943, 16
      %v1160 = vrot.slane %v1158, 5
      %v1161 = vsel %vm196, %v1156, %v1160
      %v1162 = vshrl.u32 %v943, 16
      %v1164 = vrot.slane %v1162, 4
      %v1165 = vor.u32 %v1164, %v1160
      %v1166 = vrot.slane %v1165, 4
      %v1168 = vshll.u32 %v944, 16
      %v1170 = vrot.slane %v1168, 5
      %v1171 = vsel %vm196, %v1166, %v1170
      %v1173 = vshrl.u32 %v945, 16
      %v1175 = vrot.slane %v1173, 4
      %v1176 = vshll.u32 %v945, 16
      %v1178 = vrot.slane %v1176, 5
      %v1179 = vor.u32 %v1175, %v1178
      %v1180 = vrot.slane %v1179, 4
      %v1182 = vshll.u32 %v946, 16
      %v1184 = vrot.slane %v1182, 5
      %v1185 = vsel %vm196, %v1180, %v1184
      %v1186 = vshrl.u32 %v946, 16
      %v1188 = vrot.slane %v1186, 4
      %v1189 = vor.u32 %v1188, %v1184
      %v1190 = vrot.slane %v1189, 4
      %v1192 = vshll.u32 %v947, 16
      %v1194 = vrot.slane %v1192, 5
      %v1195 = vsel %vm196, %v1190, %v1194
      %v1197 = vshrl.u32 %v948, 16
      %v1199 = vrot.slane %v1197, 4
      %v1200 = vshll.u32 %v948, 16
      %v1202 = vrot.slane %v1200, 5
      %v1203 = vor.u32 %v1199, %v1202
      %v1204 = vrot.slane %v1203, 4
      %v1206 = vshll.u32 %v949, 16
      %v1208 = vrot.slane %v1206, 5
      %v1209 = vsel %vm196, %v1204, %v1208
      %v1210 = vshrl.u32 %v949, 16
      %v1212 = vrot.slane %v1210, 4
      %v1213 = vor.u32 %v1212, %v1208
      %v1214 = vrot.slane %v1213, 4
      %v1216 = vshll.u32 %v950, 16
      %v1218 = vrot.slane %v1216, 5
      %v1219 = vsel %vm196, %v1214, %v1218
      %v1221 = vshrl.u32 %v951, 16
      %v1223 = vrot.slane %v1221, 4
      %v1224 = vshll.u32 %v951, 16
      %v1226 = vrot.slane %v1224, 5
      %v1227 = vor.u32 %v1223, %v1226
      %v1228 = vrot.slane %v1227, 4
      %v1230 = vshll.u32 %v952, 16
      %v1232 = vrot.slane %v1230, 5
      %v1233 = vsel %vm196, %v1228, %v1232
      %v1234 = vshrl.u32 %v952, 16
      %v1236 = vrot.slane %v1234, 4
      %v1237 = vor.u32 %v1236, %v1232
      %v1238 = vrot.slane %v1237, 4
      %v1240 = vshll.u32 %v953, 16
      %v1242 = vrot.slane %v1240, 5
      %v1243 = vsel %vm196, %v1238, %v1242
      %v1245 = vshrl.u32 %v954, 16
      %v1247 = vrot.slane %v1245, 4
      %v1248 = vshll.u32 %v954, 16
      %v1250 = vrot.slane %v1248, 5
      %v1251 = vor.u32 %v1247, %v1250
      %v1252 = vrot.slane %v1251, 4
      %v1254 = vshll.u32 %v955, 16
      %v1256 = vrot.slane %v1254, 5
      %v1257 = vsel %vm196, %v1252, %v1256
      %v1258 = vshrl.u32 %v955, 16
      %v1260 = vrot.slane %v1258, 4
      %v1261 = vor.u32 %v1260, %v1256
      %v1262 = vrot.slane %v1261, 4
      %v1264 = vshll.u32 %v956, 16
      %v1266 = vrot.slane %v1264, 5
      %v1267 = vsel %vm196, %v1262, %v1266
      %v1269 = vshrl.u32 %v957, 16
      %v1271 = vrot.slane %v1269, 4
      %v1272 = vshll.u32 %v957, 16
      %v1274 = vrot.slane %v1272, 5
      %v1275 = vor.u32 %v1271, %v1274
      %v1276 = vrot.slane %v1275, 4
      %v1278 = vshll.u32 %v958, 16
      %v1280 = vrot.slane %v1278, 5
      %v1281 = vsel %vm196, %v1276, %v1280
      %v1282 = vshrl.u32 %v958, 16
      %v1284 = vrot.slane %v1282, 4
      %v1285 = vor.u32 %v1284, %v1280
      %v1286 = vrot.slane %v1285, 4
      %v1288 = vshll.u32 %v959, 16
      %v1290 = vrot.slane %v1288, 5
      %v1291 = vsel %vm196, %v1286, %v1290
      %v1293 = vshrl.u32 %v960, 16
      %v1295 = vrot.slane %v1293, 4
      %v1296 = vshll.u32 %v960, 16
      %v1298 = vrot.slane %v1296, 5
      %v1299 = vor.u32 %v1295, %v1298
      %v1300 = vrot.slane %v1299, 4
      %v1302 = vshll.u32 %v961, 16
      %v1304 = vrot.slane %v1302, 5
      %v1305 = vsel %vm196, %v1300, %v1304
      %v1306 = vshrl.u32 %v961, 16
      %v1308 = vrot.slane %v1306, 4
      %v1309 = vor.u32 %v1308, %v1304
      %v1310 = vrot.slane %v1309, 4
      %v1312 = vshll.u32 %v962, 16
      %v1314 = vrot.slane %v1312, 5
      %v1315 = vsel %vm196, %v1310, %v1314
      %v1317 = vshrl.u32 %v963, 16
      %v1319 = vrot.slane %v1317, 4
      %v1320 = vshll.u32 %v963, 16
      %v1322 = vrot.slane %v1320, 5
      %v1323 = vor.u32 %v1319, %v1322
      %v1324 = vrot.slane %v1323, 4
      %v1326 = vshll.u32 %v964, 16
      %v1328 = vrot.slane %v1326, 5
      %v1329 = vsel %vm196, %v1324, %v1328
      %v1330 = vshrl.u32 %v964, 16
      %v1332 = vrot.slane %v1330, 4
      %v1333 = vor.u32 %v1332, %v1328
      %v1334 = vrot.slane %v1333, 4
      %v1336 = vshll.u32 %v965, 16
      %v1338 = vrot.slane %v1336, 5
      %v1339 = vsel %vm196, %v1334, %v1338
      %s1340 = scalar_lea.vmem %s1, 16
      %v1341 = vld [vmem:[%s1340] sm:$0xf]
      %v1342 = vunpack.c.l.b16 %v1161
      %v1343 = vunpack.c.l.b16 %v1171
      %v1344 = vunpack.c.l.b16 %v1185
      %v1345 = vunpack.c.l.b16 %v1195
      %v1346 = vunpack.c.l.b16 %v1209
      %v1347 = vunpack.c.l.b16 %v1219
      %v1348 = vunpack.c.l.b16 %v1233
      %v1349 = vunpack.c.l.b16 %v1243
      %v1350 = vunpack.c.l.b16 %v1257
      %v1351 = vunpack.c.l.b16 %v1267
      %v1352 = vunpack.c.l.b16 %v1281
      %v1353 = vunpack.c.l.b16 %v1291
      %v1354 = vunpack.c.l.b16 %v1305
      %v1355 = vunpack.c.l.b16 %v1315
      %v1356 = vunpack.c.l.b16 %v1329
      %v1357 = vunpack.c.l.b16 %v1339
      %v1358 = vpack.c.b16 %v1343, %v1342
      %v1359 = vpack.c.b16 %v1345, %v1344
      %v1360 = vpack.c.b16 %v1347, %v1346
      %v1361 = vpack.c.b16 %v1349, %v1348
      %v1362 = vpack.c.b16 %v1351, %v1350
      %v1363 = vpack.c.b16 %v1353, %v1352
      %v1364 = vpack.c.b16 %v1355, %v1354
      %v1365 = vpack.c.b16 %v1357, %v1356
      %v1367 = vsel %vm415, %v1358, 0
      %v1370 = vsel %vm415, %v1359, 0
      %v1373 = vsel %vm415, %v1360, 0
      %v1376 = vsel %vm415, %v1361, 0
      %v1379 = vsel %vm415, %v1362, 0
      %v1382 = vsel %vm415, %v1363, 0
      %v1385 = vsel %vm415, %v1364, 0
      %v1388 = vsel %vm415, %v1365, 0
      %v1391 = vsel %vm440, %v1341, 0
      %1393 = vmatprep.subr.bf16.mxu0 0
      %1394 = vmatpush1.bf16.msra.mxu0 %v1391
      %1395 = vmatprep.subr.bf16.mxu0 0
      %1396 = vmatpush1.bf16.msra.mxu0 0
      %1397 = vmatprep.subr.bf16.mxu0 0
      %1398 = vmatpush1.bf16.msra.mxu0 0
      %1399 = vmatprep.subr.bf16.mxu0 0
      %1400 = vmatpush1.bf16.msra.mxu0 0
      %1401 = vmatprep.subr.bf16.mxu0 0
      %1402 = vmatpush1.bf16.msra.mxu0 0
      %1403 = vmatprep.subr.bf16.mxu0 0
      %1404 = vmatpush1.bf16.msra.mxu0 0
      %1405 = vmatprep.subr.bf16.mxu0 0
      %1406 = vmatpush1.bf16.msra.mxu0 0
      %1407 = vmatprep.subr.bf16.mxu0 0
      %1408 = vmatpush1.bf16.msra.mxu0 0
      %1409 = vmatprep.subr.bf16.mxu0 0
      %1410 = vmatpush1.bf16.msra.mxu0 0
      %1411 = vmatprep.subr.bf16.mxu0 0
      %1412 = vmatpush1.bf16.msra.mxu0 0
      %1413 = vmatprep.subr.bf16.mxu0 0
      %1414 = vmatpush1.bf16.msra.mxu0 0
      %1415 = vmatprep.subr.bf16.mxu0 0
      %1416 = vmatpush1.bf16.msra.mxu0 0
      %1417 = vmatprep.subr.bf16.mxu0 0
      %1418 = vmatpush1.bf16.msra.mxu0 0
      %1419 = vmatprep.subr.bf16.mxu0 0
      %1420 = vmatpush1.bf16.msra.mxu0 0
      %1421 = vmatprep.subr.bf16.mxu0 0
      %1422 = vmatpush1.bf16.msra.mxu0 0
      %1423 = vmatprep.subr.bf16.mxu0 0
      %1424 = vmatpush1.bf16.msra.mxu0 0
      %1425 = vmatprep.mubr.bf16.mxu0 0
      %1426 = vmatmul.mubr.bf16.gmra.mrb[0].mxu0 %v1367
      %v1427 = vpop.f32.mrb[0].mxu0
      %v1428 = vadd.f32 0.0, %v1427
      %v1429 = vpop.f32.mrb[0].mxu0
      %v1430 = vpop.f32.mrb[0].mxu0
      %v1431 = vadd.f32 0.0, %v1430
      %v1432 = vpop.f32.mrb[0].mxu0
      %1433 = vmatprep.mubr.bf16.mxu0 0
      %1434 = vmatmul.mubr.bf16.gmra.mrb[0].mxu0 %v1370
      %v1435 = vpop.f32.mrb[0].mxu0
      %v1436 = vadd.f32 0.0, %v1435
      %v1437 = vpop.f32.mrb[0].mxu0
      %v1438 = vpop.f32.mrb[0].mxu0
      %v1439 = vadd.f32 0.0, %v1438
      %v1440 = vpop.f32.mrb[0].mxu0
      %1441 = vmatprep.mubr.bf16.mxu0 0
      %1442 = vmatmul.mubr.bf16.gmra.mrb[0].mxu0 %v1373
      %v1443 = vpop.f32.mrb[0].mxu0
      %v1444 = vadd.f32 0.0, %v1443
      %v1445 = vpop.f32.mrb[0].mxu0
      %v1446 = vpop.f32.mrb[0].mxu0
      %v1447 = vadd.f32 0.0, %v1446
      %v1448 = vpop.f32.mrb[0].mxu0
      %1449 = vmatprep.mubr.bf16.mxu0 0
      %1450 = vmatmul.mubr.bf16.gmra.mrb[0].mxu0 %v1376
      %v1451 = vpop.f32.mrb[0].mxu0
      %v1452 = vadd.f32 0.0, %v1451
      %v1453 = vpop.f32.mrb[0].mxu0
      %v1454 = vpop.f32.mrb[0].mxu0
      %v1455 = vadd.f32 0.0, %v1454
      %v1456 = vpop.f32.mrb[0].mxu0
      %1457 = vmatprep.mubr.bf16.mxu0 0
      %1458 = vmatmul.mubr.bf16.gmra.mrb[0].mxu0 %v1379
      %v1459 = vpop.f32.mrb[0].mxu0
      %v1460 = vadd.f32 0.0, %v1459
      %v1461 = vpop.f32.mrb[0].mxu0
      %v1462 = vpop.f32.mrb[0].mxu0
      %v1463 = vadd.f32 0.0, %v1462
      %v1464 = vpop.f32.mrb[0].mxu0
      %1465 = vmatprep.mubr.bf16.mxu0 0
      %1466 = vmatmul.mubr.bf16.gmra.mrb[0].mxu0 %v1382
      %v1467 = vpop.f32.mrb[0].mxu0
      %v1468 = vadd.f32 0.0, %v1467
      %v1469 = vpop.f32.mrb[0].mxu0
      %v1470 = vpop.f32.mrb[0].mxu0
      %v1471 = vadd.f32 0.0, %v1470
      %v1472 = vpop.f32.mrb[0].mxu0
      %1473 = vmatprep.mubr.bf16.mxu0 0
      %1474 = vmatmul.mubr.bf16.gmra.mrb[0].mxu0 %v1385
      %v1475 = vpop.f32.mrb[0].mxu0
      %v1476 = vadd.f32 0.0, %v1475
      %v1477 = vpop.f32.mrb[0].mxu0
      %v1478 = vpop.f32.mrb[0].mxu0
      %v1479 = vadd.f32 0.0, %v1478
      %v1480 = vpop.f32.mrb[0].mxu0
      %1481 = vmatprep.mubr.bf16.mxu0 0
      %1482 = vmatmul.mubr.bf16.gmra.mrb[0].mxu0 %v1388
      %v1483 = vpop.f32.mrb[0].mxu0
      %v1484 = vadd.f32 0.0, %v1483
      %v1485 = vpop.f32.mrb[0].mxu0
      %v1486 = vpop.f32.mrb[0].mxu0
      %v1487 = vadd.f32 0.0, %v1486
      %v1488 = vpop.f32.mrb[0].mxu0
      %1489 = vdwg.mxu0
      %v1490 = vadd.f32 %v1132, %v1428
      %v1491 = vadd.f32 %v1133, %v1431
      %v1492 = vadd.f32 %v1134, %v1436
      %v1493 = vadd.f32 %v1135, %v1439
      %v1494 = vadd.f32 %v1136, %v1444
      %v1495 = vadd.f32 %v1137, %v1447
      %v1496 = vadd.f32 %v1138, %v1452
      %v1497 = vadd.f32 %v1139, %v1455
      %v1498 = vadd.f32 %v1140, %v1460
      %v1499 = vadd.f32 %v1141, %v1463
      %v1500 = vadd.f32 %v1142, %v1468
      %v1501 = vadd.f32 %v1143, %v1471
      %v1502 = vadd.f32 %v1144, %v1476
      %v1503 = vadd.f32 %v1145, %v1479
      %v1504 = vadd.f32 %v1146, %v1484
      %v1505 = vadd.f32 %v1147, %v1487
      %v1514 = vrot.slane %v942, 5
      %v1515 = vrot.slane %v1514, 4
      %v1516 = vrot.slane %v943, 5
      %v1517 = vsel %vm715, %v1515, %v1516
      %v1518 = vrot.slane %v1516, 4
      %v1519 = vrot.slane %v944, 5
      %v1520 = vsel %vm715, %v1518, %v1519
      %v1521 = vrot.slane %v945, 5
      %v1522 = vrot.slane %v1521, 4
      %v1523 = vrot.slane %v946, 5
      %v1524 = vsel %vm715, %v1522, %v1523
      %v1525 = vrot.slane %v1523, 4
      %v1526 = vrot.slane %v947, 5
      %v1527 = vsel %vm715, %v1525, %v1526
      %v1528 = vrot.slane %v948, 5
      %v1529 = vrot.slane %v1528, 4
      %v1530 = vrot.slane %v949, 5
      %v1531 = vsel %vm715, %v1529, %v1530
      %v1532 = vrot.slane %v1530, 4
      %v1533 = vrot.slane %v950, 5
      %v1534 = vsel %vm715, %v1532, %v1533
      %v1535 = vrot.slane %v951, 5
      %v1536 = vrot.slane %v1535, 4
      %v1537 = vrot.slane %v952, 5
      %v1538 = vsel %vm715, %v1536, %v1537
      %v1539 = vrot.slane %v1537, 4
      %v1540 = vrot.slane %v953, 5
      %v1541 = vsel %vm715, %v1539, %v1540
      %v1542 = vrot.slane %v954, 5
      %v1543 = vrot.slane %v1542, 4
      %v1544 = vrot.slane %v955, 5
      %v1545 = vsel %vm715, %v1543, %v1544
      %v1546 = vrot.slane %v1544, 4
      %v1547 = vrot.slane %v956, 5
      %v1548 = vsel %vm715, %v1546, %v1547
      %v1549 = vrot.slane %v957, 5
      %v1550 = vrot.slane %v1549, 4
      %v1551 = vrot.slane %v958, 5
      %v1552 = vsel %vm715, %v1550, %v1551
      %v1553 = vrot.slane %v1551, 4
      %v1554 = vrot.slane %v959, 5
      %v1555 = vsel %vm715, %v1553, %v1554
      %v1556 = vrot.slane %v960, 5
      %v1557 = vrot.slane %v1556, 4
      %v1558 = vrot.slane %v961, 5
      %v1559 = vsel %vm715, %v1557, %v1558
      %v1560 = vrot.slane %v1558, 4
      %v1561 = vrot.slane %v962, 5
      %v1562 = vsel %vm715, %v1560, %v1561
      %v1563 = vrot.slane %v963, 5
      %v1564 = vrot.slane %v1563, 4
      %v1565 = vrot.slane %v964, 5
      %v1566 = vsel %vm715, %v1564, %v1565
      %v1567 = vrot.slane %v1565, 4
      %v1568 = vrot.slane %v965, 5
      %v1569 = vsel %vm715, %v1567, %v1568
      %s1570 = scalar_lea.vmem %s1, 20
      %v1571 = vld [vmem:[%s1570] sm:$0xf]
      %v1572 = vunpack.c.l.b16 %v1517
      %v1573 = vunpack.c.l.b16 %v1520
      %v1574 = vunpack.c.l.b16 %v1524
      %v1575 = vunpack.c.l.b16 %v1527
      %v1576 = vunpack.c.l.b16 %v1531
      %v1577 = vunpack.c.l.b16 %v1534
      %v1578 = vunpack.c.l.b16 %v1538
      %v1579 = vunpack.c.l.b16 %v1541
      %v1580 = vunpack.c.l.b16 %v1545
      %v1581 = vunpack.c.l.b16 %v1548
      %v1582 = vunpack.c.l.b16 %v1552
      %v1583 = vunpack.c.l.b16 %v1555
      %v1584 = vunpack.c.l.b16 %v1559
      %v1585 = vunpack.c.l.b16 %v1562
      %v1586 = vunpack.c.l.b16 %v1566
      %v1587 = vunpack.c.l.b16 %v1569
      %v1588 = vpack.c.b16 %v1573, %v1572
      %v1589 = vpack.c.b16 %v1575, %v1574
      %v1590 = vpack.c.b16 %v1577, %v1576
      %v1591 = vpack.c.b16 %v1579, %v1578
      %v1592 = vpack.c.b16 %v1581, %v1580
      %v1593 = vpack.c.b16 %v1583, %v1582
      %v1594 = vpack.c.b16 %v1585, %v1584
      %v1595 = vpack.c.b16 %v1587, %v1586
      %v1597 = vsel %vm415, %v1588, 0
      %v1600 = vsel %vm415, %v1589, 0
      %v1603 = vsel %vm415, %v1590, 0
      %v1606 = vsel %vm415, %v1591, 0
      %v1609 = vsel %vm415, %v1592, 0
      %v1612 = vsel %vm415, %v1593, 0
      %v1615 = vsel %vm415, %v1594, 0
      %v1618 = vsel %vm415, %v1595, 0
      %v1621 = vsel %vm440, %v1571, 0
      %1623 = vmatprep.subr.bf16.mxu0 0
      %1624 = vmatpush1.bf16.msra.mxu0 %v1621
      %1625 = vmatprep.subr.bf16.mxu0 0
      %1626 = vmatpush1.bf16.msra.mxu0 0
      %1627 = vmatprep.subr.bf16.mxu0 0
      %1628 = vmatpush1.bf16.msra.mxu0 0
      %1629 = vmatprep.subr.bf16.mxu0 0
      %1630 = vmatpush1.bf16.msra.mxu0 0
      %1631 = vmatprep.subr.bf16.mxu0 0
      %1632 = vmatpush1.bf16.msra.mxu0 0
      %1633 = vmatprep.subr.bf16.mxu0 0
      %1634 = vmatpush1.bf16.msra.mxu0 0
      %1635 = vmatprep.subr.bf16.mxu0 0
      %1636 = vmatpush1.bf16.msra.mxu0 0
      %1637 = vmatprep.subr.bf16.mxu0 0
      %1638 = vmatpush1.bf16.msra.mxu0 0
      %1639 = vmatprep.subr.bf16.mxu0 0
      %1640 = vmatpush1.bf16.msra.mxu0 0
      %1641 = vmatprep.subr.bf16.mxu0 0
      %1642 = vmatpush1.bf16.msra.mxu0 0
      %1643 = vmatprep.subr.bf16.mxu0 0
      %1644 = vmatpush1.bf16.msra.mxu0 0
      %1645 = vmatprep.subr.bf16.mxu0 0
      %1646 = vmatpush1.bf16.msra.mxu0 0
      %1647 = vmatprep.subr.bf16.mxu0 0
      %1648 = vmatpush1.bf16.msra.mxu0 0
      %1649 = vmatprep.subr.bf16.mxu0 0
      %1650 = vmatpush1.bf16.msra.mxu0 0
      %1651 = vmatprep.subr.bf16.mxu0 0
      %1652 = vmatpush1.bf16.msra.mxu0 0
      %1653 = vmatprep.subr.bf16.mxu0 0
      %1654 = vmatpush1.bf16.msra.mxu0 0
      %1655 = vmatprep.mubr.bf16.mxu0 0
      %1656 = vmatmul.mubr.bf16.gmra.mrb[0].mxu0 %v1597
      %v1657 = vpop.f32.mrb[0].mxu0
      %v1658 = vadd.f32 0.0, %v1657
      %v1659 = vpop.f32.mrb[0].mxu0
      %v1660 = vpop.f32.mrb[0].mxu0
      %v1661 = vadd.f32 0.0, %v1660
      %v1662 = vpop.f32.mrb[0].mxu0
      %1663 = vmatprep.mubr.bf16.mxu0 0
      %1664 = vmatmul.mubr.bf16.gmra.mrb[0].mxu0 %v1600
      %v1665 = vpop.f32.mrb[0].mxu0
      %v1666 = vadd.f32 0.0, %v1665
      %v1667 = vpop.f32.mrb[0].mxu0
      %v1668 = vpop.f32.mrb[0].mxu0
      %v1669 = vadd.f32 0.0, %v1668
      %v1670 = vpop.f32.mrb[0].mxu0
      %1671 = vmatprep.mubr.bf16.mxu0 0
      %1672 = vmatmul.mubr.bf16.gmra.mrb[0].mxu0 %v1603
      %v1673 = vpop.f32.mrb[0].mxu0
      %v1674 = vadd.f32 0.0, %v1673
      %v1675 = vpop.f32.mrb[0].mxu0
      %v1676 = vpop.f32.mrb[0].mxu0
      %v1677 = vadd.f32 0.0, %v1676
      %v1678 = vpop.f32.mrb[0].mxu0
      %1679 = vmatprep.mubr.bf16.mxu0 0
      %1680 = vmatmul.mubr.bf16.gmra.mrb[0].mxu0 %v1606
      %v1681 = vpop.f32.mrb[0].mxu0
      %v1682 = vadd.f32 0.0, %v1681
      %v1683 = vpop.f32.mrb[0].mxu0
      %v1684 = vpop.f32.mrb[0].mxu0
      %v1685 = vadd.f32 0.0, %v1684
      %v1686 = vpop.f32.mrb[0].mxu0
      %1687 = vmatprep.mubr.bf16.mxu0 0
      %1688 = vmatmul.mubr.bf16.gmra.mrb[0].mxu0 %v1609
      %v1689 = vpop.f32.mrb[0].mxu0
      %v1690 = vadd.f32 0.0, %v1689
      %v1691 = vpop.f32.mrb[0].mxu0
      %v1692 = vpop.f32.mrb[0].mxu0
      %v1693 = vadd.f32 0.0, %v1692
      %v1694 = vpop.f32.mrb[0].mxu0
      %1695 = vmatprep.mubr.bf16.mxu0 0
      %1696 = vmatmul.mubr.bf16.gmra.mrb[0].mxu0 %v1612
      %v1697 = vpop.f32.mrb[0].mxu0
      %v1698 = vadd.f32 0.0, %v1697
      %v1699 = vpop.f32.mrb[0].mxu0
      %v1700 = vpop.f32.mrb[0].mxu0
      %v1701 = vadd.f32 0.0, %v1700
      %v1702 = vpop.f32.mrb[0].mxu0
      %1703 = vmatprep.mubr.bf16.mxu0 0
      %1704 = vmatmul.mubr.bf16.gmra.mrb[0].mxu0 %v1615
      %v1705 = vpop.f32.mrb[0].mxu0
      %v1706 = vadd.f32 0.0, %v1705
      %v1707 = vpop.f32.mrb[0].mxu0
      %v1708 = vpop.f32.mrb[0].mxu0
      %v1709 = vadd.f32 0.0, %v1708
      %v1710 = vpop.f32.mrb[0].mxu0
      %1711 = vmatprep.mubr.bf16.mxu0 0
      %1712 = vmatmul.mubr.bf16.gmra.mrb[0].mxu0 %v1618
      %v1713 = vpop.f32.mrb[0].mxu0
      %v1714 = vadd.f32 0.0, %v1713
      %v1715 = vpop.f32.mrb[0].mxu0
      %v1716 = vpop.f32.mrb[0].mxu0
      %v1717 = vadd.f32 0.0, %v1716
      %v1718 = vpop.f32.mrb[0].mxu0
      %1719 = vdwg.mxu0
      %v1720 = vadd.f32 %v1490, %v1658
      %v1721 = vadd.f32 %v1491, %v1661
      %v1722 = vadd.f32 %v1492, %v1666
      %v1723 = vadd.f32 %v1493, %v1669
      %v1724 = vadd.f32 %v1494, %v1674
      %v1725 = vadd.f32 %v1495, %v1677
      %v1726 = vadd.f32 %v1496, %v1682
      %v1727 = vadd.f32 %v1497, %v1685
      %v1728 = vadd.f32 %v1498, %v1690
      %v1729 = vadd.f32 %v1499, %v1693
      %v1730 = vadd.f32 %v1500, %v1698
      %v1731 = vadd.f32 %v1501, %v1701
      %v1732 = vadd.f32 %v1502, %v1706
      %v1733 = vadd.f32 %v1503, %v1709
      %v1734 = vadd.f32 %v1504, %v1714
      %v1735 = vadd.f32 %v1505, %v1717
      %s1736 = sadd.s32 %s165, 2
      %s1737 = smul.u32 %s1736, 3
      %s1738 = smul.addr %s1737, 4
      %s1739 = scalar_lea.vmem %s155, %s1738
      %v1740 = vld [vmem:[%s1739] sm:$0xf]
      %v1741 = vld [vmem:[%s1739 + $0x4] sm:$0xf]
      %v1742 = vld [vmem:[%s1739 + $0x8] sm:$0x1]
      %v1743 = vld [vmem:[%s1739 + $0xc] sm:$0xf]
      %v1744 = vld [vmem:[%s1739 + $0x10] sm:$0xf]
      %v1745 = vld [vmem:[%s1739 + $0x14] sm:$0x1]
      %v1746 = vld [vmem:[%s1739 + $0x18] sm:$0xf]
      %v1747 = vld [vmem:[%s1739 + $0x1c] sm:$0xf]
      %v1748 = vld [vmem:[%s1739 + $0x20] sm:$0x1]
      %v1749 = vld [vmem:[%s1739 + $0x24] sm:$0xf]
      %v1750 = vld [vmem:[%s1739 + $0x28] sm:$0xf]
      %v1751 = vld [vmem:[%s1739 + $0x2c] sm:$0x1]
      %v1752 = vld [vmem:[%s1739 + $0x30] sm:$0xf]
      %v1753 = vld [vmem:[%s1739 + $0x34] sm:$0xf]
      %v1754 = vld [vmem:[%s1739 + $0x38] sm:$0x1]
      %v1755 = vld [vmem:[%s1739 + $0x3c] sm:$0xf]
      %v1756 = vld [vmem:[%s1739 + $0x40] sm:$0xf]
      %v1757 = vld [vmem:[%s1739 + $0x44] sm:$0x1]
      %v1758 = vld [vmem:[%s1739 + $0x48] sm:$0xf]
      %v1759 = vld [vmem:[%s1739 + $0x4c] sm:$0xf]
      %v1760 = vld [vmem:[%s1739 + $0x50] sm:$0x1]
      %v1761 = vld [vmem:[%s1739 + $0x54] sm:$0xf]
      %v1762 = vld [vmem:[%s1739 + $0x58] sm:$0xf]
      %v1763 = vld [vmem:[%s1739 + $0x5c] sm:$0x1]
      %s1764 = scalar_lea.vmem %s1, 24
      %v1765 = vld [vmem:[%s1764] sm:$0xf]
      %v1782 = vunpack.c.l.b16 %v1740
      %v1783 = vunpack.c.l.b16 %v1741
      %v1784 = vunpack.c.l.b16 %v1743
      %v1785 = vunpack.c.l.b16 %v1744
      %v1786 = vunpack.c.l.b16 %v1746
      %v1787 = vunpack.c.l.b16 %v1747
      %v1788 = vunpack.c.l.b16 %v1749
      %v1789 = vunpack.c.l.b16 %v1750
      %v1790 = vunpack.c.l.b16 %v1752
      %v1791 = vunpack.c.l.b16 %v1753
      %v1792 = vunpack.c.l.b16 %v1755
      %v1793 = vunpack.c.l.b16 %v1756
      %v1794 = vunpack.c.l.b16 %v1758
      %v1795 = vunpack.c.l.b16 %v1759
      %v1796 = vunpack.c.l.b16 %v1761
      %v1797 = vunpack.c.l.b16 %v1762
      %v1798 = vpack.c.b16 %v1783, %v1782
      %v1799 = vpack.c.b16 %v1785, %v1784
      %v1800 = vpack.c.b16 %v1787, %v1786
      %v1801 = vpack.c.b16 %v1789, %v1788
      %v1802 = vpack.c.b16 %v1791, %v1790
      %v1803 = vpack.c.b16 %v1793, %v1792
      %v1804 = vpack.c.b16 %v1795, %v1794
      %v1805 = vpack.c.b16 %v1797, %v1796
      %v1807 = vsel %vm415, %v1798, 0
      %v1810 = vsel %vm415, %v1799, 0
      %v1813 = vsel %vm415, %v1800, 0
      %v1816 = vsel %vm415, %v1801, 0
      %v1819 = vsel %vm415, %v1802, 0
      %v1822 = vsel %vm415, %v1803, 0
      %v1825 = vsel %vm415, %v1804, 0
      %v1828 = vsel %vm415, %v1805, 0
      %v1831 = vsel %vm440, %v1765, 0
      %1833 = vmatprep.subr.bf16.mxu0 0
      %1834 = vmatpush1.bf16.msra.mxu0 %v1831
      %1835 = vmatprep.subr.bf16.mxu0 0
      %1836 = vmatpush1.bf16.msra.mxu0 0
      %1837 = vmatprep.subr.bf16.mxu0 0
      %1838 = vmatpush1.bf16.msra.mxu0 0
      %1839 = vmatprep.subr.bf16.mxu0 0
      %1840 = vmatpush1.bf16.msra.mxu0 0
      %1841 = vmatprep.subr.bf16.mxu0 0
      %1842 = vmatpush1.bf16.msra.mxu0 0
      %1843 = vmatprep.subr.bf16.mxu0 0
      %1844 = vmatpush1.bf16.msra.mxu0 0
      %1845 = vmatprep.subr.bf16.mxu0 0
      %1846 = vmatpush1.bf16.msra.mxu0 0
      %1847 = vmatprep.subr.bf16.mxu0 0
      %1848 = vmatpush1.bf16.msra.mxu0 0
      %1849 = vmatprep.subr.bf16.mxu0 0
      %1850 = vmatpush1.bf16.msra.mxu0 0
      %1851 = vmatprep.subr.bf16.mxu0 0
      %1852 = vmatpush1.bf16.msra.mxu0 0
      %1853 = vmatprep.subr.bf16.mxu0 0
      %1854 = vmatpush1.bf16.msra.mxu0 0
      %1855 = vmatprep.subr.bf16.mxu0 0
      %1856 = vmatpush1.bf16.msra.mxu0 0
      %1857 = vmatprep.subr.bf16.mxu0 0
      %1858 = vmatpush1.bf16.msra.mxu0 0
      %1859 = vmatprep.subr.bf16.mxu0 0
      %1860 = vmatpush1.bf16.msra.mxu0 0
      %1861 = vmatprep.subr.bf16.mxu0 0
      %1862 = vmatpush1.bf16.msra.mxu0 0
      %1863 = vmatprep.subr.bf16.mxu0 0
      %1864 = vmatpush1.bf16.msra.mxu0 0
      %1865 = vmatprep.mubr.bf16.mxu0 0
      %1866 = vmatmul.mubr.bf16.gmra.mrb[0].mxu0 %v1807
      %v1867 = vpop.f32.mrb[0].mxu0
      %v1868 = vadd.f32 0.0, %v1867
      %v1869 = vpop.f32.mrb[0].mxu0
      %v1870 = vpop.f32.mrb[0].mxu0
      %v1871 = vadd.f32 0.0, %v1870
      %v1872 = vpop.f32.mrb[0].mxu0
      %1873 = vmatprep.mubr.bf16.mxu0 0
      %1874 = vmatmul.mubr.bf16.gmra.mrb[0].mxu0 %v1810
      %v1875 = vpop.f32.mrb[0].mxu0
      %v1876 = vadd.f32 0.0, %v1875
      %v1877 = vpop.f32.mrb[0].mxu0
      %v1878 = vpop.f32.mrb[0].mxu0
      %v1879 = vadd.f32 0.0, %v1878
      %v1880 = vpop.f32.mrb[0].mxu0
      %1881 = vmatprep.mubr.bf16.mxu0 0
      %1882 = vmatmul.mubr.bf16.gmra.mrb[0].mxu0 %v1813
      %v1883 = vpop.f32.mrb[0].mxu0
      %v1884 = vadd.f32 0.0, %v1883
      %v1885 = vpop.f32.mrb[0].mxu0
      %v1886 = vpop.f32.mrb[0].mxu0
      %v1887 = vadd.f32 0.0, %v1886
      %v1888 = vpop.f32.mrb[0].mxu0
      %1889 = vmatprep.mubr.bf16.mxu0 0
      %1890 = vmatmul.mubr.bf16.gmra.mrb[0].mxu0 %v1816
      %v1891 = vpop.f32.mrb[0].mxu0
      %v1892 = vadd.f32 0.0, %v1891
      %v1893 = vpop.f32.mrb[0].mxu0
      %v1894 = vpop.f32.mrb[0].mxu0
      %v1895 = vadd.f32 0.0, %v1894
      %v1896 = vpop.f32.mrb[0].mxu0
      %1897 = vmatprep.mubr.bf16.mxu0 0
      %1898 = vmatmul.mubr.bf16.gmra.mrb[0].mxu0 %v1819
      %v1899 = vpop.f32.mrb[0].mxu0
      %v1900 = vadd.f32 0.0, %v1899
      %v1901 = vpop.f32.mrb[0].mxu0
      %v1902 = vpop.f32.mrb[0].mxu0
      %v1903 = vadd.f32 0.0, %v1902
      %v1904 = vpop.f32.mrb[0].mxu0
      %1905 = vmatprep.mubr.bf16.mxu0 0
      %1906 = vmatmul.mubr.bf16.gmra.mrb[0].mxu0 %v1822
      %v1907 = vpop.f32.mrb[0].mxu0
      %v1908 = vadd.f32 0.0, %v1907
      %v1909 = vpop.f32.mrb[0].mxu0
      %v1910 = vpop.f32.mrb[0].mxu0
      %v1911 = vadd.f32 0.0, %v1910
      %v1912 = vpop.f32.mrb[0].mxu0
      %1913 = vmatprep.mubr.bf16.mxu0 0
      %1914 = vmatmul.mubr.bf16.gmra.mrb[0].mxu0 %v1825
      %v1915 = vpop.f32.mrb[0].mxu0
      %v1916 = vadd.f32 0.0, %v1915
      %v1917 = vpop.f32.mrb[0].mxu0
      %v1918 = vpop.f32.mrb[0].mxu0
      %v1919 = vadd.f32 0.0, %v1918
      %v1920 = vpop.f32.mrb[0].mxu0
      %1921 = vmatprep.mubr.bf16.mxu0 0
      %1922 = vmatmul.mubr.bf16.gmra.mrb[0].mxu0 %v1828
      %v1923 = vpop.f32.mrb[0].mxu0
      %v1924 = vadd.f32 0.0, %v1923
      %v1925 = vpop.f32.mrb[0].mxu0
      %v1926 = vpop.f32.mrb[0].mxu0
      %v1927 = vadd.f32 0.0, %v1926
      %v1928 = vpop.f32.mrb[0].mxu0
      %1929 = vdwg.mxu0
      %v1930 = vadd.f32 %v1720, %v1868
      %v1931 = vadd.f32 %v1721, %v1871
      %v1932 = vadd.f32 %v1722, %v1876
      %v1933 = vadd.f32 %v1723, %v1879
      %v1934 = vadd.f32 %v1724, %v1884
      %v1935 = vadd.f32 %v1725, %v1887
      %v1936 = vadd.f32 %v1726, %v1892
      %v1937 = vadd.f32 %v1727, %v1895
      %v1938 = vadd.f32 %v1728, %v1900
      %v1939 = vadd.f32 %v1729, %v1903
      %v1940 = vadd.f32 %v1730, %v1908
      %v1941 = vadd.f32 %v1731, %v1911
      %v1942 = vadd.f32 %v1732, %v1916
      %v1943 = vadd.f32 %v1733, %v1919
      %v1944 = vadd.f32 %v1734, %v1924
      %v1945 = vadd.f32 %v1735, %v1927
      %v1947 = vshrl.u32 %v1740, 16
      %v1949 = vrot.slane %v1947, 4
      %v1950 = vshll.u32 %v1740, 16
      %v1952 = vrot.slane %v1950, 5
      %v1953 = vor.u32 %v1949, %v1952
      %v1954 = vrot.slane %v1953, 4
      %v1956 = vshll.u32 %v1741, 16
      %v1958 = vrot.slane %v1956, 5
      %v1959 = vsel %vm196, %v1954, %v1958
      %v1960 = vshrl.u32 %v1741, 16
      %v1962 = vrot.slane %v1960, 4
      %v1963 = vor.u32 %v1962, %v1958
      %v1964 = vrot.slane %v1963, 4
      %v1966 = vshll.u32 %v1742, 16
      %v1968 = vrot.slane %v1966, 5
      %v1969 = vsel %vm196, %v1964, %v1968
      %v1971 = vshrl.u32 %v1743, 16
      %v1973 = vrot.slane %v1971, 4
      %v1974 = vshll.u32 %v1743, 16
      %v1976 = vrot.slane %v1974, 5
      %v1977 = vor.u32 %v1973, %v1976
      %v1978 = vrot.slane %v1977, 4
      %v1980 = vshll.u32 %v1744, 16
      %v1982 = vrot.slane %v1980, 5
      %v1983 = vsel %vm196, %v1978, %v1982
      %v1984 = vshrl.u32 %v1744, 16
      %v1986 = vrot.slane %v1984, 4
      %v1987 = vor.u32 %v1986, %v1982
      %v1988 = vrot.slane %v1987, 4
      %v1990 = vshll.u32 %v1745, 16
      %v1992 = vrot.slane %v1990, 5
      %v1993 = vsel %vm196, %v1988, %v1992
      %v1995 = vshrl.u32 %v1746, 16
      %v1997 = vrot.slane %v1995, 4
      %v1998 = vshll.u32 %v1746, 16
      %v2000 = vrot.slane %v1998, 5
      %v2001 = vor.u32 %v1997, %v2000
      %v2002 = vrot.slane %v2001, 4
      %v2004 = vshll.u32 %v1747, 16
      %v2006 = vrot.slane %v2004, 5
      %v2007 = vsel %vm196, %v2002, %v2006
      %v2008 = vshrl.u32 %v1747, 16
      %v2010 = vrot.slane %v2008, 4
      %v2011 = vor.u32 %v2010, %v2006
      %v2012 = vrot.slane %v2011, 4
      %v2014 = vshll.u32 %v1748, 16
      %v2016 = vrot.slane %v2014, 5
      %v2017 = vsel %vm196, %v2012, %v2016
      %v2019 = vshrl.u32 %v1749, 16
      %v2021 = vrot.slane %v2019, 4
      %v2022 = vshll.u32 %v1749, 16
      %v2024 = vrot.slane %v2022, 5
      %v2025 = vor.u32 %v2021, %v2024
      %v2026 = vrot.slane %v2025, 4
      %v2028 = vshll.u32 %v1750, 16
      %v2030 = vrot.slane %v2028, 5
      %v2031 = vsel %vm196, %v2026, %v2030
      %v2032 = vshrl.u32 %v1750, 16
      %v2034 = vrot.slane %v2032, 4
      %v2035 = vor.u32 %v2034, %v2030
      %v2036 = vrot.slane %v2035, 4
      %v2038 = vshll.u32 %v1751, 16
      %v2040 = vrot.slane %v2038, 5
      %v2041 = vsel %vm196, %v2036, %v2040
      %v2043 = vshrl.u32 %v1752, 16
      %v2045 = vrot.slane %v2043, 4
      %v2046 = vshll.u32 %v1752, 16
      %v2048 = vrot.slane %v2046, 5
      %v2049 = vor.u32 %v2045, %v2048
      %v2050 = vrot.slane %v2049, 4
      %v2052 = vshll.u32 %v1753, 16
      %v2054 = vrot.slane %v2052, 5
      %v2055 = vsel %vm196, %v2050, %v2054
      %v2056 = vshrl.u32 %v1753, 16
      %v2058 = vrot.slane %v2056, 4
      %v2059 = vor.u32 %v2058, %v2054
      %v2060 = vrot.slane %v2059, 4
      %v2062 = vshll.u32 %v1754, 16
      %v2064 = vrot.slane %v2062, 5
      %v2065 = vsel %vm196, %v2060, %v2064
      %v2067 = vshrl.u32 %v1755, 16
      %v2069 = vrot.slane %v2067, 4
      %v2070 = vshll.u32 %v1755, 16
      %v2072 = vrot.slane %v2070, 5
      %v2073 = vor.u32 %v2069, %v2072
      %v2074 = vrot.slane %v2073, 4
      %v2076 = vshll.u32 %v1756, 16
      %v2078 = vrot.slane %v2076, 5
      %v2079 = vsel %vm196, %v2074, %v2078
      %v2080 = vshrl.u32 %v1756, 16
      %v2082 = vrot.slane %v2080, 4
      %v2083 = vor.u32 %v2082, %v2078
      %v2084 = vrot.slane %v2083, 4
      %v2086 = vshll.u32 %v1757, 16
      %v2088 = vrot.slane %v2086, 5
      %v2089 = vsel %vm196, %v2084, %v2088
      %v2091 = vshrl.u32 %v1758, 16
      %v2093 = vrot.slane %v2091, 4
      %v2094 = vshll.u32 %v1758, 16
      %v2096 = vrot.slane %v2094, 5
      %v2097 = vor.u32 %v2093, %v2096
      %v2098 = vrot.slane %v2097, 4
      %v2100 = vshll.u32 %v1759, 16
      %v2102 = vrot.slane %v2100, 5
      %v2103 = vsel %vm196, %v2098, %v2102
      %v2104 = vshrl.u32 %v1759, 16
      %v2106 = vrot.slane %v2104, 4
      %v2107 = vor.u32 %v2106, %v2102
      %v2108 = vrot.slane %v2107, 4
      %v2110 = vshll.u32 %v1760, 16
      %v2112 = vrot.slane %v2110, 5
      %v2113 = vsel %vm196, %v2108, %v2112
      %v2115 = vshrl.u32 %v1761, 16
      %v2117 = vrot.slane %v2115, 4
      %v2118 = vshll.u32 %v1761, 16
      %v2120 = vrot.slane %v2118, 5
      %v2121 = vor.u32 %v2117, %v2120
      %v2122 = vrot.slane %v2121, 4
      %v2124 = vshll.u32 %v1762, 16
      %v2126 = vrot.slane %v2124, 5
      %v2127 = vsel %vm196, %v2122, %v2126
      %v2128 = vshrl.u32 %v1762, 16
      %v2130 = vrot.slane %v2128, 4
      %v2131 = vor.u32 %v2130, %v2126
      %v2132 = vrot.slane %v2131, 4
      %v2134 = vshll.u32 %v1763, 16
      %v2136 = vrot.slane %v2134, 5
      %v2137 = vsel %vm196, %v2132, %v2136
      %s2138 = scalar_lea.vmem %s1, 28
      %v2139 = vld [vmem:[%s2138] sm:$0xf]
      %v2140 = vunpack.c.l.b16 %v1959
      %v2141 = vunpack.c.l.b16 %v1969
      %v2142 = vunpack.c.l.b16 %v1983
      %v2143 = vunpack.c.l.b16 %v1993
      %v2144 = vunpack.c.l.b16 %v2007
      %v2145 = vunpack.c.l.b16 %v2017
      %v2146 = vunpack.c.l.b16 %v2031
      %v2147 = vunpack.c.l.b16 %v2041
      %v2148 = vunpack.c.l.b16 %v2055
      %v2149 = vunpack.c.l.b16 %v2065
      %v2150 = vunpack.c.l.b16 %v2079
      %v2151 = vunpack.c.l.b16 %v2089
      %v2152 = vunpack.c.l.b16 %v2103
      %v2153 = vunpack.c.l.b16 %v2113
      %v2154 = vunpack.c.l.b16 %v2127
      %v2155 = vunpack.c.l.b16 %v2137
      %v2156 = vpack.c.b16 %v2141, %v2140
      %v2157 = vpack.c.b16 %v2143, %v2142
      %v2158 = vpack.c.b16 %v2145, %v2144
      %v2159 = vpack.c.b16 %v2147, %v2146
      %v2160 = vpack.c.b16 %v2149, %v2148
      %v2161 = vpack.c.b16 %v2151, %v2150
      %v2162 = vpack.c.b16 %v2153, %v2152
      %v2163 = vpack.c.b16 %v2155, %v2154
      %v2165 = vsel %vm415, %v2156, 0
      %v2168 = vsel %vm415, %v2157, 0
      %v2171 = vsel %vm415, %v2158, 0
      %v2174 = vsel %vm415, %v2159, 0
      %v2177 = vsel %vm415, %v2160, 0
      %v2180 = vsel %vm415, %v2161, 0
      %v2183 = vsel %vm415, %v2162, 0
      %v2186 = vsel %vm415, %v2163, 0
      %v2189 = vsel %vm440, %v2139, 0
      %2191 = vmatprep.subr.bf16.mxu0 0
      %2192 = vmatpush1.bf16.msra.mxu0 %v2189
      %2193 = vmatprep.subr.bf16.mxu0 0
      %2194 = vmatpush1.bf16.msra.mxu0 0
      %2195 = vmatprep.subr.bf16.mxu0 0
      %2196 = vmatpush1.bf16.msra.mxu0 0
      %2197 = vmatprep.subr.bf16.mxu0 0
      %2198 = vmatpush1.bf16.msra.mxu0 0
      %2199 = vmatprep.subr.bf16.mxu0 0
      %2200 = vmatpush1.bf16.msra.mxu0 0
      %2201 = vmatprep.subr.bf16.mxu0 0
      %2202 = vmatpush1.bf16.msra.mxu0 0
      %2203 = vmatprep.subr.bf16.mxu0 0
      %2204 = vmatpush1.bf16.msra.mxu0 0
      %2205 = vmatprep.subr.bf16.mxu0 0
      %2206 = vmatpush1.bf16.msra.mxu0 0
      %2207 = vmatprep.subr.bf16.mxu0 0
      %2208 = vmatpush1.bf16.msra.mxu0 0
      %2209 = vmatprep.subr.bf16.mxu0 0
      %2210 = vmatpush1.bf16.msra.mxu0 0
      %2211 = vmatprep.subr.bf16.mxu0 0
      %2212 = vmatpush1.bf16.msra.mxu0 0
      %2213 = vmatprep.subr.bf16.mxu0 0
      %2214 = vmatpush1.bf16.msra.mxu0 0
      %2215 = vmatprep.subr.bf16.mxu0 0
      %2216 = vmatpush1.bf16.msra.mxu0 0
      %2217 = vmatprep.subr.bf16.mxu0 0
      %2218 = vmatpush1.bf16.msra.mxu0 0
      %2219 = vmatprep.subr.bf16.mxu0 0
      %2220 = vmatpush1.bf16.msra.mxu0 0
      %2221 = vmatprep.subr.bf16.mxu0 0
      %2222 = vmatpush1.bf16.msra.mxu0 0
      %2223 = vmatprep.mubr.bf16.mxu0 0
      %2224 = vmatmul.mubr.bf16.gmra.mrb[0].mxu0 %v2165
      %v2225 = vpop.f32.mrb[0].mxu0
      %v2226 = vadd.f32 0.0, %v2225
      %v2227 = vpop.f32.mrb[0].mxu0
      %v2228 = vpop.f32.mrb[0].mxu0
      %v2229 = vadd.f32 0.0, %v2228
      %v2230 = vpop.f32.mrb[0].mxu0
      %2231 = vmatprep.mubr.bf16.mxu0 0
      %2232 = vmatmul.mubr.bf16.gmra.mrb[0].mxu0 %v2168
      %v2233 = vpop.f32.mrb[0].mxu0
      %v2234 = vadd.f32 0.0, %v2233
      %v2235 = vpop.f32.mrb[0].mxu0
      %v2236 = vpop.f32.mrb[0].mxu0
      %v2237 = vadd.f32 0.0, %v2236
      %v2238 = vpop.f32.mrb[0].mxu0
      %2239 = vmatprep.mubr.bf16.mxu0 0
      %2240 = vmatmul.mubr.bf16.gmra.mrb[0].mxu0 %v2171
      %v2241 = vpop.f32.mrb[0].mxu0
      %v2242 = vadd.f32 0.0, %v2241
      %v2243 = vpop.f32.mrb[0].mxu0
      %v2244 = vpop.f32.mrb[0].mxu0
      %v2245 = vadd.f32 0.0, %v2244
      %v2246 = vpop.f32.mrb[0].mxu0
      %2247 = vmatprep.mubr.bf16.mxu0 0
      %2248 = vmatmul.mubr.bf16.gmra.mrb[0].mxu0 %v2174
      %v2249 = vpop.f32.mrb[0].mxu0
      %v2250 = vadd.f32 0.0, %v2249
      %v2251 = vpop.f32.mrb[0].mxu0
      %v2252 = vpop.f32.mrb[0].mxu0
      %v2253 = vadd.f32 0.0, %v2252
      %v2254 = vpop.f32.mrb[0].mxu0
      %2255 = vmatprep.mubr.bf16.mxu0 0
      %2256 = vmatmul.mubr.bf16.gmra.mrb[0].mxu0 %v2177
      %v2257 = vpop.f32.mrb[0].mxu0
      %v2258 = vadd.f32 0.0, %v2257
      %v2259 = vpop.f32.mrb[0].mxu0
      %v2260 = vpop.f32.mrb[0].mxu0
      %v2261 = vadd.f32 0.0, %v2260
      %v2262 = vpop.f32.mrb[0].mxu0
      %2263 = vmatprep.mubr.bf16.mxu0 0
      %2264 = vmatmul.mubr.bf16.gmra.mrb[0].mxu0 %v2180
      %v2265 = vpop.f32.mrb[0].mxu0
      %v2266 = vadd.f32 0.0, %v2265
      %v2267 = vpop.f32.mrb[0].mxu0
      %v2268 = vpop.f32.mrb[0].mxu0
      %v2269 = vadd.f32 0.0, %v2268
      %v2270 = vpop.f32.mrb[0].mxu0
      %2271 = vmatprep.mubr.bf16.mxu0 0
      %2272 = vmatmul.mubr.bf16.gmra.mrb[0].mxu0 %v2183
      %v2273 = vpop.f32.mrb[0].mxu0
      %v2274 = vadd.f32 0.0, %v2273
      %v2275 = vpop.f32.mrb[0].mxu0
      %v2276 = vpop.f32.mrb[0].mxu0
      %v2277 = vadd.f32 0.0, %v2276
      %v2278 = vpop.f32.mrb[0].mxu0
      %2279 = vmatprep.mubr.bf16.mxu0 0
      %2280 = vmatmul.mubr.bf16.gmra.mrb[0].mxu0 %v2186
      %v2281 = vpop.f32.mrb[0].mxu0
      %v2282 = vadd.f32 0.0, %v2281
      %v2283 = vpop.f32.mrb[0].mxu0
      %v2284 = vpop.f32.mrb[0].mxu0
      %v2285 = vadd.f32 0.0, %v2284
      %v2286 = vpop.f32.mrb[0].mxu0
      %2287 = vdwg.mxu0
      %v2288 = vadd.f32 %v1930, %v2226
      %v2289 = vadd.f32 %v1931, %v2229
      %v2290 = vadd.f32 %v1932, %v2234
      %v2291 = vadd.f32 %v1933, %v2237
      %v2292 = vadd.f32 %v1934, %v2242
      %v2293 = vadd.f32 %v1935, %v2245
      %v2294 = vadd.f32 %v1936, %v2250
      %v2295 = vadd.f32 %v1937, %v2253
      %v2296 = vadd.f32 %v1938, %v2258
      %v2297 = vadd.f32 %v1939, %v2261
      %v2298 = vadd.f32 %v1940, %v2266
      %v2299 = vadd.f32 %v1941, %v2269
      %v2300 = vadd.f32 %v1942, %v2274
      %v2301 = vadd.f32 %v1943, %v2277
      %v2302 = vadd.f32 %v1944, %v2282
      %v2303 = vadd.f32 %v1945, %v2285
      %v2312 = vrot.slane %v1740, 5
      %v2313 = vrot.slane %v2312, 4
      %v2314 = vrot.slane %v1741, 5
      %v2315 = vsel %vm715, %v2313, %v2314
      %v2316 = vrot.slane %v2314, 4
      %v2317 = vrot.slane %v1742, 5
      %v2318 = vsel %vm715, %v2316, %v2317
      %v2319 = vrot.slane %v1743, 5
      %v2320 = vrot.slane %v2319, 4
      %v2321 = vrot.slane %v1744, 5
      %v2322 = vsel %vm715, %v2320, %v2321
      %v2323 = vrot.slane %v2321, 4
      %v2324 = vrot.slane %v1745, 5
      %v2325 = vsel %vm715, %v2323, %v2324
      %v2326 = vrot.slane %v1746, 5
      %v2327 = vrot.slane %v2326, 4
      %v2328 = vrot.slane %v1747, 5
      %v2329 = vsel %vm715, %v2327, %v2328
      %v2330 = vrot.slane %v2328, 4
      %v2331 = vrot.slane %v1748, 5
      %v2332 = vsel %vm715, %v2330, %v2331
      %v2333 = vrot.slane %v1749, 5
      %v2334 = vrot.slane %v2333, 4
      %v2335 = vrot.slane %v1750, 5
      %v2336 = vsel %vm715, %v2334, %v2335
      %v2337 = vrot.slane %v2335, 4
      %v2338 = vrot.slane %v1751, 5
      %v2339 = vsel %vm715, %v2337, %v2338
      %v2340 = vrot.slane %v1752, 5
      %v2341 = vrot.slane %v2340, 4
      %v2342 = vrot.slane %v1753, 5
      %v2343 = vsel %vm715, %v2341, %v2342
      %v2344 = vrot.slane %v2342, 4
      %v2345 = vrot.slane %v1754, 5
      %v2346 = vsel %vm715, %v2344, %v2345
      %v2347 = vrot.slane %v1755, 5
      %v2348 = vrot.slane %v2347, 4
      %v2349 = vrot.slane %v1756, 5
      %v2350 = vsel %vm715, %v2348, %v2349
      %v2351 = vrot.slane %v2349, 4
      %v2352 = vrot.slane %v1757, 5
      %v2353 = vsel %vm715, %v2351, %v2352
      %v2354 = vrot.slane %v1758, 5
      %v2355 = vrot.slane %v2354, 4
      %v2356 = vrot.slane %v1759, 5
      %v2357 = vsel %vm715, %v2355, %v2356
      %v2358 = vrot.slane %v2356, 4
      %v2359 = vrot.slane %v1760, 5
      %v2360 = vsel %vm715, %v2358, %v2359
      %v2361 = vrot.slane %v1761, 5
      %v2362 = vrot.slane %v2361, 4
      %v2363 = vrot.slane %v1762, 5
      %v2364 = vsel %vm715, %v2362, %v2363
      %v2365 = vrot.slane %v2363, 4
      %v2366 = vrot.slane %v1763, 5
      %v2367 = vsel %vm715, %v2365, %v2366
      %s2368 = scalar_lea.vmem %s1, 32
      %v2369 = vld [vmem:[%s2368] sm:$0xf]
      %v2370 = vunpack.c.l.b16 %v2315
      %v2371 = vunpack.c.l.b16 %v2318
      %v2372 = vunpack.c.l.b16 %v2322
      %v2373 = vunpack.c.l.b16 %v2325
      %v2374 = vunpack.c.l.b16 %v2329
      %v2375 = vunpack.c.l.b16 %v2332
      %v2376 = vunpack.c.l.b16 %v2336
      %v2377 = vunpack.c.l.b16 %v2339
      %v2378 = vunpack.c.l.b16 %v2343
      %v2379 = vunpack.c.l.b16 %v2346
      %v2380 = vunpack.c.l.b16 %v2350
      %v2381 = vunpack.c.l.b16 %v2353
      %v2382 = vunpack.c.l.b16 %v2357
      %v2383 = vunpack.c.l.b16 %v2360
      %v2384 = vunpack.c.l.b16 %v2364
      %v2385 = vunpack.c.l.b16 %v2367
      %v2386 = vpack.c.b16 %v2371, %v2370
      %v2387 = vpack.c.b16 %v2373, %v2372
      %v2388 = vpack.c.b16 %v2375, %v2374
      %v2389 = vpack.c.b16 %v2377, %v2376
      %v2390 = vpack.c.b16 %v2379, %v2378
      %v2391 = vpack.c.b16 %v2381, %v2380
      %v2392 = vpack.c.b16 %v2383, %v2382
      %v2393 = vpack.c.b16 %v2385, %v2384
      %v2395 = vsel %vm415, %v2386, 0
      %v2398 = vsel %vm415, %v2387, 0
      %v2401 = vsel %vm415, %v2388, 0
      %v2404 = vsel %vm415, %v2389, 0
      %v2407 = vsel %vm415, %v2390, 0
      %v2410 = vsel %vm415, %v2391, 0
      %v2413 = vsel %vm415, %v2392, 0
      %v2416 = vsel %vm415, %v2393, 0
      %v2419 = vsel %vm440, %v2369, 0
      %2421 = vmatprep.subr.bf16.mxu0 0
      %2422 = vmatpush1.bf16.msra.mxu0 %v2419
      %2423 = vmatprep.subr.bf16.mxu0 0
      %2424 = vmatpush1.bf16.msra.mxu0 0
      %2425 = vmatprep.subr.bf16.mxu0 0
      %2426 = vmatpush1.bf16.msra.mxu0 0
      %2427 = vmatprep.subr.bf16.mxu0 0
      %2428 = vmatpush1.bf16.msra.mxu0 0
      %2429 = vmatprep.subr.bf16.mxu0 0
      %2430 = vmatpush1.bf16.msra.mxu0 0
      %2431 = vmatprep.subr.bf16.mxu0 0
      %2432 = vmatpush1.bf16.msra.mxu0 0
      %2433 = vmatprep.subr.bf16.mxu0 0
      %2434 = vmatpush1.bf16.msra.mxu0 0
      %2435 = vmatprep.subr.bf16.mxu0 0
      %2436 = vmatpush1.bf16.msra.mxu0 0
      %2437 = vmatprep.subr.bf16.mxu0 0
      %2438 = vmatpush1.bf16.msra.mxu0 0
      %2439 = vmatprep.subr.bf16.mxu0 0
      %2440 = vmatpush1.bf16.msra.mxu0 0
      %2441 = vmatprep.subr.bf16.mxu0 0
      %2442 = vmatpush1.bf16.msra.mxu0 0
      %2443 = vmatprep.subr.bf16.mxu0 0
      %2444 = vmatpush1.bf16.msra.mxu0 0
      %2445 = vmatprep.subr.bf16.mxu0 0
      %2446 = vmatpush1.bf16.msra.mxu0 0
      %2447 = vmatprep.subr.bf16.mxu0 0
      %2448 = vmatpush1.bf16.msra.mxu0 0
      %2449 = vmatprep.subr.bf16.mxu0 0
      %2450 = vmatpush1.bf16.msra.mxu0 0
      %2451 = vmatprep.subr.bf16.mxu0 0
      %2452 = vmatpush1.bf16.msra.mxu0 0
      %2453 = vmatprep.mubr.bf16.mxu0 0
      %2454 = vmatmul.mubr.bf16.gmra.mrb[0].mxu0 %v2395
      %v2455 = vpop.f32.mrb[0].mxu0
      %v2456 = vadd.f32 0.0, %v2455
      %v2457 = vpop.f32.mrb[0].mxu0
      %v2458 = vpop.f32.mrb[0].mxu0
      %v2459 = vadd.f32 0.0, %v2458
      %v2460 = vpop.f32.mrb[0].mxu0
      %2461 = vmatprep.mubr.bf16.mxu0 0
      %2462 = vmatmul.mubr.bf16.gmra.mrb[0].mxu0 %v2398
      %v2463 = vpop.f32.mrb[0].mxu0
      %v2464 = vadd.f32 0.0, %v2463
      %v2465 = vpop.f32.mrb[0].mxu0
      %v2466 = vpop.f32.mrb[0].mxu0
      %v2467 = vadd.f32 0.0, %v2466
      %v2468 = vpop.f32.mrb[0].mxu0
      %2469 = vmatprep.mubr.bf16.mxu0 0
      %2470 = vmatmul.mubr.bf16.gmra.mrb[0].mxu0 %v2401
      %v2471 = vpop.f32.mrb[0].mxu0
      %v2472 = vadd.f32 0.0, %v2471
      %v2473 = vpop.f32.mrb[0].mxu0
      %v2474 = vpop.f32.mrb[0].mxu0
      %v2475 = vadd.f32 0.0, %v2474
      %v2476 = vpop.f32.mrb[0].mxu0
      %2477 = vmatprep.mubr.bf16.mxu0 0
      %2478 = vmatmul.mubr.bf16.gmra.mrb[0].mxu0 %v2404
      %v2479 = vpop.f32.mrb[0].mxu0
      %v2480 = vadd.f32 0.0, %v2479
      %v2481 = vpop.f32.mrb[0].mxu0
      %v2482 = vpop.f32.mrb[0].mxu0
      %v2483 = vadd.f32 0.0, %v2482
      %v2484 = vpop.f32.mrb[0].mxu0
      %2485 = vmatprep.mubr.bf16.mxu0 0
      %2486 = vmatmul.mubr.bf16.gmra.mrb[0].mxu0 %v2407
      %v2487 = vpop.f32.mrb[0].mxu0
      %v2488 = vadd.f32 0.0, %v2487
      %v2489 = vpop.f32.mrb[0].mxu0
      %v2490 = vpop.f32.mrb[0].mxu0
      %v2491 = vadd.f32 0.0, %v2490
      %v2492 = vpop.f32.mrb[0].mxu0
      %2493 = vmatprep.mubr.bf16.mxu0 0
      %2494 = vmatmul.mubr.bf16.gmra.mrb[0].mxu0 %v2410
      %v2495 = vpop.f32.mrb[0].mxu0
      %v2496 = vadd.f32 0.0, %v2495
      %v2497 = vpop.f32.mrb[0].mxu0
      %v2498 = vpop.f32.mrb[0].mxu0
      %v2499 = vadd.f32 0.0, %v2498
      %v2500 = vpop.f32.mrb[0].mxu0
      %2501 = vmatprep.mubr.bf16.mxu0 0
      %2502 = vmatmul.mubr.bf16.gmra.mrb[0].mxu0 %v2413
      %v2503 = vpop.f32.mrb[0].mxu0
      %v2504 = vadd.f32 0.0, %v2503
      %v2505 = vpop.f32.mrb[0].mxu0
      %v2506 = vpop.f32.mrb[0].mxu0
      %v2507 = vadd.f32 0.0, %v2506
      %v2508 = vpop.f32.mrb[0].mxu0
      %2509 = vmatprep.mubr.bf16.mxu0 0
      %2510 = vmatmul.mubr.bf16.gmra.mrb[0].mxu0 %v2416
      %v2511 = vpop.f32.mrb[0].mxu0
      %v2512 = vadd.f32 0.0, %v2511
      %v2513 = vpop.f32.mrb[0].mxu0
      %v2514 = vpop.f32.mrb[0].mxu0
      %v2515 = vadd.f32 0.0, %v2514
      %v2516 = vpop.f32.mrb[0].mxu0
      %2517 = vdwg.mxu0
      %v2518 = vadd.f32 %v2288, %v2456
      %v2519 = vadd.f32 %v2289, %v2459
      %v2520 = vadd.f32 %v2290, %v2464
      %v2521 = vadd.f32 %v2291, %v2467
      %v2522 = vadd.f32 %v2292, %v2472
      %v2523 = vadd.f32 %v2293, %v2475
      %v2524 = vadd.f32 %v2294, %v2480
      %v2525 = vadd.f32 %v2295, %v2483
      %v2526 = vadd.f32 %v2296, %v2488
      %v2527 = vadd.f32 %v2297, %v2491
      %v2528 = vadd.f32 %v2298, %v2496
      %v2529 = vadd.f32 %v2299, %v2499
      %v2530 = vadd.f32 %v2300, %v2504
      %v2531 = vadd.f32 %v2301, %v2507
      %v2532 = vadd.f32 %v2302, %v2512
      %v2533 = vadd.f32 %v2303, %v2515
      %v2534 = vadd.f32 %v2518, %v2519
      %v2535 = vadd.f32 %v2534, %v2520
      %v2536 = vadd.f32 %v2535, %v2521
      %v2537 = vadd.f32 %v2536, %v2522
      %v2538 = vadd.f32 %v2537, %v2523
      %v2539 = vadd.f32 %v2538, %v2524
      %v2540 = vadd.f32 %v2539, %v2525
      %v2541 = vadd.f32 %v2540, %v2526
      %v2542 = vadd.f32 %v2541, %v2527
      %v2543 = vadd.f32 %v2542, %v2528
      %v2544 = vadd.f32 %v2543, %v2529
      %v2545 = vadd.f32 %v2544, %v2530
      %v2546 = vadd.f32 %v2545, %v2531
      %v2547 = vadd.f32 %v2546, %v2532
      %v2548 = vadd.f32 %v2547, %v2533
      %v2549 = vrot.slane %v2548, 4
      %v2550 = vadd.f32 %v2548, %v2549
      %v2551 = vrot.slane %v2550, 2
      %v2552 = vadd.f32 %v2550, %v2551
      %v2553 = vrot.slane %v2552, 1
      %v2554 = vadd.f32 %v2552, %v2553
      %v2555 = vmul.f32 %v2554, 0.0078125
      %v2556 = vsub.f32 %v2518, %v2555
      %v2557 = vsub.f32 %v2519, %v2555
      %v2558 = vsub.f32 %v2520, %v2555
      %v2559 = vsub.f32 %v2521, %v2555
      %v2560 = vsub.f32 %v2522, %v2555
      %v2561 = vsub.f32 %v2523, %v2555
      %v2562 = vsub.f32 %v2524, %v2555
      %v2563 = vsub.f32 %v2525, %v2555
      %v2564 = vsub.f32 %v2526, %v2555
      %v2565 = vsub.f32 %v2527, %v2555
      %v2566 = vsub.f32 %v2528, %v2555
      %v2567 = vsub.f32 %v2529, %v2555
      %v2568 = vsub.f32 %v2530, %v2555
      %v2569 = vsub.f32 %v2531, %v2555
      %v2570 = vsub.f32 %v2532, %v2555
      %v2571 = vsub.f32 %v2533, %v2555
      %v2572 = vmul.f32 %v2556, %v2556
      %v2573 = vmul.f32 %v2557, %v2557
      %v2574 = vmul.f32 %v2558, %v2558
      %v2575 = vmul.f32 %v2559, %v2559
      %v2576 = vmul.f32 %v2560, %v2560
      %v2577 = vmul.f32 %v2561, %v2561
      %v2578 = vmul.f32 %v2562, %v2562
      %v2579 = vmul.f32 %v2563, %v2563
      %v2580 = vmul.f32 %v2564, %v2564
      %v2581 = vmul.f32 %v2565, %v2565
      %v2582 = vmul.f32 %v2566, %v2566
      %v2583 = vmul.f32 %v2567, %v2567
      %v2584 = vmul.f32 %v2568, %v2568
      %v2585 = vmul.f32 %v2569, %v2569
      %v2586 = vmul.f32 %v2570, %v2570
      %v2587 = vmul.f32 %v2571, %v2571
      %v2588 = vadd.f32 %v2572, %v2573
      %v2589 = vadd.f32 %v2588, %v2574
      %v2590 = vadd.f32 %v2589, %v2575
      %v2591 = vadd.f32 %v2590, %v2576
      %v2592 = vadd.f32 %v2591, %v2577
      %v2593 = vadd.f32 %v2592, %v2578
      %v2594 = vadd.f32 %v2593, %v2579
      %v2595 = vadd.f32 %v2594, %v2580
      %v2596 = vadd.f32 %v2595, %v2581
      %v2597 = vadd.f32 %v2596, %v2582
      %v2598 = vadd.f32 %v2597, %v2583
      %v2599 = vadd.f32 %v2598, %v2584
      %v2600 = vadd.f32 %v2599, %v2585
      %v2601 = vadd.f32 %v2600, %v2586
      %v2602 = vadd.f32 %v2601, %v2587
      %v2603 = vrot.slane %v2602, 4
      %v2604 = vadd.f32 %v2602, %v2603
      %v2605 = vrot.slane %v2604, 2
      %v2606 = vadd.f32 %v2604, %v2605
      %v2607 = vrot.slane %v2606, 1
      %v2608 = vadd.f32 %v2606, %v2607
      %v2609 = vadd.f32 %v2555, 0.0
      %v2610 = vadd.f32 %v2608, 0.0
      %v2611 = vsub.f32 %v2555, %v2609
      %v2612 = vmul.f32 %v2611, %v2611
      %v2613 = vmul.f32 %v2612, 128.0
      %v2614 = vadd.f32 %v2610, %v2613
      %v2615 = vmul.f32 %v2609, 128.0
      %vm2616 = vcmask 1040384
      %v2617 = vsel %vm2616, %v2615, %v2614
      %vm2618 = vcmask 1041408
      %v2619 = vsel %vm2618, %v2617, 0.0
      %2620 = vst [vmem:[%s163] sm:$0xff] %v2619
      %p2621 = scmp.lt.s32.totalorder %s17, 1
      %s2622 = scalar_select %p2621, %s17, 1
      %p2623 = scmp.lt.s32.totalorder %s18, 1
      %s2624 = scalar_select %p2623, %s18, 1
      %s2625 = smul.addr %s2622, 2
      %s2626 = sadd.s32 %s2624, %s2625
      %s2627 = smul.addr %s2626, 8
      %s2628 = scalar_lea.vmem %s2, %s2627
      // Predicated region
      $region29: #{conv2d_cond_bn_relu.2} parent=27 // pred_check
        %p2629 = pneg %p92
      $region30: #{conv2d_cond_bn_relu.2} parent=27 // pred_check_branch
        %2631 = sbr.rel (%p2629) target = $region32
      $region31: #{conv2d_cond_bn_relu.2} parent=27 // pred_region
        _
      $region32: #{conv2d_cond_bn_relu.2} parent=27 // pred_fallthru
        _
    $region28: #{conv2d_cond_bn_relu.2} parent=5 // pred_fallthru
      _
    %p2632 = scmp.le.s32.totalorder 2, %s8
    // Predicated region
    $region33: #{conv2d_cond_bn_relu.2} parent=5 // pred_check
      %p2633 = pneg %p2632
    $region34: #{conv2d_cond_bn_relu.2} parent=5 // pred_check_branch
      %2635 = sbr.rel (%p2633) target = $region36
    $region35: #{conv2d_cond_bn_relu.2} parent=5 // pred_region
      %s2636 = ssub.s32 %s8, 2
      // Predicated region
      $region37: #{conv2d_cond_bn_relu.2} parent=35 // pred_check
        %p2637 = pneg %p98
      $region38: #{conv2d_cond_bn_relu.2} parent=35 // pred_check_branch
        %2639 = sbr.rel (%p2637) target = $region40
      $region39: #{conv2d_cond_bn_relu.2} parent=35 // pred_region
        %p2640 = scmp.lt.s32.totalorder %s19, 1
        %s2641 = scalar_select %p2640, %s19, 1
        %p2642 = scmp.lt.s32.totalorder %s20, 1
        %s2643 = scalar_select %p2642, %s20, 1
        %s2644 = smul.addr %s2641, 2
        %s2645 = sadd.s32 %s2643, %s2644
        %s2646 = smul.addr %s2645, 8
        %s2647 = scalar_lea.vmem %s2, %s2646
      $region40: #{conv2d_cond_bn_relu.2} parent=35 // pred_fallthru
        _
    $region36: #{conv2d_cond_bn_relu.2} parent=5 // pred_fallthru
      _
  $region6: #{conv2d_cond_bn_relu.2} parent=0 // loop_footer
    %s12 = sadd.s32 1, %s8
  $region7: #{conv2d_cond_bn_relu.2} parent=0 // loop_footer_branch
    %7 = sbr.rel target = $region3
  $region8: #{conv2d_cond_bn_relu.2} parent=0 // loop_exit
    _

// kernel: conv2d_cond_bn_relu.3
$region0: #{conv2d_cond_bn_relu.3}
  #allocation0 [shape = 'u32[]', space=smem, size = 0x4, offset = 0x4, fixed_abs, tag = 'smem constant byte address 0x4 - core index']
  #allocation1 [shape = 'u32[144,128]{1,0:T(1,128)}', space=vmem, size = 0x12000, scoped, tag = 'internal scratch']
  %s0 = inlined_call_operand.vmem [shape: bf16[2,18,18,8], index: 0, kind: input, shape index: {}]
  %s1 = inlined_call_operand.vmem [shape: bf16[9,8,128], index: 1, kind: input, shape index: {}]
  %s2 = inlined_call_operand.vmem [shape: f32[2,1,128], index: 2, kind: input, shape index: {}]
  %s3 = inlined_call_operand.vmem [shape: f32[2,1,128], index: 3, kind: input, shape index: {}]
  %s4 = inlined_call_operand.vmem [shape: f32[2,128,256], index: 4, kind: output, shape index: {}]
  %s5 = sld [smem:[#allocation0]]
  $region83: #{conv2d_cond_bn_relu.3} parent=0
    _
  %s7 = ssub.s32 1, %s5
  %s8 = scalar_select 0, %s7, %s5
  $region1: #{conv2d_cond_bn_relu.3} parent=0
    #allocation2 [shape = 'u8[131072]{0}', space=vmem, size = 0x20000, scoped, tag = 'output window, operand 0']
    loop: start=0, step=1, limit=6
    $region2: #{conv2d_cond_bn_relu.3} parent=1 // loop_pre_header
      _
    $region3: #{conv2d_cond_bn_relu.3} parent=1 // loop_header
      %s10 = sphi 0, %s14
      %p11 = scmp.ge.s32.totalorder %s10, 6
      %s17 = sphi 0, %s29
      %s18 = sphi 0, %s25
      %s19 = sphi 0, %s17
      %s20 = sphi 0, %s18
      %s21 = sphi 0, %s19
      %s22 = sphi 0, %s20
      %s32 = sphi 0, %s34
      %s35 = sphi 0, %s32
      %s36 = sphi 0, %s35
      %s52 = sphi 0, %s36
      %s56 = sphi 0, %s56
      %s58 = sphi 0, %s56
      %s59 = sphi 0, %s58
      %s73 = sphi 0, %s59
      %s79 = sphi 0, %s81
      %s82 = sphi 0, %s79
      %s83 = sphi 0, %s82
      %s99 = sphi 0, %s83
      %s105 = sphi 0, %s107
      %s108 = sphi 0, %s105
      %s109 = sphi 0, %s108
      %s125 = sphi 0, %s109
      %s133 = sphi 0, %s135
      %s136 = sphi 0, %s133
      %s137 = sphi 0, %s136
      %s153 = sphi 0, %s137
    $region4: #{conv2d_cond_bn_relu.3} parent=1 // loop_header_branch
      %13 = sbr.rel (%p11) target = $region8
    $region5: #{conv2d_cond_bn_relu.3} parent=1 // loop_body
      %s15 = ssub.s32 %s10, 1
      %s16 = ssub.s32 %s10, 2
      %s23 = sadd.s32 1, %s18
      %p24 = scmp.ge.s32.totalorder %s23, 2
      %s25 = scalar_select %p24, 0, %s23
      %s26 = sadd.s32 1, %s17
      %s27 = scalar_select %p24, %s26, %s17
      %p28 = scmp.ge.s32.totalorder %s27, 2
      %s29 = scalar_select %p28, 0, %s27
      %s30 = ssub.s32 %s17, %s29
      %p31 = scmp.eq.s32.totalorder %s30, 0
      %s33 = sadd.s32 %s32, 1
      %s34 = scalar_select %p31, %s32, %s33
      %p37 = pneg %p31
      %p38 = scmp.eq.s32.totalorder %s10, 3
      %p39 = por %p37, %p38
      %p40 = scmp.ne.s32.totalorder %s32, %s35
      %p41 = scmp.eq.s32.totalorder %s10, 0
      %p42 = por %p40, %p41
      %p43 = scmp.ne.s32.totalorder %s32, %s35
      %p44 = scmp.eq.s32.totalorder %s15, 3
      %p45 = por %p43, %p44
      %p46 = scmp.ne.s32.totalorder %s35, %s36
      %p47 = scmp.eq.s32.totalorder %s15, 0
      %p48 = por %p46, %p47
      %p49 = scmp.ne.s32.totalorder %s35, %s36
      %p50 = scmp.eq.s32.totalorder %s16, 3
      %p51 = por %p49, %p50
      %p53 = scmp.ne.s32.totalorder %s36, %s52
      %p54 = scmp.eq.s32.totalorder %s16, 0
      %p55 = por %p53, %p54
      %s57 = sadd.s32 %s56, 1
      %p60 = scmp.eq.s32.totalorder %s10, 3
      %p61 = scmp.ne.s32.totalorder %s56, %s58
      %p62 = scmp.eq.s32.totalorder %s10, 0
      %p63 = por %p61, %p62
      %p64 = scmp.ne.s32.totalorder %s56, %s58
      %p65 = scmp.eq.s32.totalorder %s15, 3
      %p66 = por %p64, %p65
      %p67 = scmp.ne.s32.totalorder %s58, %s59
      %p68 = scmp.eq.s32.totalorder %s15, 0
      %p69 = por %p67, %p68
      %p70 = scmp.ne.s32.totalorder %s58, %s59
      %p71 = scmp.eq.s32.totalorder %s16, 3
      %p72 = por %p70, %p71
      %p74 = scmp.ne.s32.totalorder %s59, %s73
      %p75 = scmp.eq.s32.totalorder %s16, 0
      %p76 = por %p74, %p75
      %s77 = ssub.s32 %s17, %s29
      %p78 = scmp.eq.s32.totalorder %s77, 0
      %s80 = sadd.s32 %s79, 1
      %s81 = scalar_select %p78, %s79, %s80
      %p84 = pneg %p78
      %p85 = scmp.eq.s32.totalorder %s10, 3
      %p86 = por %p84, %p85
      %p87 = scmp.ne.s32.totalorder %s79, %s82
      %p88 = scmp.eq.s32.totalorder %s10, 0
      %p89 = por %p87, %p88
      %p90 = scmp.ne.s32.totalorder %s79, %s82
      %p91 = scmp.eq.s32.totalorder %s15, 3
      %p92 = por %p90, %p91
      %p93 = scmp.ne.s32.totalorder %s82, %s83
      %p94 = scmp.eq.s32.totalorder %s15, 0
      %p95 = por %p93, %p94
      %p96 = scmp.ne.s32.totalorder %s82, %s83
      %p97 = scmp.eq.s32.totalorder %s16, 3
      %p98 = por %p96, %p97
      %p100 = scmp.ne.s32.totalorder %s83, %s99
      %p101 = scmp.eq.s32.totalorder %s16, 0
      %p102 = por %p100, %p101
      %s103 = ssub.s32 %s17, %s29
      %p104 = scmp.eq.s32.totalorder %s103, 0
      %s106 = sadd.s32 %s105, 1
      %s107 = scalar_select %p104, %s105, %s106
      %p110 = pneg %p104
      %p111 = scmp.eq.s32.totalorder %s10, 3
      %p112 = por %p110, %p111
      %p113 = scmp.ne.s32.totalorder %s105, %s108
      %p114 = scmp.eq.s32.totalorder %s10, 0
      %p115 = por %p113, %p114
      %p116 = scmp.ne.s32.totalorder %s105, %s108
      %p117 = scmp.eq.s32.totalorder %s15, 3
      %p118 = por %p116, %p117
      %p119 = scmp.ne.s32.totalorder %s108, %s109
      %p120 = scmp.eq.s32.totalorder %s15, 0
      %p121 = por %p119, %p120
      %p122 = scmp.ne.s32.totalorder %s108, %s109
      %p123 = scmp.eq.s32.totalorder %s16, 3
      %p124 = por %p122, %p123
      %p126 = scmp.ne.s32.totalorder %s109, %s125
      %p127 = scmp.eq.s32.totalorder %s16, 0
      %p128 = por %p126, %p127
      %s129 = ssub.s32 %s17, %s29
      %s130 = ssub.s32 %s18, %s25
      %s131 = sor.u32 %s129, %s130
      %p132 = scmp.eq.s32.totalorder %s131, 0
      %s134 = sadd.s32 %s133, 1
      %s135 = scalar_select %p132, %s133, %s134
      %p138 = pneg %p132
      %p139 = scmp.eq.s32.totalorder %s10, 3
      %p140 = por %p138, %p139
      %p141 = scmp.ne.s32.totalorder %s133, %s136
      %p142 = scmp.eq.s32.totalorder %s10, 0
      %p143 = por %p141, %p142
      %p144 = scmp.ne.s32.totalorder %s133, %s136
      %p145 = scmp.eq.s32.totalorder %s15, 3
      %p146 = por %p144, %p145
      %p147 = scmp.ne.s32.totalorder %s136, %s137
      %p148 = scmp.eq.s32.totalorder %s15, 0
      %p149 = por %p147, %p148
      %p150 = scmp.ne.s32.totalorder %s136, %s137
      %p151 = scmp.eq.s32.totalorder %s16, 3
      %p152 = por %p150, %p151
      %p154 = scmp.ne.s32.totalorder %s137, %s153
      %p155 = scmp.eq.s32.totalorder %s16, 0
      %p156 = por %p154, %p155
      %p157 = scmp.le.s32.totalorder 1, %s10
      %p158 = scmp.lt.s32.totalorder %s10, 5
      %p159 = pnand %p157, %p158
      %p160 = pneg %p159
      // Predicated region
      $region9: #{conv2d_cond_bn_relu.3} parent=5 // pred_check
        _
      $region10: #{conv2d_cond_bn_relu.3} parent=5 // pred_check_branch
        %162 = sbr.rel (%p159) target = $region12
      $region11: #{conv2d_cond_bn_relu.3} parent=5 // pred_region
        %s163 = ssub.s32 %s10, 1
        // Predicated region
        $region13: #{conv2d_cond_bn_relu.3} parent=11 // pred_check
          %p164 = pneg %p69
        $region14: #{conv2d_cond_bn_relu.3} parent=11 // pred_check_branch
          %166 = sbr.rel (%p164) target = $region16
        $region15: #{conv2d_cond_bn_relu.3} parent=11 // pred_region
          _
        $region16: #{conv2d_cond_bn_relu.3} parent=11 // pred_fallthru
          _
      $region12: #{conv2d_cond_bn_relu.3} parent=5 // pred_fallthru
        _
      %p167 = scmp.lt.s32.totalorder %s10, 4
      // Predicated region
      $region17: #{conv2d_cond_bn_relu.3} parent=5 // pred_check
        %p168 = pneg %p167
      $region18: #{conv2d_cond_bn_relu.3} parent=5 // pred_check_branch
        %170 = sbr.rel (%p168) target = $region20
      $region19: #{conv2d_cond_bn_relu.3} parent=5 // pred_region
        // Predicated region
        $region21: #{conv2d_cond_bn_relu.3} parent=19 // pred_check
          %p171 = pneg %p42
        $region22: #{conv2d_cond_bn_relu.3} parent=19 // pred_check_branch
          %173 = sbr.rel (%p171) target = $region24
        $region23: #{conv2d_cond_bn_relu.3} parent=19 // pred_region
          %p174 = scmp.lt.s32.totalorder %s17, 1
          %s175 = scalar_select %p174, %s17, 1
          %s176 = smul.addr %s175, 54
          %s177 = smul.addr %s176, 4
          %s178 = scalar_lea.vmem %s0, %s177
        $region24: #{conv2d_cond_bn_relu.3} parent=19 // pred_fallthru
          _
        // Predicated region
        $region25: #{conv2d_cond_bn_relu.3} parent=19 // pred_check
          %p179 = pneg %p89
        $region26: #{conv2d_cond_bn_relu.3} parent=19 // pred_check_branch
          %181 = sbr.rel (%p179) target = $region28
        $region27: #{conv2d_cond_bn_relu.3} parent=19 // pred_region
          %p182 = scmp.lt.s32.totalorder %s17, 1
          %s183 = scalar_select %p182, %s17, 1
          %s184 = scalar_lea.vmem %s2, %s183
        $region28: #{conv2d_cond_bn_relu.3} parent=19 // pred_fallthru
          _
        // Predicated region
        $region29: #{conv2d_cond_bn_relu.3} parent=19 // pred_check
          %p185 = pneg %p115
        $region30: #{conv2d_cond_bn_relu.3} parent=19 // pred_check_branch
          %187 = sbr.rel (%p185) target = $region32
        $region31: #{conv2d_cond_bn_relu.3} parent=19 // pred_region
          %p188 = scmp.lt.s32.totalorder %s17, 1
          %s189 = scalar_select %p188, %s17, 1
          %s190 = scalar_lea.vmem %s3, %s189
        $region32: #{conv2d_cond_bn_relu.3} parent=19 // pred_fallthru
          _
      $region20: #{conv2d_cond_bn_relu.3} parent=5 // pred_fallthru
        _
      %p191 = scmp.le.s32.totalorder 1, %s10
      %p192 = scmp.lt.s32.totalorder %s10, 5
      %p193 = pnand %p191, %p192
      %p194 = pneg %p193
      // Predicated region
      $region33: #{conv2d_cond_bn_relu.3} parent=5 // pred_check
        _
      $region34: #{conv2d_cond_bn_relu.3} parent=5 // pred_check_branch
        %196 = sbr.rel (%p193) target = $region36
      $region35: #{conv2d_cond_bn_relu.3} parent=5 // pred_region
        %s197 = ssub.s32 %s10, 1
        %p198 = scmp.lt.s32.totalorder %s19, 1
        %s199 = scalar_select %p198, %s19, 1
        %s200 = smul.addr %s199, 54
        %s201 = smul.addr %s200, 4
        %s202 = scalar_lea.vmem %s0, %s201
        %p203 = pneg %p48
        %p204 = pneg %p45
        %p205 = pneg %p69
        %p206 = pneg %p66
        %p207 = scmp.lt.s32.totalorder %s19, 1
        %s208 = scalar_select %p207, %s19, 1
        %s209 = scalar_lea.vmem %s2, %s208
        %p210 = pneg %p95
        %p211 = pneg %p92
        %p212 = scmp.lt.s32.totalorder %s19, 1
        %s213 = scalar_select %p212, %s19, 1
        %s214 = scalar_lea.vmem %s3, %s213
        %p215 = pneg %p121
        %p216 = pneg %p118
        %p217 = pneg %p149
        %p218 = pneg %p146
        %s219 = sand.u32 %s136, 1
        %s220 = sand.u32 %s136, 1
        %s221 = smul.addr %s220, 128
        %s222 = scalar_lea.vmem [#allocation2], %s221
        %p223 = scmp.lt.s32.totalorder %s19, 1
        %s224 = scalar_select %p223, %s19, 1
        %s225 = smul.addr %s224, 54
        %s226 = smul.addr %s225, 4
        %s227 = scalar_lea.vmem %s0, %s226
        %p228 = scmp.lt.s32.totalorder %s19, 1
        %s229 = scalar_select %p228, %s19, 1
        %s230 = scalar_lea.vmem %s2, %s229
        %p231 = scmp.lt.s32.totalorder %s19, 1
        %s232 = scalar_select %p231, %s19, 1
        %s233 = scalar_lea.vmem %s3, %s232
        %v235 = vld [vmem:[%s230] sm:$0x1]
        %v236 = vld [vmem:[%s233] sm:$0x1]
        %s237 = smul.u32 %s20, 8
        %s238 = smul.u32 %s237, 3
        %s239 = smul.addr %s238, 4
        %s240 = scalar_lea.vmem %s227, %s239
        %v241 = vld [vmem:[%s240] sm:$0xf]
        %v242 = vld [vmem:[%s240 + $0x4] sm:$0xf]
        %v243 = vld [vmem:[%s240 + $0x8] sm:$0x1]
        %v244 = vld [vmem:[%s240 + $0xc] sm:$0xf]
        %v245 = vld [vmem:[%s240 + $0x10] sm:$0xf]
        %v246 = vld [vmem:[%s240 + $0x14] sm:$0x1]
        %v247 = vld [vmem:[%s240 + $0x18] sm:$0xf]
        %v248 = vld [vmem:[%s240 + $0x1c] sm:$0xf]
        %v249 = vld [vmem:[%s240 + $0x20] sm:$0x1]
        %v250 = vld [vmem:[%s240 + $0x24] sm:$0xf]
        %v251 = vld [vmem:[%s240 + $0x28] sm:$0xf]
        %v252 = vld [vmem:[%s240 + $0x2c] sm:$0x1]
        %v253 = vld [vmem:[%s240 + $0x30] sm:$0xf]
        %v254 = vld [vmem:[%s240 + $0x34] sm:$0xf]
        %v255 = vld [vmem:[%s240 + $0x38] sm:$0x1]
        %v256 = vld [vmem:[%s240 + $0x3c] sm:$0xf]
        %v257 = vld [vmem:[%s240 + $0x40] sm:$0xf]
        %v258 = vld [vmem:[%s240 + $0x44] sm:$0x1]
        %v259 = vld [vmem:[%s240 + $0x48] sm:$0xf]
        %v260 = vld [vmem:[%s240 + $0x4c] sm:$0xf]
        %v261 = vld [vmem:[%s240 + $0x50] sm:$0x1]
        %v262 = vld [vmem:[%s240 + $0x54] sm:$0xf]
        %v263 = vld [vmem:[%s240 + $0x58] sm:$0xf]
        %v264 = vld [vmem:[%s240 + $0x5c] sm:$0x1]
        %v265 = vld [vmem:[%s1] sm:$0xf]
        %vm266 = vsmask.f32 3328
        %vm267 = vsmask.f32 7440
        %vm268 = vmor %vm266, %vm267
        %v270 = vshrl.u32 %v241, 16
        %v272 = vrot.slane %v270, 4
        %v273 = vshll.u32 %v241, 16
        %v275 = vrot.slane %v273, 5
        %v276 = vor.u32 %v272, %v275
        %v277 = vrot.slane %v276, 4
        %v279 = vshll.u32 %v242, 16
        %v281 = vrot.slane %v279, 5
        %v282 = vsel %vm268, %v277, %v281
        %v283 = vshrl.u32 %v242, 16
        %v285 = vrot.slane %v283, 4
        %v286 = vor.u32 %v285, %v281
        %v287 = vrot.slane %v286, 4
        %v289 = vshll.u32 %v243, 16
        %v291 = vrot.slane %v289, 5
        %v292 = vsel %vm268, %v287, %v291
        %v294 = vshrl.u32 %v244, 16
        %v296 = vrot.slane %v294, 4
        %v297 = vshll.u32 %v244, 16
        %v299 = vrot.slane %v297, 5
        %v300 = vor.u32 %v296, %v299
        %v301 = vrot.slane %v300, 4
        %v303 = vshll.u32 %v245, 16
        %v305 = vrot.slane %v303, 5
        %v306 = vsel %vm268, %v301, %v305
        %v307 = vshrl.u32 %v245, 16
        %v309 = vrot.slane %v307, 4
        %v310 = vor.u32 %v309, %v305
        %v311 = vrot.slane %v310, 4
        %v313 = vshll.u32 %v246, 16
        %v315 = vrot.slane %v313, 5
        %v316 = vsel %vm268, %v311, %v315
        %v318 = vshrl.u32 %v247, 16
        %v320 = vrot.slane %v318, 4
        %v321 = vshll.u32 %v247, 16
        %v323 = vrot.slane %v321, 5
        %v324 = vor.u32 %v320, %v323
        %v325 = vrot.slane %v324, 4
        %v327 = vshll.u32 %v248, 16
        %v329 = vrot.slane %v327, 5
        %v330 = vsel %vm268, %v325, %v329
        %v331 = vshrl.u32 %v248, 16
        %v333 = vrot.slane %v331, 4
        %v334 = vor.u32 %v333, %v329
        %v335 = vrot.slane %v334, 4
        %v337 = vshll.u32 %v249, 16
        %v339 = vrot.slane %v337, 5
        %v340 = vsel %vm268, %v335, %v339
        %v342 = vshrl.u32 %v250, 16
        %v344 = vrot.slane %v342, 4
        %v345 = vshll.u32 %v250, 16
        %v347 = vrot.slane %v345, 5
        %v348 = vor.u32 %v344, %v347
        %v349 = vrot.slane %v348, 4
        %v351 = vshll.u32 %v251, 16
        %v353 = vrot.slane %v351, 5
        %v354 = vsel %vm268, %v349, %v353
        %v355 = vshrl.u32 %v251, 16
        %v357 = vrot.slane %v355, 4
        %v358 = vor.u32 %v357, %v353
        %v359 = vrot.slane %v358, 4
        %v361 = vshll.u32 %v252, 16
        %v363 = vrot.slane %v361, 5
        %v364 = vsel %vm268, %v359, %v363
        %v366 = vshrl.u32 %v253, 16
        %v368 = vrot.slane %v366, 4
        %v369 = vshll.u32 %v253, 16
        %v371 = vrot.slane %v369, 5
        %v372 = vor.u32 %v368, %v371
        %v373 = vrot.slane %v372, 4
        %v375 = vshll.u32 %v254, 16
        %v377 = vrot.slane %v375, 5
        %v378 = vsel %vm268, %v373, %v377
        %v379 = vshrl.u32 %v254, 16
        %v381 = vrot.slane %v379, 4
        %v382 = vor.u32 %v381, %v377
        %v383 = vrot.slane %v382, 4
        %v385 = vshll.u32 %v255, 16
        %v387 = vrot.slane %v385, 5
        %v388 = vsel %vm268, %v383, %v387
        %v390 = vshrl.u32 %v256, 16
        %v392 = vrot.slane %v390, 4
        %v393 = vshll.u32 %v256, 16
        %v395 = vrot.slane %v393, 5
        %v396 = vor.u32 %v392, %v395
        %v397 = vrot.slane %v396, 4
        %v399 = vshll.u32 %v257, 16
        %v401 = vrot.slane %v399, 5
        %v402 = vsel %vm268, %v397, %v401
        %v403 = vshrl.u32 %v257, 16
        %v405 = vrot.slane %v403, 4
        %v406 = vor.u32 %v405, %v401
        %v407 = vrot.slane %v406, 4
        %v409 = vshll.u32 %v258, 16
        %v411 = vrot.slane %v409, 5
        %v412 = vsel %vm268, %v407, %v411
        %v414 = vshrl.u32 %v259, 16
        %v416 = vrot.slane %v414, 4
        %v417 = vshll.u32 %v259, 16
        %v419 = vrot.slane %v417, 5
        %v420 = vor.u32 %v416, %v419
        %v421 = vrot.slane %v420, 4
        %v423 = vshll.u32 %v260, 16
        %v425 = vrot.slane %v423, 5
        %v426 = vsel %vm268, %v421, %v425
        %v427 = vshrl.u32 %v260, 16
        %v429 = vrot.slane %v427, 4
        %v430 = vor.u32 %v429, %v425
        %v431 = vrot.slane %v430, 4
        %v433 = vshll.u32 %v261, 16
        %v435 = vrot.slane %v433, 5
        %v436 = vsel %vm268, %v431, %v435
        %v438 = vshrl.u32 %v262, 16
        %v440 = vrot.slane %v438, 4
        %v441 = vshll.u32 %v262, 16
        %v443 = vrot.slane %v441, 5
        %v444 = vor.u32 %v440, %v443
        %v445 = vrot.slane %v444, 4
        %v447 = vshll.u32 %v263, 16
        %v449 = vrot.slane %v447, 5
        %v450 = vsel %vm268, %v445, %v449
        %v451 = vshrl.u32 %v263, 16
        %v453 = vrot.slane %v451, 4
        %v454 = vor.u32 %v453, %v449
        %v455 = vrot.slane %v454, 4
        %v457 = vshll.u32 %v264, 16
        %v459 = vrot.slane %v457, 5
        %v460 = vsel %vm268, %v455, %v459
        %s461 = scalar_lea.vmem %s1, 4
        %v462 = vld [vmem:[%s461] sm:$0xf]
        %v463 = vunpack.c.l.b16 %v282
        %v464 = vunpack.c.l.b16 %v292
        %v465 = vunpack.c.l.b16 %v306
        %v466 = vunpack.c.l.b16 %v316
        %v467 = vunpack.c.l.b16 %v330
        %v468 = vunpack.c.l.b16 %v340
        %v469 = vunpack.c.l.b16 %v354
        %v470 = vunpack.c.l.b16 %v364
        %v471 = vunpack.c.l.b16 %v378
        %v472 = vunpack.c.l.b16 %v388
        %v473 = vunpack.c.l.b16 %v402
        %v474 = vunpack.c.l.b16 %v412
        %v475 = vunpack.c.l.b16 %v426
        %v476 = vunpack.c.l.b16 %v436
        %v477 = vunpack.c.l.b16 %v450
        %v478 = vunpack.c.l.b16 %v460
        %v479 = vpack.c.b16 %v464, %v463
        %v480 = vpack.c.b16 %v466, %v465
        %v481 = vpack.c.b16 %v468, %v467
        %v482 = vpack.c.b16 %v470, %v469
        %v483 = vpack.c.b16 %v472, %v471
        %v484 = vpack.c.b16 %v474, %v473
        %v485 = vpack.c.b16 %v476, %v475
        %v486 = vpack.c.b16 %v478, %v477
        %vm487 = vcmask 64512
        %v489 = vsel %vm487, %v479, 0
        %v492 = vsel %vm487, %v480, 0
        %v495 = vsel %vm487, %v481, 0
        %v498 = vsel %vm487, %v482, 0
        %v501 = vsel %vm487, %v483, 0
        %v504 = vsel %vm487, %v484, 0
        %v507 = vsel %vm487, %v485, 0
        %v510 = vsel %vm487, %v486, 0
        %vm512 = vcmask 1043456
        %v514 = vsel %vm512, %v462, 0
        %516 = vmatprep.subr.bf16.mxu0 0
        %517 = vmatpush1.bf16.msra.mxu0 %v514
        %518 = vmatprep.subr.bf16.mxu0 0
        %519 = vmatpush1.bf16.msra.mxu0 0
        %520 = vmatprep.subr.bf16.mxu0 0
        %521 = vmatpush1.bf16.msra.mxu0 0
        %522 = vmatprep.subr.bf16.mxu0 0
        %523 = vmatpush1.bf16.msra.mxu0 0
        %524 = vmatprep.subr.bf16.mxu0 0
        %525 = vmatpush1.bf16.msra.mxu0 0
        %526 = vmatprep.subr.bf16.mxu0 0
        %527 = vmatpush1.bf16.msra.mxu0 0
        %528 = vmatprep.subr.bf16.mxu0 0
        %529 = vmatpush1.bf16.msra.mxu0 0
        %530 = vmatprep.subr.bf16.mxu0 0
        %531 = vmatpush1.bf16.msra.mxu0 0
        %532 = vmatprep.subr.bf16.mxu0 0
        %533 = vmatpush1.bf16.msra.mxu0 0
        %534 = vmatprep.subr.bf16.mxu0 0
        %535 = vmatpush1.bf16.msra.mxu0 0
        %536 = vmatprep.subr.bf16.mxu0 0
        %537 = vmatpush1.bf16.msra.mxu0 0
        %538 = vmatprep.subr.bf16.mxu0 0
        %539 = vmatpush1.bf16.msra.mxu0 0
        %540 = vmatprep.subr.bf16.mxu0 0
        %541 = vmatpush1.bf16.msra.mxu0 0
        %542 = vmatprep.subr.bf16.mxu0 0
        %543 = vmatpush1.bf16.msra.mxu0 0
        %544 = vmatprep.subr.bf16.mxu0 0
        %545 = vmatpush1.bf16.msra.mxu0 0
        %546 = vmatprep.subr.bf16.mxu0 0
        %547 = vmatpush1.bf16.msra.mxu0 0
        %548 = vmatprep.mubr.bf16.mxu0 0
        %549 = vmatmul.mubr.bf16.gmra.mrb[0].mxu0 %v489
        %v550 = vpop.f32.mrb[0].mxu0
        %v551 = vadd.f32 0.0, %v550
        %v552 = vpop.f32.mrb[0].mxu0
        %v553 = vpop.f32.mrb[0].mxu0
        %v554 = vadd.f32 0.0, %v553
        %v555 = vpop.f32.mrb[0].mxu0
        %556 = vmatprep.mubr.bf16.mxu0 0
        %557 = vmatmul.mubr.bf16.gmra.mrb[0].mxu0 %v492
        %v558 = vpop.f32.mrb[0].mxu0
        %v559 = vadd.f32 0.0, %v558
        %v560 = vpop.f32.mrb[0].mxu0
        %v561 = vpop.f32.mrb[0].mxu0
        %v562 = vadd.f32 0.0, %v561
        %v563 = vpop.f32.mrb[0].mxu0
        %564 = vmatprep.mubr.bf16.mxu0 0
        %565 = vmatmul.mubr.bf16.gmra.mrb[0].mxu0 %v495
        %v566 = vpop.f32.mrb[0].mxu0
        %v567 = vadd.f32 0.0, %v566
        %v568 = vpop.f32.mrb[0].mxu0
        %v569 = vpop.f32.mrb[0].mxu0
        %v570 = vadd.f32 0.0, %v569
        %v571 = vpop.f32.mrb[0].mxu0
        %572 = vmatprep.mubr.bf16.mxu0 0
        %573 = vmatmul.mubr.bf16.gmra.mrb[0].mxu0 %v498
        %v574 = vpop.f32.mrb[0].mxu0
        %v575 = vadd.f32 0.0, %v574
        %v576 = vpop.f32.mrb[0].mxu0
        %v577 = vpop.f32.mrb[0].mxu0
        %v578 = vadd.f32 0.0, %v577
        %v579 = vpop.f32.mrb[0].mxu0
        %580 = vmatprep.mubr.bf16.mxu0 0
        %581 = vmatmul.mubr.bf16.gmra.mrb[0].mxu0 %v501
        %v582 = vpop.f32.mrb[0].mxu0
        %v583 = vadd.f32 0.0, %v582
        %v584 = vpop.f32.mrb[0].mxu0
        %v585 = vpop.f32.mrb[0].mxu0
        %v586 = vadd.f32 0.0, %v585
        %v587 = vpop.f32.mrb[0].mxu0
        %588 = vmatprep.mubr.bf16.mxu0 0
        %589 = vmatmul.mubr.bf16.gmra.mrb[0].mxu0 %v504
        %v590 = vpop.f32.mrb[0].mxu0
        %v591 = vadd.f32 0.0, %v590
        %v592 = vpop.f32.mrb[0].mxu0
        %v593 = vpop.f32.mrb[0].mxu0
        %v594 = vadd.f32 0.0, %v593
        %v595 = vpop.f32.mrb[0].mxu0
        %596 = vmatprep.mubr.bf16.mxu0 0
        %597 = vmatmul.mubr.bf16.gmra.mrb[0].mxu0 %v507
        %v598 = vpop.f32.mrb[0].mxu0
        %v599 = vadd.f32 0.0, %v598
        %v600 = vpop.f32.mrb[0].mxu0
        %v601 = vpop.f32.mrb[0].mxu0
        %v602 = vadd.f32 0.0, %v601
        %v603 = vpop.f32.mrb[0].mxu0
        %604 = vmatprep.mubr.bf16.mxu0 0
        %605 = vmatmul.mubr.bf16.gmra.mrb[0].mxu0 %v510
        %v606 = vpop.f32.mrb[0].mxu0
        %v607 = vadd.f32 0.0, %v606
        %v608 = vpop.f32.mrb[0].mxu0
        %v609 = vpop.f32.mrb[0].mxu0
        %v610 = vadd.f32 0.0, %v609
        %v611 = vpop.f32.mrb[0].mxu0
        %612 = vdwg.mxu0
        %v629 = vunpack.c.l.b16 %v241
        %v630 = vunpack.c.l.b16 %v242
        %v631 = vunpack.c.l.b16 %v244
        %v632 = vunpack.c.l.b16 %v245
        %v633 = vunpack.c.l.b16 %v247
        %v634 = vunpack.c.l.b16 %v248
        %v635 = vunpack.c.l.b16 %v250
        %v636 = vunpack.c.l.b16 %v251
        %v637 = vunpack.c.l.b16 %v253
        %v638 = vunpack.c.l.b16 %v254
        %v639 = vunpack.c.l.b16 %v256
        %v640 = vunpack.c.l.b16 %v257
        %v641 = vunpack.c.l.b16 %v259
        %v642 = vunpack.c.l.b16 %v260
        %v643 = vunpack.c.l.b16 %v262
        %v644 = vunpack.c.l.b16 %v263
        %v645 = vpack.c.b16 %v630, %v629
        %v646 = vpack.c.b16 %v632, %v631
        %v647 = vpack.c.b16 %v634, %v633
        %v648 = vpack.c.b16 %v636, %v635
        %v649 = vpack.c.b16 %v638, %v637
        %v650 = vpack.c.b16 %v640, %v639
        %v651 = vpack.c.b16 %v642, %v641
        %v652 = vpack.c.b16 %v644, %v643
        %v654 = vsel %vm487, %v645, 0
        %v657 = vsel %vm487, %v646, 0
        %v660 = vsel %vm487, %v647, 0
        %v663 = vsel %vm487, %v648, 0
        %v666 = vsel %vm487, %v649, 0
        %v669 = vsel %vm487, %v650, 0
        %v672 = vsel %vm487, %v651, 0
        %v675 = vsel %vm487, %v652, 0
        %v678 = vsel %vm512, %v265, 0
        %680 = vmatprep.subr.bf16.mxu0 0
        %681 = vmatpush1.bf16.msra.mxu0 %v678
        %682 = vmatprep.subr.bf16.mxu0 0
        %683 = vmatpush1.bf16.msra.mxu0 0
        %684 = vmatprep.subr.bf16.mxu0 0
        %685 = vmatpush1.bf16.msra.mxu0 0
        %686 = vmatprep.subr.bf16.mxu0 0
        %687 = vmatpush1.bf16.msra.mxu0 0
        %688 = vmatprep.subr.bf16.mxu0 0
        %689 = vmatpush1.bf16.msra.mxu0 0
        %690 = vmatprep.subr.bf16.mxu0 0
        %691 = vmatpush1.bf16.msra.mxu0 0
        %692 = vmatprep.subr.bf16.mxu0 0
        %693 = vmatpush1.bf16.msra.mxu0 0
        %694 = vmatprep.subr.bf16.mxu0 0
        %695 = vmatpush1.bf16.msra.mxu0 0
        %696 = vmatprep.subr.bf16.mxu0 0
        %697 = vmatpush1.bf16.msra.mxu0 0
        %698 = vmatprep.subr.bf16.mxu0 0
        %699 = vmatpush1.bf16.msra.mxu0 0
        %700 = vmatprep.subr.bf16.mxu0 0
        %701 = vmatpush1.bf16.msra.mxu0 0
        %702 = vmatprep.subr.bf16.mxu0 0
        %703 = vmatpush1.bf16.msra.mxu0 0
        %704 = vmatprep.subr.bf16.mxu0 0
        %705 = vmatpush1.bf16.msra.mxu0 0
        %706 = vmatprep.subr.bf16.mxu0 0
        %707 = vmatpush1.bf16.msra.mxu0 0
        %708 = vmatprep.subr.bf16.mxu0 0
        %709 = vmatpush1.bf16.msra.mxu0 0
        %710 = vmatprep.subr.bf16.mxu0 0
        %711 = vmatpush1.bf16.msra.mxu0 0
        %712 = vmatprep.mubr.bf16.mxu0 0
        %713 = vmatmul.mubr.bf16.gmra.mrb[0].mxu0 %v654
        %v714 = vpop.f32.mrb[0].mxu0
        %v715 = vadd.f32 %v551, %v714
        %v716 = vpop.f32.mrb[0].mxu0
        %v717 = vpop.f32.mrb[0].mxu0
        %v718 = vadd.f32 %v554, %v717
        %v719 = vpop.f32.mrb[0].mxu0
        %720 = vmatprep.mubr.bf16.mxu0 0
        %721 = vmatmul.mubr.bf16.gmra.mrb[0].mxu0 %v657
        %v722 = vpop.f32.mrb[0].mxu0
        %v723 = vadd.f32 %v559, %v722
        %v724 = vpop.f32.mrb[0].mxu0
        %v725 = vpop.f32.mrb[0].mxu0
        %v726 = vadd.f32 %v562, %v725
        %v727 = vpop.f32.mrb[0].mxu0
        %728 = vmatprep.mubr.bf16.mxu0 0
        %729 = vmatmul.mubr.bf16.gmra.mrb[0].mxu0 %v660
        %v730 = vpop.f32.mrb[0].mxu0
        %v731 = vadd.f32 %v567, %v730
        %v732 = vpop.f32.mrb[0].mxu0
        %v733 = vpop.f32.mrb[0].mxu0
        %v734 = vadd.f32 %v570, %v733
        %v735 = vpop.f32.mrb[0].mxu0
        %736 = vmatprep.mubr.bf16.mxu0 0
        %737 = vmatmul.mubr.bf16.gmra.mrb[0].mxu0 %v663
        %v738 = vpop.f32.mrb[0].mxu0
        %v739 = vadd.f32 %v575, %v738
        %v740 = vpop.f32.mrb[0].mxu0
        %v741 = vpop.f32.mrb[0].mxu0
        %v742 = vadd.f32 %v578, %v741
        %v743 = vpop.f32.mrb[0].mxu0
        %744 = vmatprep.mubr.bf16.mxu0 0
        %745 = vmatmul.mubr.bf16.gmra.mrb[0].mxu0 %v666
        %v746 = vpop.f32.mrb[0].mxu0
        %v747 = vadd.f32 %v583, %v746
        %v748 = vpop.f32.mrb[0].mxu0
        %v749 = vpop.f32.mrb[0].mxu0
        %v750 = vadd.f32 %v586, %v749
        %v751 = vpop.f32.mrb[0].mxu0
        %752 = vmatprep.mubr.bf16.mxu0 0
        %753 = vmatmul.mubr.bf16.gmra.mrb[0].mxu0 %v669
        %v754 = vpop.f32.mrb[0].mxu0
        %v755 = vadd.f32 %v591, %v754
        %v756 = vpop.f32.mrb[0].mxu0
        %v757 = vpop.f32.mrb[0].mxu0
        %v758 = vadd.f32 %v594, %v757
        %v759 = vpop.f32.mrb[0].mxu0
        %760 = vmatprep.mubr.bf16.mxu0 0
        %761 = vmatmul.mubr.bf16.gmra.mrb[0].mxu0 %v672
        %v762 = vpop.f32.mrb[0].mxu0
        %v763 = vadd.f32 %v599, %v762
        %v764 = vpop.f32.mrb[0].mxu0
        %v765 = vpop.f32.mrb[0].mxu0
        %v766 = vadd.f32 %v602, %v765
        %v767 = vpop.f32.mrb[0].mxu0
        %768 = vmatprep.mubr.bf16.mxu0 0
        %769 = vmatmul.mubr.bf16.gmra.mrb[0].mxu0 %v675
        %v770 = vpop.f32.mrb[0].mxu0
        %v771 = vadd.f32 %v607, %v770
        %v772 = vpop.f32.mrb[0].mxu0
        %v773 = vpop.f32.mrb[0].mxu0
        %v774 = vadd.f32 %v610, %v773
        %v775 = vpop.f32.mrb[0].mxu0
        %776 = vdwg.mxu0
        %vm785 = vcmask 1042432
        %vm786 = vcmask 1046532
        %vm787 = vmor %vm785, %vm786
        %v788 = vrot.slane %v241, 5
        %v789 = vrot.slane %v788, 4
        %v790 = vrot.slane %v242, 5
        %v791 = vsel %vm787, %v789, %v790
        %v792 = vrot.slane %v790, 4
        %v793 = vrot.slane %v243, 5
        %v794 = vsel %vm787, %v792, %v793
        %v795 = vrot.slane %v244, 5
        %v796 = vrot.slane %v795, 4
        %v797 = vrot.slane %v245, 5
        %v798 = vsel %vm787, %v796, %v797
        %v799 = vrot.slane %v797, 4
        %v800 = vrot.slane %v246, 5
        %v801 = vsel %vm787, %v799, %v800
        %v802 = vrot.slane %v247, 5
        %v803 = vrot.slane %v802, 4
        %v804 = vrot.slane %v248, 5
        %v805 = vsel %vm787, %v803, %v804
        %v806 = vrot.slane %v804, 4
        %v807 = vrot.slane %v249, 5
        %v808 = vsel %vm787, %v806, %v807
        %v809 = vrot.slane %v250, 5
        %v810 = vrot.slane %v809, 4
        %v811 = vrot.slane %v251, 5
        %v812 = vsel %vm787, %v810, %v811
        %v813 = vrot.slane %v811, 4
        %v814 = vrot.slane %v252, 5
        %v815 = vsel %vm787, %v813, %v814
        %v816 = vrot.slane %v253, 5
        %v817 = vrot.slane %v816, 4
        %v818 = vrot.slane %v254, 5
        %v819 = vsel %vm787, %v817, %v818
        %v820 = vrot.slane %v818, 4
        %v821 = vrot.slane %v255, 5
        %v822 = vsel %vm787, %v820, %v821
        %v823 = vrot.slane %v256, 5
        %v824 = vrot.slane %v823, 4
        %v825 = vrot.slane %v257, 5
        %v826 = vsel %vm787, %v824, %v825
        %v827 = vrot.slane %v825, 4
        %v828 = vrot.slane %v258, 5
        %v829 = vsel %vm787, %v827, %v828
        %v830 = vrot.slane %v259, 5
        %v831 = vrot.slane %v830, 4
        %v832 = vrot.slane %v260, 5
        %v833 = vsel %vm787, %v831, %v832
        %v834 = vrot.slane %v832, 4
        %v835 = vrot.slane %v261, 5
        %v836 = vsel %vm787, %v834, %v835
        %v837 = vrot.slane %v262, 5
        %v838 = vrot.slane %v837, 4
        %v839 = vrot.slane %v263, 5
        %v840 = vsel %vm787, %v838, %v839
        %v841 = vrot.slane %v839, 4
        %v842 = vrot.slane %v264, 5
        %v843 = vsel %vm787, %v841, %v842
        %s844 = scalar_lea.vmem %s1, 8
        %v845 = vld [vmem:[%s844] sm:$0xf]
        %v846 = vunpack.c.l.b16 %v791
        %v847 = vunpack.c.l.b16 %v794
        %v848 = vunpack.c.l.b16 %v798
        %v849 = vunpack.c.l.b16 %v801
        %v850 = vunpack.c.l.b16 %v805
        %v851 = vunpack.c.l.b16 %v808
        %v852 = vunpack.c.l.b16 %v812
        %v853 = vunpack.c.l.b16 %v815
        %v854 = vunpack.c.l.b16 %v819
        %v855 = vunpack.c.l.b16 %v822
        %v856 = vunpack.c.l.b16 %v826
        %v857 = vunpack.c.l.b16 %v829
        %v858 = vunpack.c.l.b16 %v833
        %v859 = vunpack.c.l.b16 %v836
        %v860 = vunpack.c.l.b16 %v840
        %v861 = vunpack.c.l.b16 %v843
        %v862 = vpack.c.b16 %v847, %v846
        %v863 = vpack.c.b16 %v849, %v848
        %v864 = vpack.c.b16 %v851, %v850
        %v865 = vpack.c.b16 %v853, %v852
        %v866 = vpack.c.b16 %v855, %v854
        %v867 = vpack.c.b16 %v857, %v856
        %v868 = vpack.c.b16 %v859, %v858
        %v869 = vpack.c.b16 %v861, %v860
        %v871 = vsel %vm487, %v862, 0
        %v874 = vsel %vm487, %v863, 0
        %v877 = vsel %vm487, %v864, 0
        %v880 = vsel %vm487, %v865, 0
        %v883 = vsel %vm487, %v866, 0
        %v886 = vsel %vm487, %v867, 0
        %v889 = vsel %vm487, %v868, 0
        %v892 = vsel %vm487, %v869, 0
        %v895 = vsel %vm512, %v845, 0
        %897 = vmatprep.subr.bf16.mxu0 0
        %898 = vmatpush1.bf16.msra.mxu0 %v895
        %899 = vmatprep.subr.bf16.mxu0 0
        %900 = vmatpush1.bf16.msra.mxu0 0
        %901 = vmatprep.subr.bf16.mxu0 0
        %902 = vmatpush1.bf16.msra.mxu0 0
        %903 = vmatprep.subr.bf16.mxu0 0
        %904 = vmatpush1.bf16.msra.mxu0 0
        %905 = vmatprep.subr.bf16.mxu0 0
        %906 = vmatpush1.bf16.msra.mxu0 0
        %907 = vmatprep.subr.bf16.mxu0 0
        %908 = vmatpush1.bf16.msra.mxu0 0
        %909 = vmatprep.subr.bf16.mxu0 0
        %910 = vmatpush1.bf16.msra.mxu0 0
        %911 = vmatprep.subr.bf16.mxu0 0
        %912 = vmatpush1.bf16.msra.mxu0 0
        %913 = vmatprep.subr.bf16.mxu0 0
        %914 = vmatpush1.bf16.msra.mxu0 0
        %915 = vmatprep.subr.bf16.mxu0 0
        %916 = vmatpush1.bf16.msra.mxu0 0
        %917 = vmatprep.subr.bf16.mxu0 0
        %918 = vmatpush1.bf16.msra.mxu0 0
        %919 = vmatprep.subr.bf16.mxu0 0
        %920 = vmatpush1.bf16.msra.mxu0 0
        %921 = vmatprep.subr.bf16.mxu0 0
        %922 = vmatpush1.bf16.msra.mxu0 0
        %923 = vmatprep.subr.bf16.mxu0 0
        %924 = vmatpush1.bf16.msra.mxu0 0
        %925 = vmatprep.subr.bf16.mxu0 0
        %926 = vmatpush1.bf16.msra.mxu0 0
        %927 = vmatprep.subr.bf16.mxu0 0
        %928 = vmatpush1.bf16.msra.mxu0 0
        %929 = vmatprep.mubr.bf16.mxu0 0
        %930 = vmatmul.mubr.bf16.gmra.mrb[0].mxu0 %v871
        %v931 = vpop.f32.mrb[0].mxu0
        %v932 = vadd.f32 0.0, %v931
        %v933 = vpop.f32.mrb[0].mxu0
        %v934 = vpop.f32.mrb[0].mxu0
        %v935 = vadd.f32 0.0, %v934
        %v936 = vpop.f32.mrb[0].mxu0
        %937 = vmatprep.mubr.bf16.mxu0 0
        %938 = vmatmul.mubr.bf16.gmra.mrb[0].mxu0 %v874
        %v939 = vpop.f32.mrb[0].mxu0
        %v940 = vadd.f32 0.0, %v939
        %v941 = vpop.f32.mrb[0].mxu0
        %v942 = vpop.f32.mrb[0].mxu0
        %v943 = vadd.f32 0.0, %v942
        %v944 = vpop.f32.mrb[0].mxu0
        %945 = vmatprep.mubr.bf16.mxu0 0
        %946 = vmatmul.mubr.bf16.gmra.mrb[0].mxu0 %v877
        %v947 = vpop.f32.mrb[0].mxu0
        %v948 = vadd.f32 0.0, %v947
        %v949 = vpop.f32.mrb[0].mxu0
        %v950 = vpop.f32.mrb[0].mxu0
        %v951 = vadd.f32 0.0, %v950
        %v952 = vpop.f32.mrb[0].mxu0
        %953 = vmatprep.mubr.bf16.mxu0 0
        %954 = vmatmul.mubr.bf16.gmra.mrb[0].mxu0 %v880
        %v955 = vpop.f32.mrb[0].mxu0
        %v956 = vadd.f32 0.0, %v955
        %v957 = vpop.f32.mrb[0].mxu0
        %v958 = vpop.f32.mrb[0].mxu0
        %v959 = vadd.f32 0.0, %v958
        %v960 = vpop.f32.mrb[0].mxu0
        %961 = vmatprep.mubr.bf16.mxu0 0
        %962 = vmatmul.mubr.bf16.gmra.mrb[0].mxu0 %v883
        %v963 = vpop.f32.mrb[0].mxu0
        %v964 = vadd.f32 0.0, %v963
        %v965 = vpop.f32.mrb[0].mxu0
        %v966 = vpop.f32.mrb[0].mxu0
        %v967 = vadd.f32 0.0, %v966
        %v968 = vpop.f32.mrb[0].mxu0
        %969 = vmatprep.mubr.bf16.mxu0 0
        %970 = vmatmul.mubr.bf16.gmra.mrb[0].mxu0 %v886
        %v971 = vpop.f32.mrb[0].mxu0
        %v972 = vadd.f32 0.0, %v971
        %v973 = vpop.f32.mrb[0].mxu0
        %v974 = vpop.f32.mrb[0].mxu0
        %v975 = vadd.f32 0.0, %v974
        %v976 = vpop.f32.mrb[0].mxu0
        %977 = vmatprep.mubr.bf16.mxu0 0
        %978 = vmatmul.mubr.bf16.gmra.mrb[0].mxu0 %v889
        %v979 = vpop.f32.mrb[0].mxu0
        %v980 = vadd.f32 0.0, %v979
        %v981 = vpop.f32.mrb[0].mxu0
        %v982 = vpop.f32.mrb[0].mxu0
        %v983 = vadd.f32 0.0, %v982
        %v984 = vpop.f32.mrb[0].mxu0
        %985 = vmatprep.mubr.bf16.mxu0 0
        %986 = vmatmul.mubr.bf16.gmra.mrb[0].mxu0 %v892
        %v987 = vpop.f32.mrb[0].mxu0
        %v988 = vadd.f32 0.0, %v987
        %v989 = vpop.f32.mrb[0].mxu0
        %v990 = vpop.f32.mrb[0].mxu0
        %v991 = vadd.f32 0.0, %v990
        %v992 = vpop.f32.mrb[0].mxu0
        %993 = vdwg.mxu0
        %v994 = vadd.f32 %v715, %v932
        %v995 = vadd.f32 %v718, %v935
        %v996 = vadd.f32 %v723, %v940
        %v997 = vadd.f32 %v726, %v943
        %v998 = vadd.f32 %v731, %v948
        %v999 = vadd.f32 %v734, %v951
        %v1000 = vadd.f32 %v739, %v956
        %v1001 = vadd.f32 %v742, %v959
        %v1002 = vadd.f32 %v747, %v964
        %v1003 = vadd.f32 %v750, %v967
        %v1004 = vadd.f32 %v755, %v972
        %v1005 = vadd.f32 %v758, %v975
        %v1006 = vadd.f32 %v763, %v980
        %v1007 = vadd.f32 %v766, %v983
        %v1008 = vadd.f32 %v771, %v988
        %v1009 = vadd.f32 %v774, %v991
        %s1010 = sadd.s32 %s237, 1
        %s1011 = smul.u32 %s1010, 3
        %s1012 = smul.addr %s1011, 4
        %s1013 = scalar_lea.vmem %s227, %s1012
        %v1014 = vld [vmem:[%s1013] sm:$0xf]
        %v1015 = vld [vmem:[%s1013 + $0x4] sm:$0xf]
        %v1016 = vld [vmem:[%s1013 + $0x8] sm:$0x1]
        %v1017 = vld [vmem:[%s1013 + $0xc] sm:$0xf]
        %v1018 = vld [vmem:[%s1013 + $0x10] sm:$0xf]
        %v1019 = vld [vmem:[%s1013 + $0x14] sm:$0x1]
        %v1020 = vld [vmem:[%s1013 + $0x18] sm:$0xf]
        %v1021 = vld [vmem:[%s1013 + $0x1c] sm:$0xf]
        %v1022 = vld [vmem:[%s1013 + $0x20] sm:$0x1]
        %v1023 = vld [vmem:[%s1013 + $0x24] sm:$0xf]
        %v1024 = vld [vmem:[%s1013 + $0x28] sm:$0xf]
        %v1025 = vld [vmem:[%s1013 + $0x2c] sm:$0x1]
        %v1026 = vld [vmem:[%s1013 + $0x30] sm:$0xf]
        %v1027 = vld [vmem:[%s1013 + $0x34] sm:$0xf]
        %v1028 = vld [vmem:[%s1013 + $0x38] sm:$0x1]
        %v1029 = vld [vmem:[%s1013 + $0x3c] sm:$0xf]
        %v1030 = vld [vmem:[%s1013 + $0x40] sm:$0xf]
        %v1031 = vld [vmem:[%s1013 + $0x44] sm:$0x1]
        %v1032 = vld [vmem:[%s1013 + $0x48] sm:$0xf]
        %v1033 = vld [vmem:[%s1013 + $0x4c] sm:$0xf]
        %v1034 = vld [vmem:[%s1013 + $0x50] sm:$0x1]
        %v1035 = vld [vmem:[%s1013 + $0x54] sm:$0xf]
        %v1036 = vld [vmem:[%s1013 + $0x58] sm:$0xf]
        %v1037 = vld [vmem:[%s1013 + $0x5c] sm:$0x1]
        %s1038 = scalar_lea.vmem %s1, 12
        %v1039 = vld [vmem:[%s1038] sm:$0xf]
        %v1056 = vunpack.c.l.b16 %v1014
        %v1057 = vunpack.c.l.b16 %v1015
        %v1058 = vunpack.c.l.b16 %v1017
        %v1059 = vunpack.c.l.b16 %v1018
        %v1060 = vunpack.c.l.b16 %v1020
        %v1061 = vunpack.c.l.b16 %v1021
        %v1062 = vunpack.c.l.b16 %v1023
        %v1063 = vunpack.c.l.b16 %v1024
        %v1064 = vunpack.c.l.b16 %v1026
        %v1065 = vunpack.c.l.b16 %v1027
        %v1066 = vunpack.c.l.b16 %v1029
        %v1067 = vunpack.c.l.b16 %v1030
        %v1068 = vunpack.c.l.b16 %v1032
        %v1069 = vunpack.c.l.b16 %v1033
        %v1070 = vunpack.c.l.b16 %v1035
        %v1071 = vunpack.c.l.b16 %v1036
        %v1072 = vpack.c.b16 %v1057, %v1056
        %v1073 = vpack.c.b16 %v1059, %v1058
        %v1074 = vpack.c.b16 %v1061, %v1060
        %v1075 = vpack.c.b16 %v1063, %v1062
        %v1076 = vpack.c.b16 %v1065, %v1064
        %v1077 = vpack.c.b16 %v1067, %v1066
        %v1078 = vpack.c.b16 %v1069, %v1068
        %v1079 = vpack.c.b16 %v1071, %v1070
        %v1081 = vsel %vm487, %v1072, 0
        %v1084 = vsel %vm487, %v1073, 0
        %v1087 = vsel %vm487, %v1074, 0
        %v1090 = vsel %vm487, %v1075, 0
        %v1093 = vsel %vm487, %v1076, 0
        %v1096 = vsel %vm487, %v1077, 0
        %v1099 = vsel %vm487, %v1078, 0
        %v1102 = vsel %vm487, %v1079, 0
        %v1105 = vsel %vm512, %v1039, 0
        %1107 = vmatprep.subr.bf16.mxu0 0
        %1108 = vmatpush1.bf16.msra.mxu0 %v1105
        %1109 = vmatprep.subr.bf16.mxu0 0
        %1110 = vmatpush1.bf16.msra.mxu0 0
        %1111 = vmatprep.subr.bf16.mxu0 0
        %1112 = vmatpush1.bf16.msra.mxu0 0
        %1113 = vmatprep.subr.bf16.mxu0 0
        %1114 = vmatpush1.bf16.msra.mxu0 0
        %1115 = vmatprep.subr.bf16.mxu0 0
        %1116 = vmatpush1.bf16.msra.mxu0 0
        %1117 = vmatprep.subr.bf16.mxu0 0
        %1118 = vmatpush1.bf16.msra.mxu0 0
        %1119 = vmatprep.subr.bf16.mxu0 0
        %1120 = vmatpush1.bf16.msra.mxu0 0
        %1121 = vmatprep.subr.bf16.mxu0 0
        %1122 = vmatpush1.bf16.msra.mxu0 0
        %1123 = vmatprep.subr.bf16.mxu0 0
        %1124 = vmatpush1.bf16.msra.mxu0 0
        %1125 = vmatprep.subr.bf16.mxu0 0
        %1126 = vmatpush1.bf16.msra.mxu0 0
        %1127 = vmatprep.subr.bf16.mxu0 0
        %1128 = vmatpush1.bf16.msra.mxu0 0
        %1129 = vmatprep.subr.bf16.mxu0 0
        %1130 = vmatpush1.bf16.msra.mxu0 0
        %1131 = vmatprep.subr.bf16.mxu0 0
        %1132 = vmatpush1.bf16.msra.mxu0 0
        %1133 = vmatprep.subr.bf16.mxu0 0
        %1134 = vmatpush1.bf16.msra.mxu0 0
        %1135 = vmatprep.subr.bf16.mxu0 0
        %1136 = vmatpush1.bf16.msra.mxu0 0
        %1137 = vmatprep.subr.bf16.mxu0 0
        %1138 = vmatpush1.bf16.msra.mxu0 0
        %1139 = vmatprep.mubr.bf16.mxu0 0
        %1140 = vmatmul.mubr.bf16.gmra.mrb[0].mxu0 %v1081
        %v1141 = vpop.f32.mrb[0].mxu0
        %v1142 = vadd.f32 0.0, %v1141
        %v1143 = vpop.f32.mrb[0].mxu0
        %v1144 = vpop.f32.mrb[0].mxu0
        %v1145 = vadd.f32 0.0, %v1144
        %v1146 = vpop.f32.mrb[0].mxu0
        %1147 = vmatprep.mubr.bf16.mxu0 0
        %1148 = vmatmul.mubr.bf16.gmra.mrb[0].mxu0 %v1084
        %v1149 = vpop.f32.mrb[0].mxu0
        %v1150 = vadd.f32 0.0, %v1149
        %v1151 = vpop.f32.mrb[0].mxu0
        %v1152 = vpop.f32.mrb[0].mxu0
        %v1153 = vadd.f32 0.0, %v1152
        %v1154 = vpop.f32.mrb[0].mxu0
        %1155 = vmatprep.mubr.bf16.mxu0 0
        %1156 = vmatmul.mubr.bf16.gmra.mrb[0].mxu0 %v1087
        %v1157 = vpop.f32.mrb[0].mxu0
        %v1158 = vadd.f32 0.0, %v1157
        %v1159 = vpop.f32.mrb[0].mxu0
        %v1160 = vpop.f32.mrb[0].mxu0
        %v1161 = vadd.f32 0.0, %v1160
        %v1162 = vpop.f32.mrb[0].mxu0
        %1163 = vmatprep.mubr.bf16.mxu0 0
        %1164 = vmatmul.mubr.bf16.gmra.mrb[0].mxu0 %v1090
        %v1165 = vpop.f32.mrb[0].mxu0
        %v1166 = vadd.f32 0.0, %v1165
        %v1167 = vpop.f32.mrb[0].mxu0
        %v1168 = vpop.f32.mrb[0].mxu0
        %v1169 = vadd.f32 0.0, %v1168
        %v1170 = vpop.f32.mrb[0].mxu0
        %1171 = vmatprep.mubr.bf16.mxu0 0
        %1172 = vmatmul.mubr.bf16.gmra.mrb[0].mxu0 %v1093
        %v1173 = vpop.f32.mrb[0].mxu0
        %v1174 = vadd.f32 0.0, %v1173
        %v1175 = vpop.f32.mrb[0].mxu0
        %v1176 = vpop.f32.mrb[0].mxu0
        %v1177 = vadd.f32 0.0, %v1176
        %v1178 = vpop.f32.mrb[0].mxu0
        %1179 = vmatprep.mubr.bf16.mxu0 0
        %1180 = vmatmul.mubr.bf16.gmra.mrb[0].mxu0 %v1096
        %v1181 = vpop.f32.mrb[0].mxu0
        %v1182 = vadd.f32 0.0, %v1181
        %v1183 = vpop.f32.mrb[0].mxu0
        %v1184 = vpop.f32.mrb[0].mxu0
        %v1185 = vadd.f32 0.0, %v1184
        %v1186 = vpop.f32.mrb[0].mxu0
        %1187 = vmatprep.mubr.bf16.mxu0 0
        %1188 = vmatmul.mubr.bf16.gmra.mrb[0].mxu0 %v1099
        %v1189 = vpop.f32.mrb[0].mxu0
        %v1190 = vadd.f32 0.0, %v1189
        %v1191 = vpop.f32.mrb[0].mxu0
        %v1192 = vpop.f32.mrb[0].mxu0
        %v1193 = vadd.f32 0.0, %v1192
        %v1194 = vpop.f32.mrb[0].mxu0
        %1195 = vmatprep.mubr.bf16.mxu0 0
        %1196 = vmatmul.mubr.bf16.gmra.mrb[0].mxu0 %v1102
        %v1197 = vpop.f32.mrb[0].mxu0
        %v1198 = vadd.f32 0.0, %v1197
        %v1199 = vpop.f32.mrb[0].mxu0
        %v1200 = vpop.f32.mrb[0].mxu0
        %v1201 = vadd.f32 0.0, %v1200
        %v1202 = vpop.f32.mrb[0].mxu0
        %1203 = vdwg.mxu0
        %v1204 = vadd.f32 %v994, %v1142
        %v1205 = vadd.f32 %v995, %v1145
        %v1206 = vadd.f32 %v996, %v1150
        %v1207 = vadd.f32 %v997, %v1153
        %v1208 = vadd.f32 %v998, %v1158
        %v1209 = vadd.f32 %v999, %v1161
        %v1210 = vadd.f32 %v1000, %v1166
        %v1211 = vadd.f32 %v1001, %v1169
        %v1212 = vadd.f32 %v1002, %v1174
        %v1213 = vadd.f32 %v1003, %v1177
        %v1214 = vadd.f32 %v1004, %v1182
        %v1215 = vadd.f32 %v1005, %v1185
        %v1216 = vadd.f32 %v1006, %v1190
        %v1217 = vadd.f32 %v1007, %v1193
        %v1218 = vadd.f32 %v1008, %v1198
        %v1219 = vadd.f32 %v1009, %v1201
        %v1221 = vshrl.u32 %v1014, 16
        %v1223 = vrot.slane %v1221, 4
        %v1224 = vshll.u32 %v1014, 16
        %v1226 = vrot.slane %v1224, 5
        %v1227 = vor.u32 %v1223, %v1226
        %v1228 = vrot.slane %v1227, 4
        %v1230 = vshll.u32 %v1015, 16
        %v1232 = vrot.slane %v1230, 5
        %v1233 = vsel %vm268, %v1228, %v1232
        %v1234 = vshrl.u32 %v1015, 16
        %v1236 = vrot.slane %v1234, 4
        %v1237 = vor.u32 %v1236, %v1232
        %v1238 = vrot.slane %v1237, 4
        %v1240 = vshll.u32 %v1016, 16
        %v1242 = vrot.slane %v1240, 5
        %v1243 = vsel %vm268, %v1238, %v1242
        %v1245 = vshrl.u32 %v1017, 16
        %v1247 = vrot.slane %v1245, 4
        %v1248 = vshll.u32 %v1017, 16
        %v1250 = vrot.slane %v1248, 5
        %v1251 = vor.u32 %v1247, %v1250
        %v1252 = vrot.slane %v1251, 4
        %v1254 = vshll.u32 %v1018, 16
        %v1256 = vrot.slane %v1254, 5
        %v1257 = vsel %vm268, %v1252, %v1256
        %v1258 = vshrl.u32 %v1018, 16
        %v1260 = vrot.slane %v1258, 4
        %v1261 = vor.u32 %v1260, %v1256
        %v1262 = vrot.slane %v1261, 4
        %v1264 = vshll.u32 %v1019, 16
        %v1266 = vrot.slane %v1264, 5
        %v1267 = vsel %vm268, %v1262, %v1266
        %v1269 = vshrl.u32 %v1020, 16
        %v1271 = vrot.slane %v1269, 4
        %v1272 = vshll.u32 %v1020, 16
        %v1274 = vrot.slane %v1272, 5
        %v1275 = vor.u32 %v1271, %v1274
        %v1276 = vrot.slane %v1275, 4
        %v1278 = vshll.u32 %v1021, 16
        %v1280 = vrot.slane %v1278, 5
        %v1281 = vsel %vm268, %v1276, %v1280
        %v1282 = vshrl.u32 %v1021, 16
        %v1284 = vrot.slane %v1282, 4
        %v1285 = vor.u32 %v1284, %v1280
        %v1286 = vrot.slane %v1285, 4
        %v1288 = vshll.u32 %v1022, 16
        %v1290 = vrot.slane %v1288, 5
        %v1291 = vsel %vm268, %v1286, %v1290
        %v1293 = vshrl.u32 %v1023, 16
        %v1295 = vrot.slane %v1293, 4
        %v1296 = vshll.u32 %v1023, 16
        %v1298 = vrot.slane %v1296, 5
        %v1299 = vor.u32 %v1295, %v1298
        %v1300 = vrot.slane %v1299, 4
        %v1302 = vshll.u32 %v1024, 16
        %v1304 = vrot.slane %v1302, 5
        %v1305 = vsel %vm268, %v1300, %v1304
        %v1306 = vshrl.u32 %v1024, 16
        %v1308 = vrot.slane %v1306, 4
        %v1309 = vor.u32 %v1308, %v1304
        %v1310 = vrot.slane %v1309, 4
        %v1312 = vshll.u32 %v1025, 16
        %v1314 = vrot.slane %v1312, 5
        %v1315 = vsel %vm268, %v1310, %v1314
        %v1317 = vshrl.u32 %v1026, 16
        %v1319 = vrot.slane %v1317, 4
        %v1320 = vshll.u32 %v1026, 16
        %v1322 = vrot.slane %v1320, 5
        %v1323 = vor.u32 %v1319, %v1322
        %v1324 = vrot.slane %v1323, 4
        %v1326 = vshll.u32 %v1027, 16
        %v1328 = vrot.slane %v1326, 5
        %v1329 = vsel %vm268, %v1324, %v1328
        %v1330 = vshrl.u32 %v1027, 16
        %v1332 = vrot.slane %v1330, 4
        %v1333 = vor.u32 %v1332, %v1328
        %v1334 = vrot.slane %v1333, 4
        %v1336 = vshll.u32 %v1028, 16
        %v1338 = vrot.slane %v1336, 5
        %v1339 = vsel %vm268, %v1334, %v1338
        %v1341 = vshrl.u32 %v1029, 16
        %v1343 = vrot.slane %v1341, 4
        %v1344 = vshll.u32 %v1029, 16
        %v1346 = vrot.slane %v1344, 5
        %v1347 = vor.u32 %v1343, %v1346
        %v1348 = vrot.slane %v1347, 4
        %v1350 = vshll.u32 %v1030, 16
        %v1352 = vrot.slane %v1350, 5
        %v1353 = vsel %vm268, %v1348, %v1352
        %v1354 = vshrl.u32 %v1030, 16
        %v1356 = vrot.slane %v1354, 4
        %v1357 = vor.u32 %v1356, %v1352
        %v1358 = vrot.slane %v1357, 4
        %v1360 = vshll.u32 %v1031, 16
        %v1362 = vrot.slane %v1360, 5
        %v1363 = vsel %vm268, %v1358, %v1362
        %v1365 = vshrl.u32 %v1032, 16
        %v1367 = vrot.slane %v1365, 4
        %v1368 = vshll.u32 %v1032, 16
        %v1370 = vrot.slane %v1368, 5
        %v1371 = vor.u32 %v1367, %v1370
        %v1372 = vrot.slane %v1371, 4
        %v1374 = vshll.u32 %v1033, 16
        %v1376 = vrot.slane %v1374, 5
        %v1377 = vsel %vm268, %v1372, %v1376
        %v1378 = vshrl.u32 %v1033, 16
        %v1380 = vrot.slane %v1378, 4
        %v1381 = vor.u32 %v1380, %v1376
        %v1382 = vrot.slane %v1381, 4
        %v1384 = vshll.u32 %v1034, 16
        %v1386 = vrot.slane %v1384, 5
        %v1387 = vsel %vm268, %v1382, %v1386
        %v1389 = vshrl.u32 %v1035, 16
        %v1391 = vrot.slane %v1389, 4
        %v1392 = vshll.u32 %v1035, 16
        %v1394 = vrot.slane %v1392, 5
        %v1395 = vor.u32 %v1391, %v1394
        %v1396 = vrot.slane %v1395, 4
        %v1398 = vshll.u32 %v1036, 16
        %v1400 = vrot.slane %v1398, 5
        %v1401 = vsel %vm268, %v1396, %v1400
        %v1402 = vshrl.u32 %v1036, 16
        %v1404 = vrot.slane %v1402, 4
        %v1405 = vor.u32 %v1404, %v1400
        %v1406 = vrot.slane %v1405, 4
        %v1408 = vshll.u32 %v1037, 16
        %v1410 = vrot.slane %v1408, 5
        %v1411 = vsel %vm268, %v1406, %v1410
        %s1412 = scalar_lea.vmem %s1, 16
        %v1413 = vld [vmem:[%s1412] sm:$0xf]
        %v1414 = vunpack.c.l.b16 %v1233
        %v1415 = vunpack.c.l.b16 %v1243
        %v1416 = vunpack.c.l.b16 %v1257
        %v1417 = vunpack.c.l.b16 %v1267
        %v1418 = vunpack.c.l.b16 %v1281
        %v1419 = vunpack.c.l.b16 %v1291
        %v1420 = vunpack.c.l.b16 %v1305
        %v1421 = vunpack.c.l.b16 %v1315
        %v1422 = vunpack.c.l.b16 %v1329
        %v1423 = vunpack.c.l.b16 %v1339
        %v1424 = vunpack.c.l.b16 %v1353
        %v1425 = vunpack.c.l.b16 %v1363
        %v1426 = vunpack.c.l.b16 %v1377
        %v1427 = vunpack.c.l.b16 %v1387
        %v1428 = vunpack.c.l.b16 %v1401
        %v1429 = vunpack.c.l.b16 %v1411
        %v1430 = vpack.c.b16 %v1415, %v1414
        %v1431 = vpack.c.b16 %v1417, %v1416
        %v1432 = vpack.c.b16 %v1419, %v1418
        %v1433 = vpack.c.b16 %v1421, %v1420
        %v1434 = vpack.c.b16 %v1423, %v1422
        %v1435 = vpack.c.b16 %v1425, %v1424
        %v1436 = vpack.c.b16 %v1427, %v1426
        %v1437 = vpack.c.b16 %v1429, %v1428
        %v1439 = vsel %vm487, %v1430, 0
        %v1442 = vsel %vm487, %v1431, 0
        %v1445 = vsel %vm487, %v1432, 0
        %v1448 = vsel %vm487, %v1433, 0
        %v1451 = vsel %vm487, %v1434, 0
        %v1454 = vsel %vm487, %v1435, 0
        %v1457 = vsel %vm487, %v1436, 0
        %v1460 = vsel %vm487, %v1437, 0
        %v1463 = vsel %vm512, %v1413, 0
        %1465 = vmatprep.subr.bf16.mxu0 0
        %1466 = vmatpush1.bf16.msra.mxu0 %v1463
        %1467 = vmatprep.subr.bf16.mxu0 0
        %1468 = vmatpush1.bf16.msra.mxu0 0
        %1469 = vmatprep.subr.bf16.mxu0 0
        %1470 = vmatpush1.bf16.msra.mxu0 0
        %1471 = vmatprep.subr.bf16.mxu0 0
        %1472 = vmatpush1.bf16.msra.mxu0 0
        %1473 = vmatprep.subr.bf16.mxu0 0
        %1474 = vmatpush1.bf16.msra.mxu0 0
        %1475 = vmatprep.subr.bf16.mxu0 0
        %1476 = vmatpush1.bf16.msra.mxu0 0
        %1477 = vmatprep.subr.bf16.mxu0 0
        %1478 = vmatpush1.bf16.msra.mxu0 0
        %1479 = vmatprep.subr.bf16.mxu0 0
        %1480 = vmatpush1.bf16.msra.mxu0 0
        %1481 = vmatprep.subr.bf16.mxu0 0
        %1482 = vmatpush1.bf16.msra.mxu0 0
        %1483 = vmatprep.subr.bf16.mxu0 0
        %1484 = vmatpush1.bf16.msra.mxu0 0
        %1485 = vmatprep.subr.bf16.mxu0 0
        %1486 = vmatpush1.bf16.msra.mxu0 0
        %1487 = vmatprep.subr.bf16.mxu0 0
        %1488 = vmatpush1.bf16.msra.mxu0 0
        %1489 = vmatprep.subr.bf16.mxu0 0
        %1490 = vmatpush1.bf16.msra.mxu0 0
        %1491 = vmatprep.subr.bf16.mxu0 0
        %1492 = vmatpush1.bf16.msra.mxu0 0
        %1493 = vmatprep.subr.bf16.mxu0 0
        %1494 = vmatpush1.bf16.msra.mxu0 0
        %1495 = vmatprep.subr.bf16.mxu0 0
        %1496 = vmatpush1.bf16.msra.mxu0 0
        %1497 = vmatprep.mubr.bf16.mxu0 0
        %1498 = vmatmul.mubr.bf16.gmra.mrb[0].mxu0 %v1439
        %v1499 = vpop.f32.mrb[0].mxu0
        %v1500 = vadd.f32 0.0, %v1499
        %v1501 = vpop.f32.mrb[0].mxu0
        %v1502 = vpop.f32.mrb[0].mxu0
        %v1503 = vadd.f32 0.0, %v1502
        %v1504 = vpop.f32.mrb[0].mxu0
        %1505 = vmatprep.mubr.bf16.mxu0 0
        %1506 = vmatmul.mubr.bf16.gmra.mrb[0].mxu0 %v1442
        %v1507 = vpop.f32.mrb[0].mxu0
        %v1508 = vadd.f32 0.0, %v1507
        %v1509 = vpop.f32.mrb[0].mxu0
        %v1510 = vpop.f32.mrb[0].mxu0
        %v1511 = vadd.f32 0.0, %v1510
        %v1512 = vpop.f32.mrb[0].mxu0
        %1513 = vmatprep.mubr.bf16.mxu0 0
        %1514 = vmatmul.mubr.bf16.gmra.mrb[0].mxu0 %v1445
        %v1515 = vpop.f32.mrb[0].mxu0
        %v1516 = vadd.f32 0.0, %v1515
        %v1517 = vpop.f32.mrb[0].mxu0
        %v1518 = vpop.f32.mrb[0].mxu0
        %v1519 = vadd.f32 0.0, %v1518
        %v1520 = vpop.f32.mrb[0].mxu0
        %1521 = vmatprep.mubr.bf16.mxu0 0
        %1522 = vmatmul.mubr.bf16.gmra.mrb[0].mxu0 %v1448
        %v1523 = vpop.f32.mrb[0].mxu0
        %v1524 = vadd.f32 0.0, %v1523
        %v1525 = vpop.f32.mrb[0].mxu0
        %v1526 = vpop.f32.mrb[0].mxu0
        %v1527 = vadd.f32 0.0, %v1526
        %v1528 = vpop.f32.mrb[0].mxu0
        %1529 = vmatprep.mubr.bf16.mxu0 0
        %1530 = vmatmul.mubr.bf16.gmra.mrb[0].mxu0 %v1451
        %v1531 = vpop.f32.mrb[0].mxu0
        %v1532 = vadd.f32 0.0, %v1531
        %v1533 = vpop.f32.mrb[0].mxu0
        %v1534 = vpop.f32.mrb[0].mxu0
        %v1535 = vadd.f32 0.0, %v1534
        %v1536 = vpop.f32.mrb[0].mxu0
        %1537 = vmatprep.mubr.bf16.mxu0 0
        %1538 = vmatmul.mubr.bf16.gmra.mrb[0].mxu0 %v1454
        %v1539 = vpop.f32.mrb[0].mxu0
        %v1540 = vadd.f32 0.0, %v1539
        %v1541 = vpop.f32.mrb[0].mxu0
        %v1542 = vpop.f32.mrb[0].mxu0
        %v1543 = vadd.f32 0.0, %v1542
        %v1544 = vpop.f32.mrb[0].mxu0
        %1545 = vmatprep.mubr.bf16.mxu0 0
        %1546 = vmatmul.mubr.bf16.gmra.mrb[0].mxu0 %v1457
        %v1547 = vpop.f32.mrb[0].mxu0
        %v1548 = vadd.f32 0.0, %v1547
        %v1549 = vpop.f32.mrb[0].mxu0
        %v1550 = vpop.f32.mrb[0].mxu0
        %v1551 = vadd.f32 0.0, %v1550
        %v1552 = vpop.f32.mrb[0].mxu0
        %1553 = vmatprep.mubr.bf16.mxu0 0
        %1554 = vmatmul.mubr.bf16.gmra.mrb[0].mxu0 %v1460
        %v1555 = vpop.f32.mrb[0].mxu0
        %v1556 = vadd.f32 0.0, %v1555
        %v1557 = vpop.f32.mrb[0].mxu0
        %v1558 = vpop.f32.mrb[0].mxu0
        %v1559 = vadd.f32 0.0, %v1558
        %v1560 = vpop.f32.mrb[0].mxu0
        %1561 = vdwg.mxu0
        %v1562 = vadd.f32 %v1204, %v1500
        %v1563 = vadd.f32 %v1205, %v1503
        %v1564 = vadd.f32 %v1206, %v1508
        %v1565 = vadd.f32 %v1207, %v1511
        %v1566 = vadd.f32 %v1208, %v1516
        %v1567 = vadd.f32 %v1209, %v1519
        %v1568 = vadd.f32 %v1210, %v1524
        %v1569 = vadd.f32 %v1211, %v1527
        %v1570 = vadd.f32 %v1212, %v1532
        %v1571 = vadd.f32 %v1213, %v1535
        %v1572 = vadd.f32 %v1214, %v1540
        %v1573 = vadd.f32 %v1215, %v1543
        %v1574 = vadd.f32 %v1216, %v1548
        %v1575 = vadd.f32 %v1217, %v1551
        %v1576 = vadd.f32 %v1218, %v1556
        %v1577 = vadd.f32 %v1219, %v1559
        %v1586 = vrot.slane %v1014, 5
        %v1587 = vrot.slane %v1586, 4
        %v1588 = vrot.slane %v1015, 5
        %v1589 = vsel %vm787, %v1587, %v1588
        %v1590 = vrot.slane %v1588, 4
        %v1591 = vrot.slane %v1016, 5
        %v1592 = vsel %vm787, %v1590, %v1591
        %v1593 = vrot.slane %v1017, 5
        %v1594 = vrot.slane %v1593, 4
        %v1595 = vrot.slane %v1018, 5
        %v1596 = vsel %vm787, %v1594, %v1595
        %v1597 = vrot.slane %v1595, 4
        %v1598 = vrot.slane %v1019, 5
        %v1599 = vsel %vm787, %v1597, %v1598
        %v1600 = vrot.slane %v1020, 5
        %v1601 = vrot.slane %v1600, 4
        %v1602 = vrot.slane %v1021, 5
        %v1603 = vsel %vm787, %v1601, %v1602
        %v1604 = vrot.slane %v1602, 4
        %v1605 = vrot.slane %v1022, 5
        %v1606 = vsel %vm787, %v1604, %v1605
        %v1607 = vrot.slane %v1023, 5
        %v1608 = vrot.slane %v1607, 4
        %v1609 = vrot.slane %v1024, 5
        %v1610 = vsel %vm787, %v1608, %v1609
        %v1611 = vrot.slane %v1609, 4
        %v1612 = vrot.slane %v1025, 5
        %v1613 = vsel %vm787, %v1611, %v1612
        %v1614 = vrot.slane %v1026, 5
        %v1615 = vrot.slane %v1614, 4
        %v1616 = vrot.slane %v1027, 5
        %v1617 = vsel %vm787, %v1615, %v1616
        %v1618 = vrot.slane %v1616, 4
        %v1619 = vrot.slane %v1028, 5
        %v1620 = vsel %vm787, %v1618, %v1619
        %v1621 = vrot.slane %v1029, 5
        %v1622 = vrot.slane %v1621, 4
        %v1623 = vrot.slane %v1030, 5
        %v1624 = vsel %vm787, %v1622, %v1623
        %v1625 = vrot.slane %v1623, 4
        %v1626 = vrot.slane %v1031, 5
        %v1627 = vsel %vm787, %v1625, %v1626
        %v1628 = vrot.slane %v1032, 5
        %v1629 = vrot.slane %v1628, 4
        %v1630 = vrot.slane %v1033, 5
        %v1631 = vsel %vm787, %v1629, %v1630
        %v1632 = vrot.slane %v1630, 4
        %v1633 = vrot.slane %v1034, 5
        %v1634 = vsel %vm787, %v1632, %v1633
        %v1635 = vrot.slane %v1035, 5
        %v1636 = vrot.slane %v1635, 4
        %v1637 = vrot.slane %v1036, 5
        %v1638 = vsel %vm787, %v1636, %v1637
        %v1639 = vrot.slane %v1637, 4
        %v1640 = vrot.slane %v1037, 5
        %v1641 = vsel %vm787, %v1639, %v1640
        %s1642 = scalar_lea.vmem %s1, 20
        %v1643 = vld [vmem:[%s1642] sm:$0xf]
        %v1644 = vunpack.c.l.b16 %v1589
        %v1645 = vunpack.c.l.b16 %v1592
        %v1646 = vunpack.c.l.b16 %v1596
        %v1647 = vunpack.c.l.b16 %v1599
        %v1648 = vunpack.c.l.b16 %v1603
        %v1649 = vunpack.c.l.b16 %v1606
        %v1650 = vunpack.c.l.b16 %v1610
        %v1651 = vunpack.c.l.b16 %v1613
        %v1652 = vunpack.c.l.b16 %v1617
        %v1653 = vunpack.c.l.b16 %v1620
        %v1654 = vunpack.c.l.b16 %v1624
        %v1655 = vunpack.c.l.b16 %v1627
        %v1656 = vunpack.c.l.b16 %v1631
        %v1657 = vunpack.c.l.b16 %v1634
        %v1658 = vunpack.c.l.b16 %v1638
        %v1659 = vunpack.c.l.b16 %v1641
        %v1660 = vpack.c.b16 %v1645, %v1644
        %v1661 = vpack.c.b16 %v1647, %v1646
        %v1662 = vpack.c.b16 %v1649, %v1648
        %v1663 = vpack.c.b16 %v1651, %v1650
        %v1664 = vpack.c.b16 %v1653, %v1652
        %v1665 = vpack.c.b16 %v1655, %v1654
        %v1666 = vpack.c.b16 %v1657, %v1656
        %v1667 = vpack.c.b16 %v1659, %v1658
        %v1669 = vsel %vm487, %v1660, 0
        %v1672 = vsel %vm487, %v1661, 0
        %v1675 = vsel %vm487, %v1662, 0
        %v1678 = vsel %vm487, %v1663, 0
        %v1681 = vsel %vm487, %v1664, 0
        %v1684 = vsel %vm487, %v1665, 0
        %v1687 = vsel %vm487, %v1666, 0
        %v1690 = vsel %vm487, %v1667, 0
        %v1693 = vsel %vm512, %v1643, 0
        %1695 = vmatprep.subr.bf16.mxu0 0
        %1696 = vmatpush1.bf16.msra.mxu0 %v1693
        %1697 = vmatprep.subr.bf16.mxu0 0
        %1698 = vmatpush1.bf16.msra.mxu0 0
        %1699 = vmatprep.subr.bf16.mxu0 0
        %1700 = vmatpush1.bf16.msra.mxu0 0
        %1701 = vmatprep.subr.bf16.mxu0 0
        %1702 = vmatpush1.bf16.msra.mxu0 0
        %1703 = vmatprep.subr.bf16.mxu0 0
        %1704 = vmatpush1.bf16.msra.mxu0 0
        %1705 = vmatprep.subr.bf16.mxu0 0
        %1706 = vmatpush1.bf16.msra.mxu0 0
        %1707 = vmatprep.subr.bf16.mxu0 0
        %1708 = vmatpush1.bf16.msra.mxu0 0
        %1709 = vmatprep.subr.bf16.mxu0 0
        %1710 = vmatpush1.bf16.msra.mxu0 0
        %1711 = vmatprep.subr.bf16.mxu0 0
        %1712 = vmatpush1.bf16.msra.mxu0 0
        %1713 = vmatprep.subr.bf16.mxu0 0
        %1714 = vmatpush1.bf16.msra.mxu0 0
        %1715 = vmatprep.subr.bf16.mxu0 0
        %1716 = vmatpush1.bf16.msra.mxu0 0
        %1717 = vmatprep.subr.bf16.mxu0 0
        %1718 = vmatpush1.bf16.msra.mxu0 0
        %1719 = vmatprep.subr.bf16.mxu0 0
        %1720 = vmatpush1.bf16.msra.mxu0 0
        %1721 = vmatprep.subr.bf16.mxu0 0
        %1722 = vmatpush1.bf16.msra.mxu0 0
        %1723 = vmatprep.subr.bf16.mxu0 0
        %1724 = vmatpush1.bf16.msra.mxu0 0
        %1725 = vmatprep.subr.bf16.mxu0 0
        %1726 = vmatpush1.bf16.msra.mxu0 0
        %1727 = vmatprep.mubr.bf16.mxu0 0
        %1728 = vmatmul.mubr.bf16.gmra.mrb[0].mxu0 %v1669
        %v1729 = vpop.f32.mrb[0].mxu0
        %v1730 = vadd.f32 0.0, %v1729
        %v1731 = vpop.f32.mrb[0].mxu0
        %v1732 = vpop.f32.mrb[0].mxu0
        %v1733 = vadd.f32 0.0, %v1732
        %v1734 = vpop.f32.mrb[0].mxu0
        %1735 = vmatprep.mubr.bf16.mxu0 0
        %1736 = vmatmul.mubr.bf16.gmra.mrb[0].mxu0 %v1672
        %v1737 = vpop.f32.mrb[0].mxu0
        %v1738 = vadd.f32 0.0, %v1737
        %v1739 = vpop.f32.mrb[0].mxu0
        %v1740 = vpop.f32.mrb[0].mxu0
        %v1741 = vadd.f32 0.0, %v1740
        %v1742 = vpop.f32.mrb[0].mxu0
        %1743 = vmatprep.mubr.bf16.mxu0 0
        %1744 = vmatmul.mubr.bf16.gmra.mrb[0].mxu0 %v1675
        %v1745 = vpop.f32.mrb[0].mxu0
        %v1746 = vadd.f32 0.0, %v1745
        %v1747 = vpop.f32.mrb[0].mxu0
        %v1748 = vpop.f32.mrb[0].mxu0
        %v1749 = vadd.f32 0.0, %v1748
        %v1750 = vpop.f32.mrb[0].mxu0
        %1751 = vmatprep.mubr.bf16.mxu0 0
        %1752 = vmatmul.mubr.bf16.gmra.mrb[0].mxu0 %v1678
        %v1753 = vpop.f32.mrb[0].mxu0
        %v1754 = vadd.f32 0.0, %v1753
        %v1755 = vpop.f32.mrb[0].mxu0
        %v1756 = vpop.f32.mrb[0].mxu0
        %v1757 = vadd.f32 0.0, %v1756
        %v1758 = vpop.f32.mrb[0].mxu0
        %1759 = vmatprep.mubr.bf16.mxu0 0
        %1760 = vmatmul.mubr.bf16.gmra.mrb[0].mxu0 %v1681
        %v1761 = vpop.f32.mrb[0].mxu0
        %v1762 = vadd.f32 0.0, %v1761
        %v1763 = vpop.f32.mrb[0].mxu0
        %v1764 = vpop.f32.mrb[0].mxu0
        %v1765 = vadd.f32 0.0, %v1764
        %v1766 = vpop.f32.mrb[0].mxu0
        %1767 = vmatprep.mubr.bf16.mxu0 0
        %1768 = vmatmul.mubr.bf16.gmra.mrb[0].mxu0 %v1684
        %v1769 = vpop.f32.mrb[0].mxu0
        %v1770 = vadd.f32 0.0, %v1769
        %v1771 = vpop.f32.mrb[0].mxu0
        %v1772 = vpop.f32.mrb[0].mxu0
        %v1773 = vadd.f32 0.0, %v1772
        %v1774 = vpop.f32.mrb[0].mxu0
        %1775 = vmatprep.mubr.bf16.mxu0 0
        %1776 = vmatmul.mubr.bf16.gmra.mrb[0].mxu0 %v1687
        %v1777 = vpop.f32.mrb[0].mxu0
        %v1778 = vadd.f32 0.0, %v1777
        %v1779 = vpop.f32.mrb[0].mxu0
        %v1780 = vpop.f32.mrb[0].mxu0
        %v1781 = vadd.f32 0.0, %v1780
        %v1782 = vpop.f32.mrb[0].mxu0
        %1783 = vmatprep.mubr.bf16.mxu0 0
        %1784 = vmatmul.mubr.bf16.gmra.mrb[0].mxu0 %v1690
        %v1785 = vpop.f32.mrb[0].mxu0
        %v1786 = vadd.f32 0.0, %v1785
        %v1787 = vpop.f32.mrb[0].mxu0
        %v1788 = vpop.f32.mrb[0].mxu0
        %v1789 = vadd.f32 0.0, %v1788
        %v1790 = vpop.f32.mrb[0].mxu0
        %1791 = vdwg.mxu0
        %v1792 = vadd.f32 %v1562, %v1730
        %v1793 = vadd.f32 %v1563, %v1733
        %v1794 = vadd.f32 %v1564, %v1738
        %v1795 = vadd.f32 %v1565, %v1741
        %v1796 = vadd.f32 %v1566, %v1746
        %v1797 = vadd.f32 %v1567, %v1749
        %v1798 = vadd.f32 %v1568, %v1754
        %v1799 = vadd.f32 %v1569, %v1757
        %v1800 = vadd.f32 %v1570, %v1762
        %v1801 = vadd.f32 %v1571, %v1765
        %v1802 = vadd.f32 %v1572, %v1770
        %v1803 = vadd.f32 %v1573, %v1773
        %v1804 = vadd.f32 %v1574, %v1778
        %v1805 = vadd.f32 %v1575, %v1781
        %v1806 = vadd.f32 %v1576, %v1786
        %v1807 = vadd.f32 %v1577, %v1789
        %s1808 = sadd.s32 %s237, 2
        %s1809 = smul.u32 %s1808, 3
        %s1810 = smul.addr %s1809, 4
        %s1811 = scalar_lea.vmem %s227, %s1810
        %v1812 = vld [vmem:[%s1811] sm:$0xf]
        %v1813 = vld [vmem:[%s1811 + $0x4] sm:$0xf]
        %v1814 = vld [vmem:[%s1811 + $0x8] sm:$0x1]
        %v1815 = vld [vmem:[%s1811 + $0xc] sm:$0xf]
        %v1816 = vld [vmem:[%s1811 + $0x10] sm:$0xf]
        %v1817 = vld [vmem:[%s1811 + $0x14] sm:$0x1]
        %v1818 = vld [vmem:[%s1811 + $0x18] sm:$0xf]
        %v1819 = vld [vmem:[%s1811 + $0x1c] sm:$0xf]
        %v1820 = vld [vmem:[%s1811 + $0x20] sm:$0x1]
        %v1821 = vld [vmem:[%s1811 + $0x24] sm:$0xf]
        %v1822 = vld [vmem:[%s1811 + $0x28] sm:$0xf]
        %v1823 = vld [vmem:[%s1811 + $0x2c] sm:$0x1]
        %v1824 = vld [vmem:[%s1811 + $0x30] sm:$0xf]
        %v1825 = vld [vmem:[%s1811 + $0x34] sm:$0xf]
        %v1826 = vld [vmem:[%s1811 + $0x38] sm:$0x1]
        %v1827 = vld [vmem:[%s1811 + $0x3c] sm:$0xf]
        %v1828 = vld [vmem:[%s1811 + $0x40] sm:$0xf]
        %v1829 = vld [vmem:[%s1811 + $0x44] sm:$0x1]
        %v1830 = vld [vmem:[%s1811 + $0x48] sm:$0xf]
        %v1831 = vld [vmem:[%s1811 + $0x4c] sm:$0xf]
        %v1832 = vld [vmem:[%s1811 + $0x50] sm:$0x1]
        %v1833 = vld [vmem:[%s1811 + $0x54] sm:$0xf]
        %v1834 = vld [vmem:[%s1811 + $0x58] sm:$0xf]
        %v1835 = vld [vmem:[%s1811 + $0x5c] sm:$0x1]
        %s1836 = scalar_lea.vmem %s1, 24
        %v1837 = vld [vmem:[%s1836] sm:$0xf]
        %v1854 = vunpack.c.l.b16 %v1812
        %v1855 = vunpack.c.l.b16 %v1813
        %v1856 = vunpack.c.l.b16 %v1815
        %v1857 = vunpack.c.l.b16 %v1816
        %v1858 = vunpack.c.l.b16 %v1818
        %v1859 = vunpack.c.l.b16 %v1819
        %v1860 = vunpack.c.l.b16 %v1821
        %v1861 = vunpack.c.l.b16 %v1822
        %v1862 = vunpack.c.l.b16 %v1824
        %v1863 = vunpack.c.l.b16 %v1825
        %v1864 = vunpack.c.l.b16 %v1827
        %v1865 = vunpack.c.l.b16 %v1828
        %v1866 = vunpack.c.l.b16 %v1830
        %v1867 = vunpack.c.l.b16 %v1831
        %v1868 = vunpack.c.l.b16 %v1833
        %v1869 = vunpack.c.l.b16 %v1834
        %v1870 = vpack.c.b16 %v1855, %v1854
        %v1871 = vpack.c.b16 %v1857, %v1856
        %v1872 = vpack.c.b16 %v1859, %v1858
        %v1873 = vpack.c.b16 %v1861, %v1860
        %v1874 = vpack.c.b16 %v1863, %v1862
        %v1875 = vpack.c.b16 %v1865, %v1864
        %v1876 = vpack.c.b16 %v1867, %v1866
        %v1877 = vpack.c.b16 %v1869, %v1868
        %v1879 = vsel %vm487, %v1870, 0
        %v1882 = vsel %vm487, %v1871, 0
        %v1885 = vsel %vm487, %v1872, 0
        %v1888 = vsel %vm487, %v1873, 0
        %v1891 = vsel %vm487, %v1874, 0
        %v1894 = vsel %vm487, %v1875, 0
        %v1897 = vsel %vm487, %v1876, 0
        %v1900 = vsel %vm487, %v1877, 0
        %v1903 = vsel %vm512, %v1837, 0
        %1905 = vmatprep.subr.bf16.mxu0 0
        %1906 = vmatpush1.bf16.msra.mxu0 %v1903
        %1907 = vmatprep.subr.bf16.mxu0 0
        %1908 = vmatpush1.bf16.msra.mxu0 0
        %1909 = vmatprep.subr.bf16.mxu0 0
        %1910 = vmatpush1.bf16.msra.mxu0 0
        %1911 = vmatprep.subr.bf16.mxu0 0
        %1912 = vmatpush1.bf16.msra.mxu0 0
        %1913 = vmatprep.subr.bf16.mxu0 0
        %1914 = vmatpush1.bf16.msra.mxu0 0
        %1915 = vmatprep.subr.bf16.mxu0 0
        %1916 = vmatpush1.bf16.msra.mxu0 0
        %1917 = vmatprep.subr.bf16.mxu0 0
        %1918 = vmatpush1.bf16.msra.mxu0 0
        %1919 = vmatprep.subr.bf16.mxu0 0
        %1920 = vmatpush1.bf16.msra.mxu0 0
        %1921 = vmatprep.subr.bf16.mxu0 0
        %1922 = vmatpush1.bf16.msra.mxu0 0
        %1923 = vmatprep.subr.bf16.mxu0 0
        %1924 = vmatpush1.bf16.msra.mxu0 0
        %1925 = vmatprep.subr.bf16.mxu0 0
        %1926 = vmatpush1.bf16.msra.mxu0 0
        %1927 = vmatprep.subr.bf16.mxu0 0
        %1928 = vmatpush1.bf16.msra.mxu0 0
        %1929 = vmatprep.subr.bf16.mxu0 0
        %1930 = vmatpush1.bf16.msra.mxu0 0
        %1931 = vmatprep.subr.bf16.mxu0 0
        %1932 = vmatpush1.bf16.msra.mxu0 0
        %1933 = vmatprep.subr.bf16.mxu0 0
        %1934 = vmatpush1.bf16.msra.mxu0 0
        %1935 = vmatprep.subr.bf16.mxu0 0
        %1936 = vmatpush1.bf16.msra.mxu0 0
        %1937 = vmatprep.mubr.bf16.mxu0 0
        %1938 = vmatmul.mubr.bf16.gmra.mrb[0].mxu0 %v1879
        %v1939 = vpop.f32.mrb[0].mxu0
        %v1940 = vadd.f32 0.0, %v1939
        %v1941 = vpop.f32.mrb[0].mxu0
        %v1942 = vpop.f32.mrb[0].mxu0
        %v1943 = vadd.f32 0.0, %v1942
        %v1944 = vpop.f32.mrb[0].mxu0
        %1945 = vmatprep.mubr.bf16.mxu0 0
        %1946 = vmatmul.mubr.bf16.gmra.mrb[0].mxu0 %v1882
        %v1947 = vpop.f32.mrb[0].mxu0
        %v1948 = vadd.f32 0.0, %v1947
        %v1949 = vpop.f32.mrb[0].mxu0
        %v1950 = vpop.f32.mrb[0].mxu0
        %v1951 = vadd.f32 0.0, %v1950
        %v1952 = vpop.f32.mrb[0].mxu0
        %1953 = vmatprep.mubr.bf16.mxu0 0
        %1954 = vmatmul.mubr.bf16.gmra.mrb[0].mxu0 %v1885
        %v1955 = vpop.f32.mrb[0].mxu0
        %v1956 = vadd.f32 0.0, %v1955
        %v1957 = vpop.f32.mrb[0].mxu0
        %v1958 = vpop.f32.mrb[0].mxu0
        %v1959 = vadd.f32 0.0, %v1958
        %v1960 = vpop.f32.mrb[0].mxu0
        %1961 = vmatprep.mubr.bf16.mxu0 0
        %1962 = vmatmul.mubr.bf16.gmra.mrb[0].mxu0 %v1888
        %v1963 = vpop.f32.mrb[0].mxu0
        %v1964 = vadd.f32 0.0, %v1963
        %v1965 = vpop.f32.mrb[0].mxu0
        %v1966 = vpop.f32.mrb[0].mxu0
        %v1967 = vadd.f32 0.0, %v1966
        %v1968 = vpop.f32.mrb[0].mxu0
        %1969 = vmatprep.mubr.bf16.mxu0 0
        %1970 = vmatmul.mubr.bf16.gmra.mrb[0].mxu0 %v1891
        %v1971 = vpop.f32.mrb[0].mxu0
        %v1972 = vadd.f32 0.0, %v1971
        %v1973 = vpop.f32.mrb[0].mxu0
        %v1974 = vpop.f32.mrb[0].mxu0
        %v1975 = vadd.f32 0.0, %v1974
        %v1976 = vpop.f32.mrb[0].mxu0
        %1977 = vmatprep.mubr.bf16.mxu0 0
        %1978 = vmatmul.mubr.bf16.gmra.mrb[0].mxu0 %v1894
        %v1979 = vpop.f32.mrb[0].mxu0
        %v1980 = vadd.f32 0.0, %v1979
        %v1981 = vpop.f32.mrb[0].mxu0
        %v1982 = vpop.f32.mrb[0].mxu0
        %v1983 = vadd.f32 0.0, %v1982
        %v1984 = vpop.f32.mrb[0].mxu0
        %1985 = vmatprep.mubr.bf16.mxu0 0
        %1986 = vmatmul.mubr.bf16.gmra.mrb[0].mxu0 %v1897
        %v1987 = vpop.f32.mrb[0].mxu0
        %v1988 = vadd.f32 0.0, %v1987
        %v1989 = vpop.f32.mrb[0].mxu0
        %v1990 = vpop.f32.mrb[0].mxu0
        %v1991 = vadd.f32 0.0, %v1990
        %v1992 = vpop.f32.mrb[0].mxu0
        %1993 = vmatprep.mubr.bf16.mxu0 0
        %1994 = vmatmul.mubr.bf16.gmra.mrb[0].mxu0 %v1900
        %v1995 = vpop.f32.mrb[0].mxu0
        %v1996 = vadd.f32 0.0, %v1995
        %v1997 = vpop.f32.mrb[0].mxu0
        %v1998 = vpop.f32.mrb[0].mxu0
        %v1999 = vadd.f32 0.0, %v1998
        %v2000 = vpop.f32.mrb[0].mxu0
        %2001 = vdwg.mxu0
        %v2002 = vadd.f32 %v1792, %v1940
        %v2003 = vadd.f32 %v1793, %v1943
        %v2004 = vadd.f32 %v1794, %v1948
        %v2005 = vadd.f32 %v1795, %v1951
        %v2006 = vadd.f32 %v1796, %v1956
        %v2007 = vadd.f32 %v1797, %v1959
        %v2008 = vadd.f32 %v1798, %v1964
        %v2009 = vadd.f32 %v1799, %v1967
        %v2010 = vadd.f32 %v1800, %v1972
        %v2011 = vadd.f32 %v1801, %v1975
        %v2012 = vadd.f32 %v1802, %v1980
        %v2013 = vadd.f32 %v1803, %v1983
        %v2014 = vadd.f32 %v1804, %v1988
        %v2015 = vadd.f32 %v1805, %v1991
        %v2016 = vadd.f32 %v1806, %v1996
        %v2017 = vadd.f32 %v1807, %v1999
        %v2019 = vshrl.u32 %v1812, 16
        %v2021 = vrot.slane %v2019, 4
        %v2022 = vshll.u32 %v1812, 16
        %v2024 = vrot.slane %v2022, 5
        %v2025 = vor.u32 %v2021, %v2024
        %v2026 = vrot.slane %v2025, 4
        %v2028 = vshll.u32 %v1813, 16
        %v2030 = vrot.slane %v2028, 5
        %v2031 = vsel %vm268, %v2026, %v2030
        %v2032 = vshrl.u32 %v1813, 16
        %v2034 = vrot.slane %v2032, 4
        %v2035 = vor.u32 %v2034, %v2030
        %v2036 = vrot.slane %v2035, 4
        %v2038 = vshll.u32 %v1814, 16
        %v2040 = vrot.slane %v2038, 5
        %v2041 = vsel %vm268, %v2036, %v2040
        %v2043 = vshrl.u32 %v1815, 16
        %v2045 = vrot.slane %v2043, 4
        %v2046 = vshll.u32 %v1815, 16
        %v2048 = vrot.slane %v2046, 5
        %v2049 = vor.u32 %v2045, %v2048
        %v2050 = vrot.slane %v2049, 4
        %v2052 = vshll.u32 %v1816, 16
        %v2054 = vrot.slane %v2052, 5
        %v2055 = vsel %vm268, %v2050, %v2054
        %v2056 = vshrl.u32 %v1816, 16
        %v2058 = vrot.slane %v2056, 4
        %v2059 = vor.u32 %v2058, %v2054
        %v2060 = vrot.slane %v2059, 4
        %v2062 = vshll.u32 %v1817, 16
        %v2064 = vrot.slane %v2062, 5
        %v2065 = vsel %vm268, %v2060, %v2064
        %v2067 = vshrl.u32 %v1818, 16
        %v2069 = vrot.slane %v2067, 4
        %v2070 = vshll.u32 %v1818, 16
        %v2072 = vrot.slane %v2070, 5
        %v2073 = vor.u32 %v2069, %v2072
        %v2074 = vrot.slane %v2073, 4
        %v2076 = vshll.u32 %v1819, 16
        %v2078 = vrot.slane %v2076, 5
        %v2079 = vsel %vm268, %v2074, %v2078
        %v2080 = vshrl.u32 %v1819, 16
        %v2082 = vrot.slane %v2080, 4
        %v2083 = vor.u32 %v2082, %v2078
        %v2084 = vrot.slane %v2083, 4
        %v2086 = vshll.u32 %v1820, 16
        %v2088 = vrot.slane %v2086, 5
        %v2089 = vsel %vm268, %v2084, %v2088
        %v2091 = vshrl.u32 %v1821, 16
        %v2093 = vrot.slane %v2091, 4
        %v2094 = vshll.u32 %v1821, 16
        %v2096 = vrot.slane %v2094, 5
        %v2097 = vor.u32 %v2093, %v2096
        %v2098 = vrot.slane %v2097, 4
        %v2100 = vshll.u32 %v1822, 16
        %v2102 = vrot.slane %v2100, 5
        %v2103 = vsel %vm268, %v2098, %v2102
        %v2104 = vshrl.u32 %v1822, 16
        %v2106 = vrot.slane %v2104, 4
        %v2107 = vor.u32 %v2106, %v2102
        %v2108 = vrot.slane %v2107, 4
        %v2110 = vshll.u32 %v1823, 16
        %v2112 = vrot.slane %v2110, 5
        %v2113 = vsel %vm268, %v2108, %v2112
        %v2115 = vshrl.u32 %v1824, 16
        %v2117 = vrot.slane %v2115, 4
        %v2118 = vshll.u32 %v1824, 16
        %v2120 = vrot.slane %v2118, 5
        %v2121 = vor.u32 %v2117, %v2120
        %v2122 = vrot.slane %v2121, 4
        %v2124 = vshll.u32 %v1825, 16
        %v2126 = vrot.slane %v2124, 5
        %v2127 = vsel %vm268, %v2122, %v2126
        %v2128 = vshrl.u32 %v1825, 16
        %v2130 = vrot.slane %v2128, 4
        %v2131 = vor.u32 %v2130, %v2126
        %v2132 = vrot.slane %v2131, 4
        %v2134 = vshll.u32 %v1826, 16
        %v2136 = vrot.slane %v2134, 5
        %v2137 = vsel %vm268, %v2132, %v2136
        %v2139 = vshrl.u32 %v1827, 16
        %v2141 = vrot.slane %v2139, 4
        %v2142 = vshll.u32 %v1827, 16
        %v2144 = vrot.slane %v2142, 5
        %v2145 = vor.u32 %v2141, %v2144
        %v2146 = vrot.slane %v2145, 4
        %v2148 = vshll.u32 %v1828, 16
        %v2150 = vrot.slane %v2148, 5
        %v2151 = vsel %vm268, %v2146, %v2150
        %v2152 = vshrl.u32 %v1828, 16
        %v2154 = vrot.slane %v2152, 4
        %v2155 = vor.u32 %v2154, %v2150
        %v2156 = vrot.slane %v2155, 4
        %v2158 = vshll.u32 %v1829, 16
        %v2160 = vrot.slane %v2158, 5
        %v2161 = vsel %vm268, %v2156, %v2160
        %v2163 = vshrl.u32 %v1830, 16
        %v2165 = vrot.slane %v2163, 4
        %v2166 = vshll.u32 %v1830, 16
        %v2168 = vrot.slane %v2166, 5
        %v2169 = vor.u32 %v2165, %v2168
        %v2170 = vrot.slane %v2169, 4
        %v2172 = vshll.u32 %v1831, 16
        %v2174 = vrot.slane %v2172, 5
        %v2175 = vsel %vm268, %v2170, %v2174
        %v2176 = vshrl.u32 %v1831, 16
        %v2178 = vrot.slane %v2176, 4
        %v2179 = vor.u32 %v2178, %v2174
        %v2180 = vrot.slane %v2179, 4
        %v2182 = vshll.u32 %v1832, 16
        %v2184 = vrot.slane %v2182, 5
        %v2185 = vsel %vm268, %v2180, %v2184
        %v2187 = vshrl.u32 %v1833, 16
        %v2189 = vrot.slane %v2187, 4
        %v2190 = vshll.u32 %v1833, 16
        %v2192 = vrot.slane %v2190, 5
        %v2193 = vor.u32 %v2189, %v2192
        %v2194 = vrot.slane %v2193, 4
        %v2196 = vshll.u32 %v1834, 16
        %v2198 = vrot.slane %v2196, 5
        %v2199 = vsel %vm268, %v2194, %v2198
        %v2200 = vshrl.u32 %v1834, 16
        %v2202 = vrot.slane %v2200, 4
        %v2203 = vor.u32 %v2202, %v2198
        %v2204 = vrot.slane %v2203, 4
        %v2206 = vshll.u32 %v1835, 16
        %v2208 = vrot.slane %v2206, 5
        %v2209 = vsel %vm268, %v2204, %v2208
        %s2210 = scalar_lea.vmem %s1, 28
        %v2211 = vld [vmem:[%s2210] sm:$0xf]
        %v2212 = vunpack.c.l.b16 %v2031
        %v2213 = vunpack.c.l.b16 %v2041
        %v2214 = vunpack.c.l.b16 %v2055
        %v2215 = vunpack.c.l.b16 %v2065
        %v2216 = vunpack.c.l.b16 %v2079
        %v2217 = vunpack.c.l.b16 %v2089
        %v2218 = vunpack.c.l.b16 %v2103
        %v2219 = vunpack.c.l.b16 %v2113
        %v2220 = vunpack.c.l.b16 %v2127
        %v2221 = vunpack.c.l.b16 %v2137
        %v2222 = vunpack.c.l.b16 %v2151
        %v2223 = vunpack.c.l.b16 %v2161
        %v2224 = vunpack.c.l.b16 %v2175
        %v2225 = vunpack.c.l.b16 %v2185
        %v2226 = vunpack.c.l.b16 %v2199
        %v2227 = vunpack.c.l.b16 %v2209
        %v2228 = vpack.c.b16 %v2213, %v2212
        %v2229 = vpack.c.b16 %v2215, %v2214
        %v2230 = vpack.c.b16 %v2217, %v2216
        %v2231 = vpack.c.b16 %v2219, %v2218
        %v2232 = vpack.c.b16 %v2221, %v2220
        %v2233 = vpack.c.b16 %v2223, %v2222
        %v2234 = vpack.c.b16 %v2225, %v2224
        %v2235 = vpack.c.b16 %v2227, %v2226
        %v2237 = vsel %vm487, %v2228, 0
        %v2240 = vsel %vm487, %v2229, 0
        %v2243 = vsel %vm487, %v2230, 0
        %v2246 = vsel %vm487, %v2231, 0
        %v2249 = vsel %vm487, %v2232, 0
        %v2252 = vsel %vm487, %v2233, 0
        %v2255 = vsel %vm487, %v2234, 0
        %v2258 = vsel %vm487, %v2235, 0
        %v2261 = vsel %vm512, %v2211, 0
        %2263 = vmatprep.subr.bf16.mxu0 0
        %2264 = vmatpush1.bf16.msra.mxu0 %v2261
        %2265 = vmatprep.subr.bf16.mxu0 0
        %2266 = vmatpush1.bf16.msra.mxu0 0
        %2267 = vmatprep.subr.bf16.mxu0 0
        %2268 = vmatpush1.bf16.msra.mxu0 0
        %2269 = vmatprep.subr.bf16.mxu0 0
        %2270 = vmatpush1.bf16.msra.mxu0 0
        %2271 = vmatprep.subr.bf16.mxu0 0
        %2272 = vmatpush1.bf16.msra.mxu0 0
        %2273 = vmatprep.subr.bf16.mxu0 0
        %2274 = vmatpush1.bf16.msra.mxu0 0
        %2275 = vmatprep.subr.bf16.mxu0 0
        %2276 = vmatpush1.bf16.msra.mxu0 0
        %2277 = vmatprep.subr.bf16.mxu0 0
        %2278 = vmatpush1.bf16.msra.mxu0 0
        %2279 = vmatprep.subr.bf16.mxu0 0
        %2280 = vmatpush1.bf16.msra.mxu0 0
        %2281 = vmatprep.subr.bf16.mxu0 0
        %2282 = vmatpush1.bf16.msra.mxu0 0
        %2283 = vmatprep.subr.bf16.mxu0 0
        %2284 = vmatpush1.bf16.msra.mxu0 0
        %2285 = vmatprep.subr.bf16.mxu0 0
        %2286 = vmatpush1.bf16.msra.mxu0 0
        %2287 = vmatprep.subr.bf16.mxu0 0
        %2288 = vmatpush1.bf16.msra.mxu0 0
        %2289 = vmatprep.subr.bf16.mxu0 0
        %2290 = vmatpush1.bf16.msra.mxu0 0
        %2291 = vmatprep.subr.bf16.mxu0 0
        %2292 = vmatpush1.bf16.msra.mxu0 0
        %2293 = vmatprep.subr.bf16.mxu0 0
        %2294 = vmatpush1.bf16.msra.mxu0 0
        %2295 = vmatprep.mubr.bf16.mxu0 0
        %2296 = vmatmul.mubr.bf16.gmra.mrb[0].mxu0 %v2237
        %v2297 = vpop.f32.mrb[0].mxu0
        %v2298 = vadd.f32 0.0, %v2297
        %v2299 = vpop.f32.mrb[0].mxu0
        %v2300 = vpop.f32.mrb[0].mxu0
        %v2301 = vadd.f32 0.0, %v2300
        %v2302 = vpop.f32.mrb[0].mxu0
        %2303 = vmatprep.mubr.bf16.mxu0 0
        %2304 = vmatmul.mubr.bf16.gmra.mrb[0].mxu0 %v2240
        %v2305 = vpop.f32.mrb[0].mxu0
        %v2306 = vadd.f32 0.0, %v2305
        %v2307 = vpop.f32.mrb[0].mxu0
        %v2308 = vpop.f32.mrb[0].mxu0
        %v2309 = vadd.f32 0.0, %v2308
        %v2310 = vpop.f32.mrb[0].mxu0
        %2311 = vmatprep.mubr.bf16.mxu0 0
        %2312 = vmatmul.mubr.bf16.gmra.mrb[0].mxu0 %v2243
        %v2313 = vpop.f32.mrb[0].mxu0
        %v2314 = vadd.f32 0.0, %v2313
        %v2315 = vpop.f32.mrb[0].mxu0
        %v2316 = vpop.f32.mrb[0].mxu0
        %v2317 = vadd.f32 0.0, %v2316
        %v2318 = vpop.f32.mrb[0].mxu0
        %2319 = vmatprep.mubr.bf16.mxu0 0
        %2320 = vmatmul.mubr.bf16.gmra.mrb[0].mxu0 %v2246
        %v2321 = vpop.f32.mrb[0].mxu0
        %v2322 = vadd.f32 0.0, %v2321
        %v2323 = vpop.f32.mrb[0].mxu0
        %v2324 = vpop.f32.mrb[0].mxu0
        %v2325 = vadd.f32 0.0, %v2324
        %v2326 = vpop.f32.mrb[0].mxu0
        %2327 = vmatprep.mubr.bf16.mxu0 0
        %2328 = vmatmul.mubr.bf16.gmra.mrb[0].mxu0 %v2249
        %v2329 = vpop.f32.mrb[0].mxu0
        %v2330 = vadd.f32 0.0, %v2329
        %v2331 = vpop.f32.mrb[0].mxu0
        %v2332 = vpop.f32.mrb[0].mxu0
        %v2333 = vadd.f32 0.0, %v2332
        %v2334 = vpop.f32.mrb[0].mxu0
        %2335 = vmatprep.mubr.bf16.mxu0 0
        %2336 = vmatmul.mubr.bf16.gmra.mrb[0].mxu0 %v2252
        %v2337 = vpop.f32.mrb[0].mxu0
        %v2338 = vadd.f32 0.0, %v2337
        %v2339 = vpop.f32.mrb[0].mxu0
        %v2340 = vpop.f32.mrb[0].mxu0
        %v2341 = vadd.f32 0.0, %v2340
        %v2342 = vpop.f32.mrb[0].mxu0
        %2343 = vmatprep.mubr.bf16.mxu0 0
        %2344 = vmatmul.mubr.bf16.gmra.mrb[0].mxu0 %v2255
        %v2345 = vpop.f32.mrb[0].mxu0
        %v2346 = vadd.f32 0.0, %v2345
        %v2347 = vpop.f32.mrb[0].mxu0
        %v2348 = vpop.f32.mrb[0].mxu0
        %v2349 = vadd.f32 0.0, %v2348
        %v2350 = vpop.f32.mrb[0].mxu0
        %2351 = vmatprep.mubr.bf16.mxu0 0
        %2352 = vmatmul.mubr.bf16.gmra.mrb[0].mxu0 %v2258
        %v2353 = vpop.f32.mrb[0].mxu0
        %v2354 = vadd.f32 0.0, %v2353
        %v2355 = vpop.f32.mrb[0].mxu0
        %v2356 = vpop.f32.mrb[0].mxu0
        %v2357 = vadd.f32 0.0, %v2356
        %v2358 = vpop.f32.mrb[0].mxu0
        %2359 = vdwg.mxu0
        %v2360 = vadd.f32 %v2002, %v2298
        %v2361 = vadd.f32 %v2003, %v2301
        %v2362 = vadd.f32 %v2004, %v2306
        %v2363 = vadd.f32 %v2005, %v2309
        %v2364 = vadd.f32 %v2006, %v2314
        %v2365 = vadd.f32 %v2007, %v2317
        %v2366 = vadd.f32 %v2008, %v2322
        %v2367 = vadd.f32 %v2009, %v2325
        %v2368 = vadd.f32 %v2010, %v2330
        %v2369 = vadd.f32 %v2011, %v2333
        %v2370 = vadd.f32 %v2012, %v2338
        %v2371 = vadd.f32 %v2013, %v2341
        %v2372 = vadd.f32 %v2014, %v2346
        %v2373 = vadd.f32 %v2015, %v2349
        %v2374 = vadd.f32 %v2016, %v2354
        %v2375 = vadd.f32 %v2017, %v2357
        %v2384 = vrot.slane %v1812, 5
        %v2385 = vrot.slane %v2384, 4
        %v2386 = vrot.slane %v1813, 5
        %v2387 = vsel %vm787, %v2385, %v2386
        %v2388 = vrot.slane %v2386, 4
        %v2389 = vrot.slane %v1814, 5
        %v2390 = vsel %vm787, %v2388, %v2389
        %v2391 = vrot.slane %v1815, 5
        %v2392 = vrot.slane %v2391, 4
        %v2393 = vrot.slane %v1816, 5
        %v2394 = vsel %vm787, %v2392, %v2393
        %v2395 = vrot.slane %v2393, 4
        %v2396 = vrot.slane %v1817, 5
        %v2397 = vsel %vm787, %v2395, %v2396
        %v2398 = vrot.slane %v1818, 5
        %v2399 = vrot.slane %v2398, 4
        %v2400 = vrot.slane %v1819, 5
        %v2401 = vsel %vm787, %v2399, %v2400
        %v2402 = vrot.slane %v2400, 4
        %v2403 = vrot.slane %v1820, 5
        %v2404 = vsel %vm787, %v2402, %v2403
        %v2405 = vrot.slane %v1821, 5
        %v2406 = vrot.slane %v2405, 4
        %v2407 = vrot.slane %v1822, 5
        %v2408 = vsel %vm787, %v2406, %v2407
        %v2409 = vrot.slane %v2407, 4
        %v2410 = vrot.slane %v1823, 5
        %v2411 = vsel %vm787, %v2409, %v2410
        %v2412 = vrot.slane %v1824, 5
        %v2413 = vrot.slane %v2412, 4
        %v2414 = vrot.slane %v1825, 5
        %v2415 = vsel %vm787, %v2413, %v2414
        %v2416 = vrot.slane %v2414, 4
        %v2417 = vrot.slane %v1826, 5
        %v2418 = vsel %vm787, %v2416, %v2417
        %v2419 = vrot.slane %v1827, 5
        %v2420 = vrot.slane %v2419, 4
        %v2421 = vrot.slane %v1828, 5
        %v2422 = vsel %vm787, %v2420, %v2421
        %v2423 = vrot.slane %v2421, 4
        %v2424 = vrot.slane %v1829, 5
        %v2425 = vsel %vm787, %v2423, %v2424
        %v2426 = vrot.slane %v1830, 5
        %v2427 = vrot.slane %v2426, 4
        %v2428 = vrot.slane %v1831, 5
        %v2429 = vsel %vm787, %v2427, %v2428
        %v2430 = vrot.slane %v2428, 4
        %v2431 = vrot.slane %v1832, 5
        %v2432 = vsel %vm787, %v2430, %v2431
        %v2433 = vrot.slane %v1833, 5
        %v2434 = vrot.slane %v2433, 4
        %v2435 = vrot.slane %v1834, 5
        %v2436 = vsel %vm787, %v2434, %v2435
        %v2437 = vrot.slane %v2435, 4
        %v2438 = vrot.slane %v1835, 5
        %v2439 = vsel %vm787, %v2437, %v2438
        %s2440 = scalar_lea.vmem %s1, 32
        %v2441 = vld [vmem:[%s2440] sm:$0xf]
        %v2442 = vunpack.c.l.b16 %v2387
        %v2443 = vunpack.c.l.b16 %v2390
        %v2444 = vunpack.c.l.b16 %v2394
        %v2445 = vunpack.c.l.b16 %v2397
        %v2446 = vunpack.c.l.b16 %v2401
        %v2447 = vunpack.c.l.b16 %v2404
        %v2448 = vunpack.c.l.b16 %v2408
        %v2449 = vunpack.c.l.b16 %v2411
        %v2450 = vunpack.c.l.b16 %v2415
        %v2451 = vunpack.c.l.b16 %v2418
        %v2452 = vunpack.c.l.b16 %v2422
        %v2453 = vunpack.c.l.b16 %v2425
        %v2454 = vunpack.c.l.b16 %v2429
        %v2455 = vunpack.c.l.b16 %v2432
        %v2456 = vunpack.c.l.b16 %v2436
        %v2457 = vunpack.c.l.b16 %v2439
        %v2458 = vpack.c.b16 %v2443, %v2442
        %v2459 = vpack.c.b16 %v2445, %v2444
        %v2460 = vpack.c.b16 %v2447, %v2446
        %v2461 = vpack.c.b16 %v2449, %v2448
        %v2462 = vpack.c.b16 %v2451, %v2450
        %v2463 = vpack.c.b16 %v2453, %v2452
        %v2464 = vpack.c.b16 %v2455, %v2454
        %v2465 = vpack.c.b16 %v2457, %v2456
        %v2467 = vsel %vm487, %v2458, 0
        %v2470 = vsel %vm487, %v2459, 0
        %v2473 = vsel %vm487, %v2460, 0
        %v2476 = vsel %vm487, %v2461, 0
        %v2479 = vsel %vm487, %v2462, 0
        %v2482 = vsel %vm487, %v2463, 0
        %v2485 = vsel %vm487, %v2464, 0
        %v2488 = vsel %vm487, %v2465, 0
        %v2491 = vsel %vm512, %v2441, 0
        %2493 = vmatprep.subr.bf16.mxu0 0
        %2494 = vmatpush1.bf16.msra.mxu0 %v2491
        %2495 = vmatprep.subr.bf16.mxu0 0
        %2496 = vmatpush1.bf16.msra.mxu0 0
        %2497 = vmatprep.subr.bf16.mxu0 0
        %2498 = vmatpush1.bf16.msra.mxu0 0
        %2499 = vmatprep.subr.bf16.mxu0 0
        %2500 = vmatpush1.bf16.msra.mxu0 0
        %2501 = vmatprep.subr.bf16.mxu0 0
        %2502 = vmatpush1.bf16.msra.mxu0 0
        %2503 = vmatprep.subr.bf16.mxu0 0
        %2504 = vmatpush1.bf16.msra.mxu0 0
        %2505 = vmatprep.subr.bf16.mxu0 0
        %2506 = vmatpush1.bf16.msra.mxu0 0
        %2507 = vmatprep.subr.bf16.mxu0 0
        %2508 = vmatpush1.bf16.msra.mxu0 0
        %2509 = vmatprep.subr.bf16.mxu0 0
        %2510 = vmatpush1.bf16.msra.mxu0 0
        %2511 = vmatprep.subr.bf16.mxu0 0
        %2512 = vmatpush1.bf16.msra.mxu0 0
        %2513 = vmatprep.subr.bf16.mxu0 0
        %2514 = vmatpush1.bf16.msra.mxu0 0
        %2515 = vmatprep.subr.bf16.mxu0 0
        %2516 = vmatpush1.bf16.msra.mxu0 0
        %2517 = vmatprep.subr.bf16.mxu0 0
        %2518 = vmatpush1.bf16.msra.mxu0 0
        %2519 = vmatprep.subr.bf16.mxu0 0
        %2520 = vmatpush1.bf16.msra.mxu0 0
        %2521 = vmatprep.subr.bf16.mxu0 0
        %2522 = vmatpush1.bf16.msra.mxu0 0
        %2523 = vmatprep.subr.bf16.mxu0 0
        %2524 = vmatpush1.bf16.msra.mxu0 0
        %2525 = vmatprep.mubr.bf16.mxu0 0
        %2526 = vmatmul.mubr.bf16.gmra.mrb[0].mxu0 %v2467
        %v2527 = vpop.f32.mrb[0].mxu0
        %v2528 = vadd.f32 0.0, %v2527
        %v2529 = vpop.f32.mrb[0].mxu0
        %v2530 = vpop.f32.mrb[0].mxu0
        %v2531 = vadd.f32 0.0, %v2530
        %v2532 = vpop.f32.mrb[0].mxu0
        %2533 = vmatprep.mubr.bf16.mxu0 0
        %2534 = vmatmul.mubr.bf16.gmra.mrb[0].mxu0 %v2470
        %v2535 = vpop.f32.mrb[0].mxu0
        %v2536 = vadd.f32 0.0, %v2535
        %v2537 = vpop.f32.mrb[0].mxu0
        %v2538 = vpop.f32.mrb[0].mxu0
        %v2539 = vadd.f32 0.0, %v2538
        %v2540 = vpop.f32.mrb[0].mxu0
        %2541 = vmatprep.mubr.bf16.mxu0 0
        %2542 = vmatmul.mubr.bf16.gmra.mrb[0].mxu0 %v2473
        %v2543 = vpop.f32.mrb[0].mxu0
        %v2544 = vadd.f32 0.0, %v2543
        %v2545 = vpop.f32.mrb[0].mxu0
        %v2546 = vpop.f32.mrb[0].mxu0
        %v2547 = vadd.f32 0.0, %v2546
        %v2548 = vpop.f32.mrb[0].mxu0
        %2549 = vmatprep.mubr.bf16.mxu0 0
        %2550 = vmatmul.mubr.bf16.gmra.mrb[0].mxu0 %v2476
        %v2551 = vpop.f32.mrb[0].mxu0
        %v2552 = vadd.f32 0.0, %v2551
        %v2553 = vpop.f32.mrb[0].mxu0
        %v2554 = vpop.f32.mrb[0].mxu0
        %v2555 = vadd.f32 0.0, %v2554
        %v2556 = vpop.f32.mrb[0].mxu0
        %2557 = vmatprep.mubr.bf16.mxu0 0
        %2558 = vmatmul.mubr.bf16.gmra.mrb[0].mxu0 %v2479
        %v2559 = vpop.f32.mrb[0].mxu0
        %v2560 = vadd.f32 0.0, %v2559
        %v2561 = vpop.f32.mrb[0].mxu0
        %v2562 = vpop.f32.mrb[0].mxu0
        %v2563 = vadd.f32 0.0, %v2562
        %v2564 = vpop.f32.mrb[0].mxu0
        %2565 = vmatprep.mubr.bf16.mxu0 0
        %2566 = vmatmul.mubr.bf16.gmra.mrb[0].mxu0 %v2482
        %v2567 = vpop.f32.mrb[0].mxu0
        %v2568 = vadd.f32 0.0, %v2567
        %v2569 = vpop.f32.mrb[0].mxu0
        %v2570 = vpop.f32.mrb[0].mxu0
        %v2571 = vadd.f32 0.0, %v2570
        %v2572 = vpop.f32.mrb[0].mxu0
        %2573 = vmatprep.mubr.bf16.mxu0 0
        %2574 = vmatmul.mubr.bf16.gmra.mrb[0].mxu0 %v2485
        %v2575 = vpop.f32.mrb[0].mxu0
        %v2576 = vadd.f32 0.0, %v2575
        %v2577 = vpop.f32.mrb[0].mxu0
        %v2578 = vpop.f32.mrb[0].mxu0
        %v2579 = vadd.f32 0.0, %v2578
        %v2580 = vpop.f32.mrb[0].mxu0
        %2581 = vmatprep.mubr.bf16.mxu0 0
        %2582 = vmatmul.mubr.bf16.gmra.mrb[0].mxu0 %v2488
        %v2583 = vpop.f32.mrb[0].mxu0
        %v2584 = vadd.f32 0.0, %v2583
        %v2585 = vpop.f32.mrb[0].mxu0
        %v2586 = vpop.f32.mrb[0].mxu0
        %v2587 = vadd.f32 0.0, %v2586
        %v2588 = vpop.f32.mrb[0].mxu0
        %2589 = vdwg.mxu0
        %v2590 = vadd.f32 %v2360, %v2528
        %v2591 = vadd.f32 %v2361, %v2531
        %v2592 = vadd.f32 %v2362, %v2536
        %v2593 = vadd.f32 %v2363, %v2539
        %v2594 = vadd.f32 %v2364, %v2544
        %v2595 = vadd.f32 %v2365, %v2547
        %v2596 = vadd.f32 %v2366, %v2552
        %v2597 = vadd.f32 %v2367, %v2555
        %v2598 = vadd.f32 %v2368, %v2560
        %v2599 = vadd.f32 %v2369, %v2563
        %v2600 = vadd.f32 %v2370, %v2568
        %v2601 = vadd.f32 %v2371, %v2571
        %v2602 = vadd.f32 %v2372, %v2576
        %v2603 = vadd.f32 %v2373, %v2579
        %v2604 = vadd.f32 %v2374, %v2584
        %v2605 = vadd.f32 %v2375, %v2587
        %v2607 = vlaneseq
        %v2608 = vshrl.u32 %v2607, 7
        %v2609 = vsub.s32 0, %v2608
        %v2610 = vrot.slane %v235, %v2609
        %v2612 = vmul.f32 %v2590, %v2610
        %v2613 = vmul.f32 %v2591, %v2610
        %v2614 = vmul.f32 %v2592, %v2610
        %v2615 = vmul.f32 %v2593, %v2610
        %v2616 = vmul.f32 %v2594, %v2610
        %v2617 = vmul.f32 %v2595, %v2610
        %v2618 = vmul.f32 %v2596, %v2610
        %v2619 = vmul.f32 %v2597, %v2610
        %v2620 = vmul.f32 %v2598, %v2610
        %v2621 = vmul.f32 %v2599, %v2610
        %v2622 = vmul.f32 %v2600, %v2610
        %v2623 = vmul.f32 %v2601, %v2610
        %v2624 = vmul.f32 %v2602, %v2610
        %v2625 = vmul.f32 %v2603, %v2610
        %v2626 = vmul.f32 %v2604, %v2610
        %v2627 = vmul.f32 %v2605, %v2610
        %v2629 = vlaneseq
        %v2630 = vshrl.u32 %v2629, 7
        %v2631 = vsub.s32 0, %v2630
        %v2632 = vrot.slane %v236, %v2631
        %v2634 = vadd.f32 %v2612, %v2632
        %v2635 = vadd.f32 %v2613, %v2632
        %v2636 = vadd.f32 %v2614, %v2632
        %v2637 = vadd.f32 %v2615, %v2632
        %v2638 = vadd.f32 %v2616, %v2632
        %v2639 = vadd.f32 %v2617, %v2632
        %v2640 = vadd.f32 %v2618, %v2632
        %v2641 = vadd.f32 %v2619, %v2632
        %v2642 = vadd.f32 %v2620, %v2632
        %v2643 = vadd.f32 %v2621, %v2632
        %v2644 = vadd.f32 %v2622, %v2632
        %v2645 = vadd.f32 %v2623, %v2632
        %v2646 = vadd.f32 %v2624, %v2632
        %v2647 = vadd.f32 %v2625, %v2632
        %v2648 = vadd.f32 %v2626, %v2632
        %v2649 = vadd.f32 %v2627, %v2632
        %vm2650 = vcmp.gt.f32.partialorder %v2634, 0.0
        %vm2651 = vcmp.gt.f32.partialorder %v2635, 0.0
        %vm2652 = vcmp.gt.f32.partialorder %v2636, 0.0
        %vm2653 = vcmp.gt.f32.partialorder %v2637, 0.0
        %vm2654 = vcmp.gt.f32.partialorder %v2638, 0.0
        %vm2655 = vcmp.gt.f32.partialorder %v2639, 0.0
        %vm2656 = vcmp.gt.f32.partialorder %v2640, 0.0
        %vm2657 = vcmp.gt.f32.partialorder %v2641, 0.0
        %vm2658 = vcmp.gt.f32.partialorder %v2642, 0.0
        %vm2659 = vcmp.gt.f32.partialorder %v2643, 0.0
        %vm2660 = vcmp.gt.f32.partialorder %v2644, 0.0
        %vm2661 = vcmp.gt.f32.partialorder %v2645, 0.0
        %vm2662 = vcmp.gt.f32.partialorder %v2646, 0.0
        %vm2663 = vcmp.gt.f32.partialorder %v2647, 0.0
        %vm2664 = vcmp.gt.f32.partialorder %v2648, 0.0
        %vm2665 = vcmp.gt.f32.partialorder %v2649, 0.0
        %v2666 = vmul.f32 %v2634, 0.1
        %v2667 = vmul.f32 %v2635, 0.1
        %v2668 = vmul.f32 %v2636, 0.1
        %v2669 = vmul.f32 %v2637, 0.1
        %v2670 = vmul.f32 %v2638, 0.1
        %v2671 = vmul.f32 %v2639, 0.1
        %v2672 = vmul.f32 %v2640, 0.1
        %v2673 = vmul.f32 %v2641, 0.1
        %v2674 = vmul.f32 %v2642, 0.1
        %v2675 = vmul.f32 %v2643, 0.1
        %v2676 = vmul.f32 %v2644, 0.1
        %v2677 = vmul.f32 %v2645, 0.1
        %v2678 = vmul.f32 %v2646, 0.1
        %v2679 = vmul.f32 %v2647, 0.1
        %v2680 = vmul.f32 %v2648, 0.1
        %v2681 = vmul.f32 %v2649, 0.1
        %v2682 = vsel %vm2650, %v2634, %v2666
        %v2683 = vsel %vm2651, %v2635, %v2667
        %v2684 = vsel %vm2652, %v2636, %v2668
        %v2685 = vsel %vm2653, %v2637, %v2669
        %v2686 = vsel %vm2654, %v2638, %v2670
        %v2687 = vsel %vm2655, %v2639, %v2671
        %v2688 = vsel %vm2656, %v2640, %v2672
        %v2689 = vsel %vm2657, %v2641, %v2673
        %v2690 = vsel %vm2658, %v2642, %v2674
        %v2691 = vsel %vm2659, %v2643, %v2675
        %v2692 = vsel %vm2660, %v2644, %v2676
        %v2693 = vsel %vm2661, %v2645, %v2677
        %v2694 = vsel %vm2662, %v2646, %v2678
        %v2695 = vsel %vm2663, %v2647, %v2679
        %v2696 = vsel %vm2664, %v2648, %v2680
        %v2697 = vsel %vm2665, %v2649, %v2681
        %2698 = vxpose.xlu0.b32.start [1/16] %v2682, 128
        %2699 = vxpose.xlu0.b32.cont [2/16] %v2683, 128
        %2700 = vxpose.xlu0.b32.cont [3/16] %v2684, 128
        %2701 = vxpose.xlu0.b32.cont [4/16] %v2685, 128
        %2702 = vxpose.xlu0.b32.cont [5/16] %v2686, 128
        %2703 = vxpose.xlu0.b32.cont [6/16] %v2687, 128
        %2704 = vxpose.xlu0.b32.cont [7/16] %v2688, 128
        %2705 = vxpose.xlu0.b32.cont [8/16] %v2689, 128
        %2706 = vxpose.xlu0.b32.cont [9/16] %v2690, 128
        %2707 = vxpose.xlu0.b32.cont [10/16] %v2691, 128
        %2708 = vxpose.xlu0.b32.cont [11/16] %v2692, 128
        %2709 = vxpose.xlu0.b32.cont [12/16] %v2693, 128
        %2710 = vxpose.xlu0.b32.cont [13/16] %v2694, 128
        %2711 = vxpose.xlu0.b32.cont [14/16] %v2695, 128
        %2712 = vxpose.xlu0.b32.cont [15/16] %v2696, 128
        %2713 = vxpose.xlu0.b32.end [16/16] %v2697, 128
        %v2714 = vpop.trf.xlu0
        %v2715 = vpop.trf.xlu0
        %v2716 = vpop.trf.xlu0
        %v2717 = vpop.trf.xlu0
        %v2718 = vpop.trf.xlu0
        %v2719 = vpop.trf.xlu0
        %v2720 = vpop.trf.xlu0
        %v2721 = vpop.trf.xlu0
        %v2722 = vpop.trf.xlu0
        %v2723 = vpop.trf.xlu0
        %v2724 = vpop.trf.xlu0
        %v2725 = vpop.trf.xlu0
        %v2726 = vpop.trf.xlu0
        %v2727 = vpop.trf.xlu0
        %v2728 = vpop.trf.xlu0
        %v2729 = vpop.trf.xlu0
        %2730 = vst [vmem:[%s222] sm:$0xff] %v2714
        %2731 = vst [vmem:[%s222 + $0x8] sm:$0xff] %v2715
        %2732 = vst [vmem:[%s222 + $0x10] sm:$0xff] %v2716
        %2733 = vst [vmem:[%s222 + $0x18] sm:$0xff] %v2717
        %2734 = vst [vmem:[%s222 + $0x20] sm:$0xff] %v2718
        %2735 = vst [vmem:[%s222 + $0x28] sm:$0xff] %v2719
        %2736 = vst [vmem:[%s222 + $0x30] sm:$0xff] %v2720
        %2737 = vst [vmem:[%s222 + $0x38] sm:$0xff] %v2721
        %2738 = vst [vmem:[%s222 + $0x40] sm:$0xff] %v2722
        %2739 = vst [vmem:[%s222 + $0x48] sm:$0xff] %v2723
        %2740 = vst [vmem:[%s222 + $0x50] sm:$0xff] %v2724
        %2741 = vst [vmem:[%s222 + $0x58] sm:$0xff] %v2725
        %2742 = vst [vmem:[%s222 + $0x60] sm:$0xff] %v2726
        %2743 = vst [vmem:[%s222 + $0x68] sm:$0xff] %v2727
        %2744 = vst [vmem:[%s222 + $0x70] sm:$0xff] %v2728
        %2745 = vst [vmem:[%s222 + $0x78] sm:$0xff] %v2729
        %s2746 = sand.u32 %s136, 1
        %s2747 = sand.u32 %s136, 1
        %s2748 = smul.addr %s2747, 128
        %s2749 = scalar_lea.vmem [#allocation2], %s2748
        // Predicated region
        $region37: #{conv2d_cond_bn_relu.3} parent=35 // pred_check
          %p2750 = pneg %p146
        $region38: #{conv2d_cond_bn_relu.3} parent=35 // pred_check_branch
          %2752 = sbr.rel (%p2750) target = $region40
        $region39: #{conv2d_cond_bn_relu.3} parent=35 // pred_region
          %s2753 = smul.addr %s19, 32
          %s2754 = sadd.s32 %s20, %s2753
          %s2755 = smul.addr %s2754, 8
          %s2756 = scalar_lea.vmem %s4, %s2755
          // Predicated region
          $region41: #{conv2d_cond_bn_relu.3} parent=39 // pred_check
            _
          $region42: #{conv2d_cond_bn_relu.3} parent=39 // pred_check_branch
            %2758 = sbr.rel (0) target = $region44
          $region43: #{conv2d_cond_bn_relu.3} parent=39 // pred_region
            // Predicated region
            $region45: #{conv2d_cond_bn_relu.3} parent=43 // pred_check
              _
            $region46: #{conv2d_cond_bn_relu.3} parent=43 // pred_check_branch
              %2760 = sbr.rel (0) target = $region48
            $region47: #{conv2d_cond_bn_relu.3} parent=43 // pred_region
              // Predicated region
              $region60: #{conv2d_cond_bn_relu.3} parent=47 // pred_check
                _
              $region61: #{conv2d_cond_bn_relu.3} parent=47 // pred_check_branch
                %2805 = sbr.rel (0) target = $region63
              $region62: #{conv2d_cond_bn_relu.3} parent=47 // pred_region
                loop: start=0, step=1, limit=1
                $region64: #{conv2d_cond_bn_relu.3} parent=62 // loop_pre_header
                  _
                $region65: #{conv2d_cond_bn_relu.3} parent=62 // loop_header
                  %s2807 = sphi 0, %s2811
                  %p2808 = scmp.ge.s32.totalorder %s2807, 1
                  %s2812 = sphi %s2749, %s2749
                  %s2813 = sphi %s2756, %s2756
                $region66: #{conv2d_cond_bn_relu.3} parent=62 // loop_header_branch
                  %2810 = sbr.rel (%p2808) target = $region70
                $region67: #{conv2d_cond_bn_relu.3} parent=62 // loop_body
                  %v2814 = vld [vmem:[%s2812] sm:$0xff]
                  %2815 = vst [vmem:[%s2813] sm:$0xff] %v2814
                  %v2816 = vld [vmem:[%s2812 + $0x8] sm:$0xff]
                  %2817 = vst [vmem:[%s2813 + $0x10] sm:$0xff] %v2816
                  %v2818 = vld [vmem:[%s2812 + $0x10] sm:$0xff]
                  %2819 = vst [vmem:[%s2813 + $0x20] sm:$0xff] %v2818
                  %v2820 = vld [vmem:[%s2812 + $0x18] sm:$0xff]
                  %2821 = vst [vmem:[%s2813 + $0x30] sm:$0xff] %v2820
                  %v2822 = vld [vmem:[%s2812 + $0x20] sm:$0xff]
                  %2823 = vst [vmem:[%s2813 + $0x40] sm:$0xff] %v2822
                  %v2824 = vld [vmem:[%s2812 + $0x28] sm:$0xff]
                  %2825 = vst [vmem:[%s2813 + $0x50] sm:$0xff] %v2824
                  %v2826 = vld [vmem:[%s2812 + $0x30] sm:$0xff]
                  %2827 = vst [vmem:[%s2813 + $0x60] sm:$0xff] %v2826
                  %v2828 = vld [vmem:[%s2812 + $0x38] sm:$0xff]
                  %2829 = vst [vmem:[%s2813 + $0x70] sm:$0xff] %v2828
                  %v2830 = vld [vmem:[%s2812 + $0x40] sm:$0xff]
                  %2831 = vst [vmem:[%s2813 + $0x80] sm:$0xff] %v2830
                  %v2832 = vld [vmem:[%s2812 + $0x48] sm:$0xff]
                  %2833 = vst [vmem:[%s2813 + $0x90] sm:$0xff] %v2832
                  %v2834 = vld [vmem:[%s2812 + $0x50] sm:$0xff]
                  %2835 = vst [vmem:[%s2813 + $0xa0] sm:$0xff] %v2834
                  %v2836 = vld [vmem:[%s2812 + $0x58] sm:$0xff]
                  %2837 = vst [vmem:[%s2813 + $0xb0] sm:$0xff] %v2836
                  %v2838 = vld [vmem:[%s2812 + $0x60] sm:$0xff]
                  %2839 = vst [vmem:[%s2813 + $0xc0] sm:$0xff] %v2838
                  %v2840 = vld [vmem:[%s2812 + $0x68] sm:$0xff]
                  %2841 = vst [vmem:[%s2813 + $0xd0] sm:$0xff] %v2840
                  %v2842 = vld [vmem:[%s2812 + $0x70] sm:$0xff]
                  %2843 = vst [vmem:[%s2813 + $0xe0] sm:$0xff] %v2842
                  %v2844 = vld [vmem:[%s2812 + $0x78] sm:$0xff]
                  %2845 = vst [vmem:[%s2813 + $0xf0] sm:$0xff] %v2844
                $region68: #{conv2d_cond_bn_relu.3} parent=62 // loop_footer
                  %s2811 = sadd.s32 1, %s2807
                $region69: #{conv2d_cond_bn_relu.3} parent=62 // loop_footer_branch
                  %2806 = sbr.rel target = $region65
                $region70: #{conv2d_cond_bn_relu.3} parent=62 // loop_exit
                  _
              $region63: #{conv2d_cond_bn_relu.3} parent=47 // pred_fallthru
                _
              // Predicated region
              $region71: #{conv2d_cond_bn_relu.3} parent=47 // pred_check
                _
              $region72: #{conv2d_cond_bn_relu.3} parent=47 // pred_check_branch
                %2847 = sbr.rel target = $region74
              $region73: #{conv2d_cond_bn_relu.3} parent=47 // pred_region
                _
              $region74: #{conv2d_cond_bn_relu.3} parent=47 // pred_fallthru
                _
            $region48: #{conv2d_cond_bn_relu.3} parent=43 // pred_fallthru
              _
            // Predicated region
            $region49: #{conv2d_cond_bn_relu.3} parent=43 // pred_check
              _
            $region50: #{conv2d_cond_bn_relu.3} parent=43 // pred_check_branch
              %2762 = sbr.rel target = $region52
            $region51: #{conv2d_cond_bn_relu.3} parent=43 // pred_region
              loop: start=0, step=1, limit=1
              $region53: #{conv2d_cond_bn_relu.3} parent=51 // loop_pre_header
                _
              $region54: #{conv2d_cond_bn_relu.3} parent=51 // loop_header
                %s2765 = sphi 0, %s2769
                %p2766 = scmp.ge.s32.totalorder %s2765, 1
                %s2770 = sphi %s2749, %s2749
                %s2771 = sphi %s2756, %s2756
              $region55: #{conv2d_cond_bn_relu.3} parent=51 // loop_header_branch
                %2768 = sbr.rel (%p2766) target = $region59
              $region56: #{conv2d_cond_bn_relu.3} parent=51 // loop_body
                %v2772 = vld [vmem:[%s2770] sm:$0xff]
                %2773 = vst [vmem:[%s2771] sm:$0xff] %v2772
                %v2774 = vld [vmem:[%s2770 + $0x8] sm:$0xff]
                %2775 = vst [vmem:[%s2771 + $0x10] sm:$0xff] %v2774
                %v2776 = vld [vmem:[%s2770 + $0x10] sm:$0xff]
                %2777 = vst [vmem:[%s2771 + $0x20] sm:$0xff] %v2776
                %v2778 = vld [vmem:[%s2770 + $0x18] sm:$0xff]
                %2779 = vst [vmem:[%s2771 + $0x30] sm:$0xff] %v2778
                %v2780 = vld [vmem:[%s2770 + $0x20] sm:$0xff]
                %2781 = vst [vmem:[%s2771 + $0x40] sm:$0xff] %v2780
                %v2782 = vld [vmem:[%s2770 + $0x28] sm:$0xff]
                %2783 = vst [vmem:[%s2771 + $0x50] sm:$0xff] %v2782
                %v2784 = vld [vmem:[%s2770 + $0x30] sm:$0xff]
                %2785 = vst [vmem:[%s2771 + $0x60] sm:$0xff] %v2784
                %v2786 = vld [vmem:[%s2770 + $0x38] sm:$0xff]
                %2787 = vst [vmem:[%s2771 + $0x70] sm:$0xff] %v2786
                %v2788 = vld [vmem:[%s2770 + $0x40] sm:$0xff]
                %2789 = vst [vmem:[%s2771 + $0x80] sm:$0xff] %v2788
                %v2790 = vld [vmem:[%s2770 + $0x48] sm:$0xff]
                %2791 = vst [vmem:[%s2771 + $0x90] sm:$0xff] %v2790
                %v2792 = vld [vmem:[%s2770 + $0x50] sm:$0xff]
                %2793 = vst [vmem:[%s2771 + $0xa0] sm:$0xff] %v2792
                %v2794 = vld [vmem:[%s2770 + $0x58] sm:$0xff]
                %2795 = vst [vmem:[%s2771 + $0xb0] sm:$0xff] %v2794
                %v2796 = vld [vmem:[%s2770 + $0x60] sm:$0xff]
                %2797 = vst [vmem:[%s2771 + $0xc0] sm:$0xff] %v2796
                %v2798 = vld [vmem:[%s2770 + $0x68] sm:$0xff]
                %2799 = vst [vmem:[%s2771 + $0xd0] sm:$0xff] %v2798
                %v2800 = vld [vmem:[%s2770 + $0x70] sm:$0xff]
                %2801 = vst [vmem:[%s2771 + $0xe0] sm:$0xff] %v2800
                %v2802 = vld [vmem:[%s2770 + $0x78] sm:$0xff]
                %2803 = vst [vmem:[%s2771 + $0xf0] sm:$0xff] %v2802
              $region57: #{conv2d_cond_bn_relu.3} parent=51 // loop_footer
                %s2769 = sadd.s32 1, %s2765
              $region58: #{conv2d_cond_bn_relu.3} parent=51 // loop_footer_branch
                %2764 = sbr.rel target = $region54
              $region59: #{conv2d_cond_bn_relu.3} parent=51 // loop_exit
                _
            $region52: #{conv2d_cond_bn_relu.3} parent=43 // pred_fallthru
              _
          $region44: #{conv2d_cond_bn_relu.3} parent=39 // pred_fallthru
            _
          %2848 = vnop
        $region40: #{conv2d_cond_bn_relu.3} parent=35 // pred_fallthru
          _
      $region36: #{conv2d_cond_bn_relu.3} parent=5 // pred_fallthru
        _
      %p2849 = scmp.le.s32.totalorder 2, %s10
      // Predicated region
      $region75: #{conv2d_cond_bn_relu.3} parent=5 // pred_check
        %p2850 = pneg %p2849
      $region76: #{conv2d_cond_bn_relu.3} parent=5 // pred_check_branch
        %2852 = sbr.rel (%p2850) target = $region78
      $region77: #{conv2d_cond_bn_relu.3} parent=5 // pred_region
        %s2853 = ssub.s32 %s10, 2
        // Predicated region
        $region79: #{conv2d_cond_bn_relu.3} parent=77 // pred_check
          %p2854 = pneg %p152
        $region80: #{conv2d_cond_bn_relu.3} parent=77 // pred_check_branch
          %2856 = sbr.rel (%p2854) target = $region82
        $region81: #{conv2d_cond_bn_relu.3} parent=77 // pred_region
          %s2857 = sand.u32 %s137, 1
          %s2858 = sand.u32 %s137, 1
          %s2859 = smul.addr %s2858, 128
          %s2860 = scalar_lea.vmem [#allocation2], %s2859
        $region82: #{conv2d_cond_bn_relu.3} parent=77 // pred_fallthru
          _
      $region78: #{conv2d_cond_bn_relu.3} parent=5 // pred_fallthru
        _
    $region6: #{conv2d_cond_bn_relu.3} parent=1 // loop_footer
      %s14 = sadd.s32 1, %s10
    $region7: #{conv2d_cond_bn_relu.3} parent=1 // loop_footer_branch
      %9 = sbr.rel target = $region3
    $region8: #{conv2d_cond_bn_relu.3} parent=1 // loop_exit
      _

</llo_original>
